<compile_context>
chip_gen: v7x
topology: tpu7x:2x2x1
jax: 0.10.0
libtpu: 0.0.40
codegen_flags: <defaults>
</compile_context>

<pallas_src>
import functools

import jax
import jax.numpy as jnp
import numpy as np
from jax.experimental import pallas as pl
from jax.experimental.pallas import tpu as pltpu


def _round_up(n, m):
    return ((n + m - 1) // m) * m


# ----------------------------- Pallas kernel --------------------------------
def classifier_kernel(x_ref, we_ref, wc_ref, bc_ref, out_ref, acc_ref):
    """
    Grid = (batch_tiles, k_tiles); k (the flattened-input reduction axis) is last.

    x_ref  : (tm, tk)   f32   flattened video block
    we_ref : (tk, 4*P)  bf16  encoder weight block, columns permuted so that
                              pooling-window element j of pooled output p lives
                              at column j*P + p
    wc_ref : (P, O_pad) bf16  collapsed fc weight  (W1.T @ W2.T, zero-padded)
    bc_ref : (1, O_pad) f32   collapsed fc bias    (b1 @ W2.T + b2, zero-padded)
    out_ref: (tm, O_pad) f32
    acc_ref: (tm, 4*P)  f32   VMEM accumulator for the encoder GEMM
    """
    k = pl.program_id(1)

    @pl.when(k == 0)
    def _init():
        acc_ref[...] = jnp.zeros_like(acc_ref)

    # Encoder GEMM (the only real FLOP/byte consumer): bf16 MXU, f32 accumulate.
    acc_ref[...] += jnp.dot(
        x_ref[...].astype(jnp.bfloat16), we_ref[...],
        preferred_element_type=jnp.float32)

    @pl.when(k == pl.num_programs(1) - 1)
    def _finalize():
        P = wc_ref.shape[0]
        feats = acc_ref[...]                                   # (tm, 4*P) f32
        # MaxPool1d(kernel=4, stride=4): the one-time weight-column permutation
        # makes the 4 window elements contiguous lane-aligned P-slices (f32 VPU).
        pooled = jnp.maximum(
            jnp.maximum(feats[:, 0 * P:1 * P], feats[:, 1 * P:2 * P]),
            jnp.maximum(feats[:, 2 * P:3 * P], feats[:, 3 * P:4 * P]),
        )                                                      # (tm, P)
        # Collapsed fc_hidden + fc_output (no activation between them).
        out = jnp.dot(pooled.astype(jnp.bfloat16), wc_ref[...],
                      preferred_element_type=jnp.float32) + bc_ref[...]
        out_ref[...] = out.astype(out_ref.dtype)


# ----------------------- one-time parameter preparation ----------------------
def prepare_params(w_enc, w1, b1, w2, b2):
    """Runs once at init (NOT per call): permutation, layer-collapse, bf16 cast, padding."""
    F, D = w_enc.shape
    assert D % 4 == 0
    P = D // 4
    O, H = w2.shape
    assert w1.shape == (H, P) and b1.shape == (H,) and b2.shape == (O,)
    o_pad = max(128, _round_up(O, 128))      # keep the lane dim a multiple of 128

    # Fold the MaxPool1d window de-interleave into the encoder weight columns:
    # permuted column j*P + p  <-  original column p*4 + j.
    kk = jnp.arange(D)
    perm = (kk % P) * 4 + (kk // P)
    w_enc_perm = w_enc[:, perm].astype(jnp.bfloat16)           # (F, 4*P) bf16

    # Collapse the two activation-free Linear layers (collapse in f32, store bf16).
    wc = (w1.T @ w2.T).astype(jnp.bfloat16)                    # (P, O)
    bc = b1 @ w2.T + b2                                        # (O,) f32
    wc_pad = jnp.zeros((P, o_pad), jnp.bfloat16).at[:, :O].set(wc)
    bc_pad = jnp.zeros((1, o_pad), jnp.float32).at[:, :O].set(bc)
    return {"w_enc": w_enc_perm, "wc": wc_pad, "bc": bc_pad}, O


# --------------------------------- forward -----------------------------------
@functools.partial(jax.jit, static_argnames=("out_dim",))
def classifier_forward(x, w_enc_perm, wc, bc, *, out_dim):
    B = x.shape[0]
    xflat = x.reshape(B, -1).astype(jnp.float32)               # metadata-only reshape
    F = xflat.shape[1]
    D = w_enc_perm.shape[1]                                    # 4*P
    P, O_pad = wc.shape

    # --- batch padding / batch tile: full sublanes, full vregs -----------------
    B_pad = _round_up(B, 8)
    if B_pad <= 128:
        tm = B_pad
    else:
        tm = 128
        B_pad = _round_up(B_pad, tm)
    if B_pad != B:
        xflat = jnp.pad(xflat, ((0, B_pad - B), (0, 0)))

    # --- reduction (F) tile: cap so double-buffered blocks fit v7x VMEM --------
    tk = F if F <= 2048 else 2048
    assert F % tk == 0  # TODO(synk): handle ragged F with pl.cdiv + masked last tile
    grid = (B_pad // tm, F // tk)

    out_pad = pl.pallas_call(
        classifier_kernel,
        out_shape=jax.ShapeDtypeStruct((B_pad, O_pad), jnp.float32),
        grid_spec=pltpu.PrefetchScalarGridSpec(
            num_scalar_prefetch=0,
            grid=grid,
            in_specs=[
                pl.BlockSpec((tm, tk), lambda b, k: (b, k)),       # x
                pl.BlockSpec((tk, D), lambda b, k: (k, 0)),        # encoder weight (bf16)
                pl.BlockSpec((P, O_pad), lambda b, k: (0, 0)),     # collapsed fc weight
                pl.BlockSpec((1, O_pad), lambda b, k: (0, 0)),     # collapsed fc bias
            ],
            out_specs=pl.BlockSpec((tm, O_pad), lambda b, k: (b, 0)),
            scratch_shapes=[pltpu.VMEM((tm, D), jnp.float32)],     # encoder-GEMM accumulator
        ),
        compiler_params=pltpu.CompilerParams(
            dimension_semantics=("parallel", "arbitrary"),
            vmem_limit_bytes=32 * 1024 * 1024,   # explicit: v5e default is only 16 MiB
        ),
    )(xflat, w_enc_perm, wc, bc)

    return out_pad[:B, :out_dim]                               # drop batch/lane padding


# ----------------------------------- main -------------------------------------
if __name__ == "__main__":
    # Small shapes consistent with the module:
    #   video x: (B, C=1, T, H, W)   (load_pretrained_model_1_c -> 1 channel)
    #   encoder feats: (B, FEAT_DIM); MaxPool1d(4,4) -> INPUT_NUM; fc -> HIDDEN -> OUTPUT
    B, C, T, Hs, Ws = 2, 1, 8, 16, 16
    FEAT_DIM = 512
    INPUT_NUM = FEAT_DIM // 4          # 128 = fc_hidden input dim (post max-pool)
    HIDDEN_NUM = 32
    OUTPUT_NUM = 8

    key = jax.random.PRNGKey(0)
    k_x, k_enc, k_w1, k_b1, k_w2, k_b2 = jax.random.split(key, 6)

    x = jax.random.normal(k_x, (B, C, T, Hs, Ws), dtype=jnp.float32)

    flat_dim = C * T * Hs * Ws
    # TODO(synk): the pretrained resnet-3D encoder architecture/checkpoint is not
    # provided in the module source; replaced by a deterministic linear projection.
    w_enc = jax.random.normal(k_enc, (flat_dim, FEAT_DIM), jnp.float32) / np.sqrt(flat_dim)
    # nn.Linear-style shapes: weight (out_features, in_features), bias (out_features,)
    w1 = jax.random.normal(k_w1, (HIDDEN_NUM, INPUT_NUM), jnp.float32) / np.sqrt(INPUT_NUM)
    b1 = jax.random.normal(k_b1, (HIDDEN_NUM,), jnp.float32) * 0.01
    w2 = jax.random.normal(k_w2, (OUTPUT_NUM, HIDDEN_NUM), jnp.float32) / np.sqrt(HIDDEN_NUM)
    b2 = jax.random.normal(k_b2, (OUTPUT_NUM,), jnp.float32) * 0.01

    prepped, out_dim = prepare_params(w_enc, w1, b1, w2, b2)

    pred = jax.block_until_ready(
        classifier_forward(x, prepped["w_enc"], prepped["wc"], prepped["bc"],
                           out_dim=out_dim))

    # Pure-JAX f32 reference following PyTorch semantics exactly (un-fused,
    # un-collapsed, original weight layout).  Tolerance is relaxed because the
    # kernel streams weights / matmul operands in bf16 (f32 accumulation).
    xflat = x.reshape(B, -1)
    feats_ref = xflat @ w_enc
    pooled_ref = jnp.max(feats_ref.reshape(B, INPUT_NUM, 4), axis=-1)
    hidden_ref = pooled_ref @ w1.T + b1
    pred_ref = hidden_ref @ w2.T + b2

    np.testing.assert_allclose(np.asarray(pred), np.asarray(pred_ref),
                               rtol=5e-2, atol=5e-2)
    assert pred.shape == (B, OUTPUT_NUM)
    print("KERNEL_OK")
</pallas_src>

<mosaic_0001>
module attributes {stable_mosaic.version = 11 : i64} {
  func.func @classifier_kernel(%arg0: i32, %arg1: i32, %arg2: memref<8x2048xf32, #tpu.memory_space<vmem>>, %arg3: memref<2048x512xbf16, #tpu.memory_space<vmem>>, %arg4: memref<128x128xbf16, #tpu.memory_space<vmem>>, %arg5: memref<1x128xf32, #tpu.memory_space<vmem>>, %arg6: memref<8x128xf32, #tpu.memory_space<vmem>>, %arg7: memref<8x512xf32, #tpu.memory_space<vmem>>) attributes {dimension_semantics = [#tpu.dimension_semantics<parallel>, #tpu.dimension_semantics<arbitrary>], iteration_bounds = array<i64: 1, 1>, scalar_prefetch = 0 : i64, scratch_operands = 1 : i64, tpu.core_type = #tpu.core_type<tc>, window_params = [{transform_indices = @transform_0, window_bounds = array<i64: 8, 2048>}, {transform_indices = @transform_1, window_bounds = array<i64: 2048, 512>}, {pipeline_mode = #tpu.pipeline_mode<synchronous>, transform_indices = @transform_2, window_bounds = array<i64: 128, 128>}, {pipeline_mode = #tpu.pipeline_mode<synchronous>, transform_indices = @transform_3, window_bounds = array<i64: 1, 128>}, {transform_indices = @transform_4, window_bounds = array<i64: 8, 128>}]} {
    %c0_i32 = arith.constant 0 : i32
    %0 = arith.cmpi eq, %arg1, %c0_i32 : i32
    %1 = arith.extui %0 : i1 to i32
    %c0_i32_0 = arith.constant 0 : i32
    %2 = arith.cmpi ne, %1, %c0_i32_0 : i32
    scf.if %2 {
      %cst_10 = arith.constant 0.000000e+00 : f32
      %13 = vector.broadcast %cst_10 : f32 to vector<8x512xf32>
      %c0_11 = arith.constant 0 : index
      %c0_12 = arith.constant 0 : index
      %14 = vector.load %arg7[%c0_11, %c0_12] : memref<8x512xf32, #tpu.memory_space<vmem>>, vector<8x512xf32>
      tpu.vector_store %arg7[%c0_11, %c0_12], %13 {strides = array<i32>} : memref<8x512xf32, #tpu.memory_space<vmem>>, vector<8x512xf32>,
    } else {
    }
    %c0 = arith.constant 0 : index
    %c0_1 = arith.constant 0 : index
    %3 = vector.load %arg7[%c0, %c0_1] : memref<8x512xf32, #tpu.memory_space<vmem>>, vector<8x512xf32>
    %c0_2 = arith.constant 0 : index
    %c0_3 = arith.constant 0 : index
    %4 = vector.load %arg2[%c0_2, %c0_3] : memref<8x2048xf32, #tpu.memory_space<vmem>>, vector<8x2048xf32>
    %5 = arith.truncf %4 : vector<8x2048xf32> to vector<8x2048xbf16>
    %c0_4 = arith.constant 0 : index
    %c0_5 = arith.constant 0 : index
    %6 = vector.load %arg3[%c0_4, %c0_5] : memref<2048x512xbf16, #tpu.memory_space<vmem>>, vector<2048x512xbf16>
    %cst = arith.constant dense<0.000000e+00> : vector<8x512xf32>
    %7 = tpu.matmul %5, %6, %cst {dimension_numbers = #tpu.dot_dimension_numbers<[1], [0], [0], [1], [0, 0, 1, 1], [], []>} : vector<8x2048xbf16>, vector<2048x512xbf16>, vector<8x512xf32> -> vector<8x512xf32>
    %8 = arith.addf %3, %7 : vector<8x512xf32>
    %c0_6 = arith.constant 0 : index
    %c0_7 = arith.constant 0 : index
    %9 = vector.load %arg7[%c0_6, %c0_7] : memref<8x512xf32, #tpu.memory_space<vmem>>, vector<8x512xf32>
    tpu.vector_store %arg7[%c0_6, %c0_7], %8 {strides = array<i32>} : memref<8x512xf32, #tpu.memory_space<vmem>>, vector<8x512xf32>,
    %c0_i32_8 = arith.constant 0 : i32
    %10 = arith.cmpi eq, %arg1, %c0_i32_8 : i32
    %11 = arith.extui %10 : i1 to i32
    %c0_i32_9 = arith.constant 0 : i32
    %12 = arith.cmpi ne, %11, %c0_i32_9 : i32
    scf.if %12 {
      %c0_10 = arith.constant 0 : index
      %c0_11 = arith.constant 0 : index
      %13 = vector.load %arg7[%c0_10, %c0_11] : memref<8x512xf32, #tpu.memory_space<vmem>>, vector<8x512xf32>
      %14 = vector.extract_strided_slice %13 {offsets = [0, 0], sizes = [8, 128], strides = [1, 1]} : vector<8x512xf32> to vector<8x128xf32>
      %15 = vector.extract_strided_slice %13 {offsets = [0, 128], sizes = [8, 128], strides = [1, 1]} : vector<8x512xf32> to vector<8x128xf32>
      %16 = arith.maximumf %14, %15 : vector<8x128xf32>
      %17 = vector.extract_strided_slice %13 {offsets = [0, 256], sizes = [8, 128], strides = [1, 1]} : vector<8x512xf32> to vector<8x128xf32>
      %18 = vector.extract_strided_slice %13 {offsets = [0, 384], sizes = [8, 128], strides = [1, 1]} : vector<8x512xf32> to vector<8x128xf32>
      %19 = arith.maximumf %17, %18 : vector<8x128xf32>
      %20 = arith.maximumf %16, %19 : vector<8x128xf32>
      %21 = arith.truncf %20 : vector<8x128xf32> to vector<8x128xbf16>
      %c0_12 = arith.constant 0 : index
      %c0_13 = arith.constant 0 : index
      %22 = vector.load %arg4[%c0_12, %c0_13] : memref<128x128xbf16, #tpu.memory_space<vmem>>, vector<128x128xbf16>
      %cst_14 = arith.constant dense<0.000000e+00> : vector<8x128xf32>
      %23 = tpu.matmul %21, %22, %cst_14 {dimension_numbers = #tpu.dot_dimension_numbers<[1], [0], [0], [1], [0, 0, 1, 1], [], []>} : vector<8x128xbf16>, vector<128x128xbf16>, vector<8x128xf32> -> vector<8x128xf32>
      %c0_15 = arith.constant 0 : index
      %c0_16 = arith.constant 0 : index
      %24 = vector.load %arg5[%c0_15, %c0_16] : memref<1x128xf32, #tpu.memory_space<vmem>>, vector<1x128xf32>
      %25 = vector.broadcast %24 : vector<1x128xf32> to vector<8x128xf32>
      %26 = arith.addf %23, %25 : vector<8x128xf32>
      %c0_17 = arith.constant 0 : index
      %c0_18 = arith.constant 0 : index
      %27 = vector.load %arg6[%c0_17, %c0_18] : memref<8x128xf32, #tpu.memory_space<vmem>>, vector<8x128xf32>
      tpu.vector_store %arg6[%c0_17, %c0_18], %26 {strides = array<i32>} : memref<8x128xf32, #tpu.memory_space<vmem>>, vector<8x128xf32>,
    } else {
    }
    return
  }
  func.func @transform_0(%arg0: i32, %arg1: i32) -> (i32, i32) {
    %c0_i32 = arith.constant 0 : i32
    return %arg0, %arg1 : i32, i32
  }
  func.func @transform_1(%arg0: i32, %arg1: i32) -> (i32, i32) {
    %c0_i32 = arith.constant 0 : i32
    %c0_i32_0 = arith.constant 0 : i32
    return %arg1, %c0_i32 : i32, i32
  }
  func.func @transform_2(%arg0: i32, %arg1: i32) -> (i32, i32) {
    %c0_i32 = arith.constant 0 : i32
    %c0_i32_0 = arith.constant 0 : i32
    %c0_i32_1 = arith.constant 0 : i32
    return %c0_i32, %c0_i32_0 : i32, i32
  }
  func.func @transform_3(%arg0: i32, %arg1: i32) -> (i32, i32) {
    %c0_i32 = arith.constant 0 : i32
    %c0_i32_0 = arith.constant 0 : i32
    %c0_i32_1 = arith.constant 0 : i32
    return %c0_i32, %c0_i32_0 : i32, i32
  }
  func.func @transform_4(%arg0: i32, %arg1: i32) -> (i32, i32) {
    %c0_i32 = arith.constant 0 : i32
    %c0_i32_0 = arith.constant 0 : i32
    return %arg0, %c0_i32 : i32, i32
  }
}

</mosaic_0001>

<llo_original>
// kernel: classifier_forward.1
$region0: #{classifier_forward.1}
  #allocation0 [shape = 'u32[]', space=smem, size = 0x4, offset = 0x4, fixed_abs, tag = 'smem constant byte address 0x4 - core index']
  #allocation1 [shape = 'u32[144,128]{1,0:T(1,128)}', space=vmem, size = 0x12000, scoped, tag = 'internal scratch']
  #allocation2 [shape = 'f32[8,512]{1,0:T(8,128)}', space=vmem, size = 0x4000, scoped, tag = 'scratch operand']
  %s0 = inlined_call_operand.vmem [shape: f32[8,2048], index: 0, kind: input, shape index: {}]
  %s1 = inlined_call_operand.hbm [shape: bf16[2048,512], index: 1, kind: input, shape index: {}]
  %s2 = inlined_call_operand.hbm [shape: bf16[128,128], index: 2, kind: input, shape index: {}]
  %s3 = inlined_call_operand.hbm [shape: f32[1,128], index: 3, kind: input, shape index: {}]
  %s4 = inlined_call_operand.vmem [shape: f32[8,128], index: 4, kind: output, shape index: {}]
  %s5 = sld [smem:[#allocation0]]
  $region46: #{classifier_forward.1} parent=0
    _
  %s7 = ssub.s32 1, %s5
  %s8 = scalar_select 0, %s7, %s5
  $region1: #{classifier_forward.1} parent=0
    #allocation3 [shape = 'u8[2097152]{0}', space=vmem, size = 0x200000, scoped, tag = 'input window, operand 1, single buffered']
    #allocation4 [shape = 's32[1]{0}', space=sflag, size = 0x4, scoped, tag = 'scoped memory for classifier_forward.1']
    #allocation5 [shape = 'u8[32768]{0}', space=vmem, size = 0x8000, scoped, tag = 'input window, operand 2, single buffered']
    #allocation6 [shape = 's32[1]{0}', space=sflag, size = 0x4, scoped, tag = 'scoped memory for classifier_forward.1']
    #allocation7 [shape = 'u8[512]{0}', space=vmem, size = 0x400, scoped, tag = 'input window, operand 3, single buffered']
    %9 = vsyncpa [#allocation4], 0
    %10 = vsyncpa [#allocation6], 0
    // Predicated region
    $region2: #{classifier_forward.1} parent=1 // pred_check
      _
    $region3: #{classifier_forward.1} parent=1 // pred_check_branch
      %12 = sbr.rel (0) target = $region5
    $region4: #{classifier_forward.1} parent=1 // pred_region
      _
    $region5: #{classifier_forward.1} parent=1 // pred_fallthru
      _
    // Predicated region
    $region6: #{classifier_forward.1} parent=1 // pred_check
      _
    $region7: #{classifier_forward.1} parent=1 // pred_check_branch
      %14 = sbr.rel (0) target = $region9
    $region8: #{classifier_forward.1} parent=1 // pred_region
      %s16 = ssub.s32 65536, 65536
      %17 = vsyncadd [#allocation4], %s16
      %s18 = sshll.u32 [#allocation3], 4
      %s19 = int_to_ptr.vmem [resolvable:$true] %s18
      %24 = dma.hbm_to_vmem [thread:$0]  %s1, 65536, %s19, [#allocation4], 256, 256, 16
    $region9: #{classifier_forward.1} parent=1 // pred_fallthru
      _
    // Predicated region
    $region10: #{classifier_forward.1} parent=1 // pred_check
      _
    $region11: #{classifier_forward.1} parent=1 // pred_check_branch
      %26 = sbr.rel (0) target = $region13
    $region12: #{classifier_forward.1} parent=1 // pred_region
      %s28 = ssub.s32 1024, 1024
      %29 = vsyncadd [#allocation6], %s28
      %s30 = sshll.u32 [#allocation5], 4
      %s31 = int_to_ptr.vmem [resolvable:$true] %s30
      %36 = dma.hbm_to_vmem [thread:$0]  %s2, 1024, %s31, [#allocation6], 64, 64, 4
    $region13: #{classifier_forward.1} parent=1 // pred_fallthru
      _
    // Predicated region
    $region14: #{classifier_forward.1} parent=1 // pred_check
      _
    $region15: #{classifier_forward.1} parent=1 // pred_check_branch
      %38 = sbr.rel (0) target = $region17
    $region16: #{classifier_forward.1} parent=1 // pred_region
      %s40 = ssub.s32 16, 16
      %41 = vsyncadd [#allocation6], %s40
      %s43 = sshll.u32 [#allocation7], 4
      %s44 = int_to_ptr.vmem [resolvable:$true] %s43
      %46 = dma.hbm_to_vmem [thread:$0]  %s3, 16, %s44, [#allocation6]
    $region17: #{classifier_forward.1} parent=1 // pred_fallthru
      _
    // Predicated region
    $region18: #{classifier_forward.1} parent=1 // pred_check
      _
    $region19: #{classifier_forward.1} parent=1 // pred_check_branch
      %48 = sbr.rel (0) target = $region21
    $region20: #{classifier_forward.1} parent=1 // pred_region
      %49 = dma.done [#allocation4], 65536
    $region21: #{classifier_forward.1} parent=1 // pred_fallthru
      _
    // Predicated region
    $region22: #{classifier_forward.1} parent=1 // pred_check
      _
    $region23: #{classifier_forward.1} parent=1 // pred_check_branch
      %51 = sbr.rel (0) target = $region25
    $region24: #{classifier_forward.1} parent=1 // pred_region
      %52 = dma.done [#allocation6], 1024
    $region25: #{classifier_forward.1} parent=1 // pred_fallthru
      _
    // Predicated region
    $region26: #{classifier_forward.1} parent=1 // pred_check
      _
    $region27: #{classifier_forward.1} parent=1 // pred_check_branch
      %54 = sbr.rel (0) target = $region29
    $region28: #{classifier_forward.1} parent=1 // pred_region
      %55 = dma.done [#allocation6], 16
    $region29: #{classifier_forward.1} parent=1 // pred_fallthru
      _
    %p57 = scmp.eq.s32.totalorder 0, 0
    // Predicated region
    $region30: #{classifier_forward.1} parent=1 // pred_check
      %p58 = pneg %p57
    $region31: #{classifier_forward.1} parent=1 // pred_check_branch
      %60 = sbr.rel (%p58) target = $region33
    $region32: #{classifier_forward.1} parent=1 // pred_region
      %61 = vst [vmem:[#allocation2] sm:$0xff] 0.0
      %62 = vst [vmem:[#allocation2 + $0x8] sm:$0xff] 0.0
      %63 = vst [vmem:[#allocation2 + $0x10] sm:$0xff] 0.0
      %64 = vst [vmem:[#allocation2 + $0x18] sm:$0xff] 0.0
    $region33: #{classifier_forward.1} parent=1 // pred_fallthru
      _
    %v65 = vld [vmem:[#allocation2] sm:$0xff]
    %v66 = vld [vmem:[#allocation2 + $0x8] sm:$0xff]
    %v67 = vld [vmem:[#allocation2 + $0x10] sm:$0xff]
    %v68 = vld [vmem:[#allocation2 + $0x18] sm:$0xff]
    %v69 = vld [vmem:[%s0] sm:$0xff]
    %v70 = vld [vmem:[%s0 + $0x8] sm:$0xff]
    %v71 = vld [vmem:[%s0 + $0x10] sm:$0xff]
    %v72 = vld [vmem:[%s0 + $0x18] sm:$0xff]
    %v73 = vld [vmem:[%s0 + $0x20] sm:$0xff]
    %v74 = vld [vmem:[%s0 + $0x28] sm:$0xff]
    %v75 = vld [vmem:[%s0 + $0x30] sm:$0xff]
    %v76 = vld [vmem:[%s0 + $0x38] sm:$0xff]
    %v77 = vld [vmem:[%s0 + $0x40] sm:$0xff]
    %v78 = vld [vmem:[%s0 + $0x48] sm:$0xff]
    %v79 = vld [vmem:[%s0 + $0x50] sm:$0xff]
    %v80 = vld [vmem:[%s0 + $0x58] sm:$0xff]
    %v81 = vld [vmem:[%s0 + $0x60] sm:$0xff]
    %v82 = vld [vmem:[%s0 + $0x68] sm:$0xff]
    %v83 = vld [vmem:[%s0 + $0x70] sm:$0xff]
    %v84 = vld [vmem:[%s0 + $0x78] sm:$0xff]
    %v85 = vpack.c.bf16 %v69, %v69
    %v86 = vpack.c.bf16 %v70, %v70
    %v87 = vpack.c.bf16 %v71, %v71
    %v88 = vpack.c.bf16 %v72, %v72
    %v89 = vpack.c.bf16 %v73, %v73
    %v90 = vpack.c.bf16 %v74, %v74
    %v91 = vpack.c.bf16 %v75, %v75
    %v92 = vpack.c.bf16 %v76, %v76
    %v93 = vpack.c.bf16 %v77, %v77
    %v94 = vpack.c.bf16 %v78, %v78
    %v95 = vpack.c.bf16 %v79, %v79
    %v96 = vpack.c.bf16 %v80, %v80
    %v97 = vpack.c.bf16 %v81, %v81
    %v98 = vpack.c.bf16 %v82, %v82
    %v99 = vpack.c.bf16 %v83, %v83
    %v100 = vpack.c.bf16 %v84, %v84
    %v101 = vld [vmem:[#allocation3] sm:$0xff]
    %v102 = vld [vmem:[#allocation3 + $0x8] sm:$0xff]
    %v103 = vld [vmem:[#allocation3 + $0x10] sm:$0xff]
    %v104 = vld [vmem:[#allocation3 + $0x18] sm:$0xff]
    %v105 = vld [vmem:[#allocation3 + $0x20] sm:$0xff]
    %v106 = vld [vmem:[#allocation3 + $0x28] sm:$0xff]
    %v107 = vld [vmem:[#allocation3 + $0x30] sm:$0xff]
    %v108 = vld [vmem:[#allocation3 + $0x38] sm:$0xff]
    %v109 = vld [vmem:[#allocation3 + $0x40] sm:$0xff]
    %v110 = vld [vmem:[#allocation3 + $0x48] sm:$0xff]
    %v111 = vld [vmem:[#allocation3 + $0x50] sm:$0xff]
    %v112 = vld [vmem:[#allocation3 + $0x58] sm:$0xff]
    %v113 = vld [vmem:[#allocation3 + $0x60] sm:$0xff]
    %v114 = vld [vmem:[#allocation3 + $0x68] sm:$0xff]
    %v115 = vld [vmem:[#allocation3 + $0x70] sm:$0xff]
    %v116 = vld [vmem:[#allocation3 + $0x78] sm:$0xff]
    %v117 = vld [vmem:[#allocation3 + $0x80] sm:$0xff]
    %v118 = vld [vmem:[#allocation3 + $0x88] sm:$0xff]
    %v119 = vld [vmem:[#allocation3 + $0x90] sm:$0xff]
    %v120 = vld [vmem:[#allocation3 + $0x98] sm:$0xff]
    %v121 = vld [vmem:[#allocation3 + $0xa0] sm:$0xff]
    %v122 = vld [vmem:[#allocation3 + $0xa8] sm:$0xff]
    %v123 = vld [vmem:[#allocation3 + $0xb0] sm:$0xff]
    %v124 = vld [vmem:[#allocation3 + $0xb8] sm:$0xff]
    %v125 = vld [vmem:[#allocation3 + $0xc0] sm:$0xff]
    %v126 = vld [vmem:[#allocation3 + $0xc8] sm:$0xff]
    %v127 = vld [vmem:[#allocation3 + $0xd0] sm:$0xff]
    %v128 = vld [vmem:[#allocation3 + $0xd8] sm:$0xff]
    %v129 = vld [vmem:[#allocation3 + $0xe0] sm:$0xff]
    %v130 = vld [vmem:[#allocation3 + $0xe8] sm:$0xff]
    %v131 = vld [vmem:[#allocation3 + $0xf0] sm:$0xff]
    %v132 = vld [vmem:[#allocation3 + $0xf8] sm:$0xff]
    %v133 = vld [vmem:[#allocation3 + $0x100] sm:$0xff]
    %v134 = vld [vmem:[#allocation3 + $0x108] sm:$0xff]
    %v135 = vld [vmem:[#allocation3 + $0x110] sm:$0xff]
    %v136 = vld [vmem:[#allocation3 + $0x118] sm:$0xff]
    %v137 = vld [vmem:[#allocation3 + $0x120] sm:$0xff]
    %v138 = vld [vmem:[#allocation3 + $0x128] sm:$0xff]
    %v139 = vld [vmem:[#allocation3 + $0x130] sm:$0xff]
    %v140 = vld [vmem:[#allocation3 + $0x138] sm:$0xff]
    %v141 = vld [vmem:[#allocation3 + $0x140] sm:$0xff]
    %v142 = vld [vmem:[#allocation3 + $0x148] sm:$0xff]
    %v143 = vld [vmem:[#allocation3 + $0x150] sm:$0xff]
    %v144 = vld [vmem:[#allocation3 + $0x158] sm:$0xff]
    %v145 = vld [vmem:[#allocation3 + $0x160] sm:$0xff]
    %v146 = vld [vmem:[#allocation3 + $0x168] sm:$0xff]
    %v147 = vld [vmem:[#allocation3 + $0x170] sm:$0xff]
    %v148 = vld [vmem:[#allocation3 + $0x178] sm:$0xff]
    %v149 = vld [vmem:[#allocation3 + $0x180] sm:$0xff]
    %v150 = vld [vmem:[#allocation3 + $0x188] sm:$0xff]
    %v151 = vld [vmem:[#allocation3 + $0x190] sm:$0xff]
    %v152 = vld [vmem:[#allocation3 + $0x198] sm:$0xff]
    %v153 = vld [vmem:[#allocation3 + $0x1a0] sm:$0xff]
    %v154 = vld [vmem:[#allocation3 + $0x1a8] sm:$0xff]
    %v155 = vld [vmem:[#allocation3 + $0x1b0] sm:$0xff]
    %v156 = vld [vmem:[#allocation3 + $0x1b8] sm:$0xff]
    %v157 = vld [vmem:[#allocation3 + $0x1c0] sm:$0xff]
    %v158 = vld [vmem:[#allocation3 + $0x1c8] sm:$0xff]
    %v159 = vld [vmem:[#allocation3 + $0x1d0] sm:$0xff]
    %v160 = vld [vmem:[#allocation3 + $0x1d8] sm:$0xff]
    %v161 = vld [vmem:[#allocation3 + $0x1e0] sm:$0xff]
    %v162 = vld [vmem:[#allocation3 + $0x1e8] sm:$0xff]
    %v163 = vld [vmem:[#allocation3 + $0x1f0] sm:$0xff]
    %v164 = vld [vmem:[#allocation3 + $0x1f8] sm:$0xff]
    %v165 = vld [vmem:[#allocation3 + $0x200] sm:$0xff]
    %v166 = vld [vmem:[#allocation3 + $0x208] sm:$0xff]
    %v167 = vld [vmem:[#allocation3 + $0x210] sm:$0xff]
    %v168 = vld [vmem:[#allocation3 + $0x218] sm:$0xff]
    %v169 = vld [vmem:[#allocation3 + $0x220] sm:$0xff]
    %v170 = vld [vmem:[#allocation3 + $0x228] sm:$0xff]
    %v171 = vld [vmem:[#allocation3 + $0x230] sm:$0xff]
    %v172 = vld [vmem:[#allocation3 + $0x238] sm:$0xff]
    %v173 = vld [vmem:[#allocation3 + $0x240] sm:$0xff]
    %v174 = vld [vmem:[#allocation3 + $0x248] sm:$0xff]
    %v175 = vld [vmem:[#allocation3 + $0x250] sm:$0xff]
    %v176 = vld [vmem:[#allocation3 + $0x258] sm:$0xff]
    %v177 = vld [vmem:[#allocation3 + $0x260] sm:$0xff]
    %v178 = vld [vmem:[#allocation3 + $0x268] sm:$0xff]
    %v179 = vld [vmem:[#allocation3 + $0x270] sm:$0xff]
    %v180 = vld [vmem:[#allocation3 + $0x278] sm:$0xff]
    %v181 = vld [vmem:[#allocation3 + $0x280] sm:$0xff]
    %v182 = vld [vmem:[#allocation3 + $0x288] sm:$0xff]
    %v183 = vld [vmem:[#allocation3 + $0x290] sm:$0xff]
    %v184 = vld [vmem:[#allocation3 + $0x298] sm:$0xff]
    %v185 = vld [vmem:[#allocation3 + $0x2a0] sm:$0xff]
    %v186 = vld [vmem:[#allocation3 + $0x2a8] sm:$0xff]
    %v187 = vld [vmem:[#allocation3 + $0x2b0] sm:$0xff]
    %v188 = vld [vmem:[#allocation3 + $0x2b8] sm:$0xff]
    %v189 = vld [vmem:[#allocation3 + $0x2c0] sm:$0xff]
    %v190 = vld [vmem:[#allocation3 + $0x2c8] sm:$0xff]
    %v191 = vld [vmem:[#allocation3 + $0x2d0] sm:$0xff]
    %v192 = vld [vmem:[#allocation3 + $0x2d8] sm:$0xff]
    %v193 = vld [vmem:[#allocation3 + $0x2e0] sm:$0xff]
    %v194 = vld [vmem:[#allocation3 + $0x2e8] sm:$0xff]
    %v195 = vld [vmem:[#allocation3 + $0x2f0] sm:$0xff]
    %v196 = vld [vmem:[#allocation3 + $0x2f8] sm:$0xff]
    %v197 = vld [vmem:[#allocation3 + $0x300] sm:$0xff]
    %v198 = vld [vmem:[#allocation3 + $0x308] sm:$0xff]
    %v199 = vld [vmem:[#allocation3 + $0x310] sm:$0xff]
    %v200 = vld [vmem:[#allocation3 + $0x318] sm:$0xff]
    %v201 = vld [vmem:[#allocation3 + $0x320] sm:$0xff]
    %v202 = vld [vmem:[#allocation3 + $0x328] sm:$0xff]
    %v203 = vld [vmem:[#allocation3 + $0x330] sm:$0xff]
    %v204 = vld [vmem:[#allocation3 + $0x338] sm:$0xff]
    %v205 = vld [vmem:[#allocation3 + $0x340] sm:$0xff]
    %v206 = vld [vmem:[#allocation3 + $0x348] sm:$0xff]
    %v207 = vld [vmem:[#allocation3 + $0x350] sm:$0xff]
    %v208 = vld [vmem:[#allocation3 + $0x358] sm:$0xff]
    %v209 = vld [vmem:[#allocation3 + $0x360] sm:$0xff]
    %v210 = vld [vmem:[#allocation3 + $0x368] sm:$0xff]
    %v211 = vld [vmem:[#allocation3 + $0x370] sm:$0xff]
    %v212 = vld [vmem:[#allocation3 + $0x378] sm:$0xff]
    %v213 = vld [vmem:[#allocation3 + $0x380] sm:$0xff]
    %v214 = vld [vmem:[#allocation3 + $0x388] sm:$0xff]
    %v215 = vld [vmem:[#allocation3 + $0x390] sm:$0xff]
    %v216 = vld [vmem:[#allocation3 + $0x398] sm:$0xff]
    %v217 = vld [vmem:[#allocation3 + $0x3a0] sm:$0xff]
    %v218 = vld [vmem:[#allocation3 + $0x3a8] sm:$0xff]
    %v219 = vld [vmem:[#allocation3 + $0x3b0] sm:$0xff]
    %v220 = vld [vmem:[#allocation3 + $0x3b8] sm:$0xff]
    %v221 = vld [vmem:[#allocation3 + $0x3c0] sm:$0xff]
    %v222 = vld [vmem:[#allocation3 + $0x3c8] sm:$0xff]
    %v223 = vld [vmem:[#allocation3 + $0x3d0] sm:$0xff]
    %v224 = vld [vmem:[#allocation3 + $0x3d8] sm:$0xff]
    %v225 = vld [vmem:[#allocation3 + $0x3e0] sm:$0xff]
    %v226 = vld [vmem:[#allocation3 + $0x3e8] sm:$0xff]
    %v227 = vld [vmem:[#allocation3 + $0x3f0] sm:$0xff]
    %v228 = vld [vmem:[#allocation3 + $0x3f8] sm:$0xff]
    %v229 = vld [vmem:[#allocation3 + $0x400] sm:$0xff]
    %v230 = vld [vmem:[#allocation3 + $0x408] sm:$0xff]
    %v231 = vld [vmem:[#allocation3 + $0x410] sm:$0xff]
    %v232 = vld [vmem:[#allocation3 + $0x418] sm:$0xff]
    %v233 = vld [vmem:[#allocation3 + $0x420] sm:$0xff]
    %v234 = vld [vmem:[#allocation3 + $0x428] sm:$0xff]
    %v235 = vld [vmem:[#allocation3 + $0x430] sm:$0xff]
    %v236 = vld [vmem:[#allocation3 + $0x438] sm:$0xff]
    %v237 = vld [vmem:[#allocation3 + $0x440] sm:$0xff]
    %v238 = vld [vmem:[#allocation3 + $0x448] sm:$0xff]
    %v239 = vld [vmem:[#allocation3 + $0x450] sm:$0xff]
    %v240 = vld [vmem:[#allocation3 + $0x458] sm:$0xff]
    %v241 = vld [vmem:[#allocation3 + $0x460] sm:$0xff]
    %v242 = vld [vmem:[#allocation3 + $0x468] sm:$0xff]
    %v243 = vld [vmem:[#allocation3 + $0x470] sm:$0xff]
    %v244 = vld [vmem:[#allocation3 + $0x478] sm:$0xff]
    %v245 = vld [vmem:[#allocation3 + $0x480] sm:$0xff]
    %v246 = vld [vmem:[#allocation3 + $0x488] sm:$0xff]
    %v247 = vld [vmem:[#allocation3 + $0x490] sm:$0xff]
    %v248 = vld [vmem:[#allocation3 + $0x498] sm:$0xff]
    %v249 = vld [vmem:[#allocation3 + $0x4a0] sm:$0xff]
    %v250 = vld [vmem:[#allocation3 + $0x4a8] sm:$0xff]
    %v251 = vld [vmem:[#allocation3 + $0x4b0] sm:$0xff]
    %v252 = vld [vmem:[#allocation3 + $0x4b8] sm:$0xff]
    %v253 = vld [vmem:[#allocation3 + $0x4c0] sm:$0xff]
    %v254 = vld [vmem:[#allocation3 + $0x4c8] sm:$0xff]
    %v255 = vld [vmem:[#allocation3 + $0x4d0] sm:$0xff]
    %v256 = vld [vmem:[#allocation3 + $0x4d8] sm:$0xff]
    %v257 = vld [vmem:[#allocation3 + $0x4e0] sm:$0xff]
    %v258 = vld [vmem:[#allocation3 + $0x4e8] sm:$0xff]
    %v259 = vld [vmem:[#allocation3 + $0x4f0] sm:$0xff]
    %v260 = vld [vmem:[#allocation3 + $0x4f8] sm:$0xff]
    %v261 = vld [vmem:[#allocation3 + $0x500] sm:$0xff]
    %v262 = vld [vmem:[#allocation3 + $0x508] sm:$0xff]
    %v263 = vld [vmem:[#allocation3 + $0x510] sm:$0xff]
    %v264 = vld [vmem:[#allocation3 + $0x518] sm:$0xff]
    %v265 = vld [vmem:[#allocation3 + $0x520] sm:$0xff]
    %v266 = vld [vmem:[#allocation3 + $0x528] sm:$0xff]
    %v267 = vld [vmem:[#allocation3 + $0x530] sm:$0xff]
    %v268 = vld [vmem:[#allocation3 + $0x538] sm:$0xff]
    %v269 = vld [vmem:[#allocation3 + $0x540] sm:$0xff]
    %v270 = vld [vmem:[#allocation3 + $0x548] sm:$0xff]
    %v271 = vld [vmem:[#allocation3 + $0x550] sm:$0xff]
    %v272 = vld [vmem:[#allocation3 + $0x558] sm:$0xff]
    %v273 = vld [vmem:[#allocation3 + $0x560] sm:$0xff]
    %v274 = vld [vmem:[#allocation3 + $0x568] sm:$0xff]
    %v275 = vld [vmem:[#allocation3 + $0x570] sm:$0xff]
    %v276 = vld [vmem:[#allocation3 + $0x578] sm:$0xff]
    %v277 = vld [vmem:[#allocation3 + $0x580] sm:$0xff]
    %v278 = vld [vmem:[#allocation3 + $0x588] sm:$0xff]
    %v279 = vld [vmem:[#allocation3 + $0x590] sm:$0xff]
    %v280 = vld [vmem:[#allocation3 + $0x598] sm:$0xff]
    %v281 = vld [vmem:[#allocation3 + $0x5a0] sm:$0xff]
    %v282 = vld [vmem:[#allocation3 + $0x5a8] sm:$0xff]
    %v283 = vld [vmem:[#allocation3 + $0x5b0] sm:$0xff]
    %v284 = vld [vmem:[#allocation3 + $0x5b8] sm:$0xff]
    %v285 = vld [vmem:[#allocation3 + $0x5c0] sm:$0xff]
    %v286 = vld [vmem:[#allocation3 + $0x5c8] sm:$0xff]
    %v287 = vld [vmem:[#allocation3 + $0x5d0] sm:$0xff]
    %v288 = vld [vmem:[#allocation3 + $0x5d8] sm:$0xff]
    %v289 = vld [vmem:[#allocation3 + $0x5e0] sm:$0xff]
    %v290 = vld [vmem:[#allocation3 + $0x5e8] sm:$0xff]
    %v291 = vld [vmem:[#allocation3 + $0x5f0] sm:$0xff]
    %v292 = vld [vmem:[#allocation3 + $0x5f8] sm:$0xff]
    %v293 = vld [vmem:[#allocation3 + $0x600] sm:$0xff]
    %v294 = vld [vmem:[#allocation3 + $0x608] sm:$0xff]
    %v295 = vld [vmem:[#allocation3 + $0x610] sm:$0xff]
    %v296 = vld [vmem:[#allocation3 + $0x618] sm:$0xff]
    %v297 = vld [vmem:[#allocation3 + $0x620] sm:$0xff]
    %v298 = vld [vmem:[#allocation3 + $0x628] sm:$0xff]
    %v299 = vld [vmem:[#allocation3 + $0x630] sm:$0xff]
    %v300 = vld [vmem:[#allocation3 + $0x638] sm:$0xff]
    %v301 = vld [vmem:[#allocation3 + $0x640] sm:$0xff]
    %v302 = vld [vmem:[#allocation3 + $0x648] sm:$0xff]
    %v303 = vld [vmem:[#allocation3 + $0x650] sm:$0xff]
    %v304 = vld [vmem:[#allocation3 + $0x658] sm:$0xff]
    %v305 = vld [vmem:[#allocation3 + $0x660] sm:$0xff]
    %v306 = vld [vmem:[#allocation3 + $0x668] sm:$0xff]
    %v307 = vld [vmem:[#allocation3 + $0x670] sm:$0xff]
    %v308 = vld [vmem:[#allocation3 + $0x678] sm:$0xff]
    %v309 = vld [vmem:[#allocation3 + $0x680] sm:$0xff]
    %v310 = vld [vmem:[#allocation3 + $0x688] sm:$0xff]
    %v311 = vld [vmem:[#allocation3 + $0x690] sm:$0xff]
    %v312 = vld [vmem:[#allocation3 + $0x698] sm:$0xff]
    %v313 = vld [vmem:[#allocation3 + $0x6a0] sm:$0xff]
    %v314 = vld [vmem:[#allocation3 + $0x6a8] sm:$0xff]
    %v315 = vld [vmem:[#allocation3 + $0x6b0] sm:$0xff]
    %v316 = vld [vmem:[#allocation3 + $0x6b8] sm:$0xff]
    %v317 = vld [vmem:[#allocation3 + $0x6c0] sm:$0xff]
    %v318 = vld [vmem:[#allocation3 + $0x6c8] sm:$0xff]
    %v319 = vld [vmem:[#allocation3 + $0x6d0] sm:$0xff]
    %v320 = vld [vmem:[#allocation3 + $0x6d8] sm:$0xff]
    %v321 = vld [vmem:[#allocation3 + $0x6e0] sm:$0xff]
    %v322 = vld [vmem:[#allocation3 + $0x6e8] sm:$0xff]
    %v323 = vld [vmem:[#allocation3 + $0x6f0] sm:$0xff]
    %v324 = vld [vmem:[#allocation3 + $0x6f8] sm:$0xff]
    %v325 = vld [vmem:[#allocation3 + $0x700] sm:$0xff]
    %v326 = vld [vmem:[#allocation3 + $0x708] sm:$0xff]
    %v327 = vld [vmem:[#allocation3 + $0x710] sm:$0xff]
    %v328 = vld [vmem:[#allocation3 + $0x718] sm:$0xff]
    %v329 = vld [vmem:[#allocation3 + $0x720] sm:$0xff]
    %v330 = vld [vmem:[#allocation3 + $0x728] sm:$0xff]
    %v331 = vld [vmem:[#allocation3 + $0x730] sm:$0xff]
    %v332 = vld [vmem:[#allocation3 + $0x738] sm:$0xff]
    %v333 = vld [vmem:[#allocation3 + $0x740] sm:$0xff]
    %v334 = vld [vmem:[#allocation3 + $0x748] sm:$0xff]
    %v335 = vld [vmem:[#allocation3 + $0x750] sm:$0xff]
    %v336 = vld [vmem:[#allocation3 + $0x758] sm:$0xff]
    %v337 = vld [vmem:[#allocation3 + $0x760] sm:$0xff]
    %v338 = vld [vmem:[#allocation3 + $0x768] sm:$0xff]
    %v339 = vld [vmem:[#allocation3 + $0x770] sm:$0xff]
    %v340 = vld [vmem:[#allocation3 + $0x778] sm:$0xff]
    %v341 = vld [vmem:[#allocation3 + $0x780] sm:$0xff]
    %v342 = vld [vmem:[#allocation3 + $0x788] sm:$0xff]
    %v343 = vld [vmem:[#allocation3 + $0x790] sm:$0xff]
    %v344 = vld [vmem:[#allocation3 + $0x798] sm:$0xff]
    %v345 = vld [vmem:[#allocation3 + $0x7a0] sm:$0xff]
    %v346 = vld [vmem:[#allocation3 + $0x7a8] sm:$0xff]
    %v347 = vld [vmem:[#allocation3 + $0x7b0] sm:$0xff]
    %v348 = vld [vmem:[#allocation3 + $0x7b8] sm:$0xff]
    %v349 = vld [vmem:[#allocation3 + $0x7c0] sm:$0xff]
    %v350 = vld [vmem:[#allocation3 + $0x7c8] sm:$0xff]
    %v351 = vld [vmem:[#allocation3 + $0x7d0] sm:$0xff]
    %v352 = vld [vmem:[#allocation3 + $0x7d8] sm:$0xff]
    %v353 = vld [vmem:[#allocation3 + $0x7e0] sm:$0xff]
    %v354 = vld [vmem:[#allocation3 + $0x7e8] sm:$0xff]
    %v355 = vld [vmem:[#allocation3 + $0x7f0] sm:$0xff]
    %v356 = vld [vmem:[#allocation3 + $0x7f8] sm:$0xff]
    %v357 = vld [vmem:[#allocation3 + $0x800] sm:$0xff]
    %v358 = vld [vmem:[#allocation3 + $0x808] sm:$0xff]
    %v359 = vld [vmem:[#allocation3 + $0x810] sm:$0xff]
    %v360 = vld [vmem:[#allocation3 + $0x818] sm:$0xff]
    %v361 = vld [vmem:[#allocation3 + $0x820] sm:$0xff]
    %v362 = vld [vmem:[#allocation3 + $0x828] sm:$0xff]
    %v363 = vld [vmem:[#allocation3 + $0x830] sm:$0xff]
    %v364 = vld [vmem:[#allocation3 + $0x838] sm:$0xff]
    %v365 = vld [vmem:[#allocation3 + $0x840] sm:$0xff]
    %v366 = vld [vmem:[#allocation3 + $0x848] sm:$0xff]
    %v367 = vld [vmem:[#allocation3 + $0x850] sm:$0xff]
    %v368 = vld [vmem:[#allocation3 + $0x858] sm:$0xff]
    %v369 = vld [vmem:[#allocation3 + $0x860] sm:$0xff]
    %v370 = vld [vmem:[#allocation3 + $0x868] sm:$0xff]
    %v371 = vld [vmem:[#allocation3 + $0x870] sm:$0xff]
    %v372 = vld [vmem:[#allocation3 + $0x878] sm:$0xff]
    %v373 = vld [vmem:[#allocation3 + $0x880] sm:$0xff]
    %v374 = vld [vmem:[#allocation3 + $0x888] sm:$0xff]
    %v375 = vld [vmem:[#allocation3 + $0x890] sm:$0xff]
    %v376 = vld [vmem:[#allocation3 + $0x898] sm:$0xff]
    %v377 = vld [vmem:[#allocation3 + $0x8a0] sm:$0xff]
    %v378 = vld [vmem:[#allocation3 + $0x8a8] sm:$0xff]
    %v379 = vld [vmem:[#allocation3 + $0x8b0] sm:$0xff]
    %v380 = vld [vmem:[#allocation3 + $0x8b8] sm:$0xff]
    %v381 = vld [vmem:[#allocation3 + $0x8c0] sm:$0xff]
    %v382 = vld [vmem:[#allocation3 + $0x8c8] sm:$0xff]
    %v383 = vld [vmem:[#allocation3 + $0x8d0] sm:$0xff]
    %v384 = vld [vmem:[#allocation3 + $0x8d8] sm:$0xff]
    %v385 = vld [vmem:[#allocation3 + $0x8e0] sm:$0xff]
    %v386 = vld [vmem:[#allocation3 + $0x8e8] sm:$0xff]
    %v387 = vld [vmem:[#allocation3 + $0x8f0] sm:$0xff]
    %v388 = vld [vmem:[#allocation3 + $0x8f8] sm:$0xff]
    %v389 = vld [vmem:[#allocation3 + $0x900] sm:$0xff]
    %v390 = vld [vmem:[#allocation3 + $0x908] sm:$0xff]
    %v391 = vld [vmem:[#allocation3 + $0x910] sm:$0xff]
    %v392 = vld [vmem:[#allocation3 + $0x918] sm:$0xff]
    %v393 = vld [vmem:[#allocation3 + $0x920] sm:$0xff]
    %v394 = vld [vmem:[#allocation3 + $0x928] sm:$0xff]
    %v395 = vld [vmem:[#allocation3 + $0x930] sm:$0xff]
    %v396 = vld [vmem:[#allocation3 + $0x938] sm:$0xff]
    %v397 = vld [vmem:[#allocation3 + $0x940] sm:$0xff]
    %v398 = vld [vmem:[#allocation3 + $0x948] sm:$0xff]
    %v399 = vld [vmem:[#allocation3 + $0x950] sm:$0xff]
    %v400 = vld [vmem:[#allocation3 + $0x958] sm:$0xff]
    %v401 = vld [vmem:[#allocation3 + $0x960] sm:$0xff]
    %v402 = vld [vmem:[#allocation3 + $0x968] sm:$0xff]
    %v403 = vld [vmem:[#allocation3 + $0x970] sm:$0xff]
    %v404 = vld [vmem:[#allocation3 + $0x978] sm:$0xff]
    %v405 = vld [vmem:[#allocation3 + $0x980] sm:$0xff]
    %v406 = vld [vmem:[#allocation3 + $0x988] sm:$0xff]
    %v407 = vld [vmem:[#allocation3 + $0x990] sm:$0xff]
    %v408 = vld [vmem:[#allocation3 + $0x998] sm:$0xff]
    %v409 = vld [vmem:[#allocation3 + $0x9a0] sm:$0xff]
    %v410 = vld [vmem:[#allocation3 + $0x9a8] sm:$0xff]
    %v411 = vld [vmem:[#allocation3 + $0x9b0] sm:$0xff]
    %v412 = vld [vmem:[#allocation3 + $0x9b8] sm:$0xff]
    %v413 = vld [vmem:[#allocation3 + $0x9c0] sm:$0xff]
    %v414 = vld [vmem:[#allocation3 + $0x9c8] sm:$0xff]
    %v415 = vld [vmem:[#allocation3 + $0x9d0] sm:$0xff]
    %v416 = vld [vmem:[#allocation3 + $0x9d8] sm:$0xff]
    %v417 = vld [vmem:[#allocation3 + $0x9e0] sm:$0xff]
    %v418 = vld [vmem:[#allocation3 + $0x9e8] sm:$0xff]
    %v419 = vld [vmem:[#allocation3 + $0x9f0] sm:$0xff]
    %v420 = vld [vmem:[#allocation3 + $0x9f8] sm:$0xff]
    %v421 = vld [vmem:[#allocation3 + $0xa00] sm:$0xff]
    %v422 = vld [vmem:[#allocation3 + $0xa08] sm:$0xff]
    %v423 = vld [vmem:[#allocation3 + $0xa10] sm:$0xff]
    %v424 = vld [vmem:[#allocation3 + $0xa18] sm:$0xff]
    %v425 = vld [vmem:[#allocation3 + $0xa20] sm:$0xff]
    %v426 = vld [vmem:[#allocation3 + $0xa28] sm:$0xff]
    %v427 = vld [vmem:[#allocation3 + $0xa30] sm:$0xff]
    %v428 = vld [vmem:[#allocation3 + $0xa38] sm:$0xff]
    %v429 = vld [vmem:[#allocation3 + $0xa40] sm:$0xff]
    %v430 = vld [vmem:[#allocation3 + $0xa48] sm:$0xff]
    %v431 = vld [vmem:[#allocation3 + $0xa50] sm:$0xff]
    %v432 = vld [vmem:[#allocation3 + $0xa58] sm:$0xff]
    %v433 = vld [vmem:[#allocation3 + $0xa60] sm:$0xff]
    %v434 = vld [vmem:[#allocation3 + $0xa68] sm:$0xff]
    %v435 = vld [vmem:[#allocation3 + $0xa70] sm:$0xff]
    %v436 = vld [vmem:[#allocation3 + $0xa78] sm:$0xff]
    %v437 = vld [vmem:[#allocation3 + $0xa80] sm:$0xff]
    %v438 = vld [vmem:[#allocation3 + $0xa88] sm:$0xff]
    %v439 = vld [vmem:[#allocation3 + $0xa90] sm:$0xff]
    %v440 = vld [vmem:[#allocation3 + $0xa98] sm:$0xff]
    %v441 = vld [vmem:[#allocation3 + $0xaa0] sm:$0xff]
    %v442 = vld [vmem:[#allocation3 + $0xaa8] sm:$0xff]
    %v443 = vld [vmem:[#allocation3 + $0xab0] sm:$0xff]
    %v444 = vld [vmem:[#allocation3 + $0xab8] sm:$0xff]
    %v445 = vld [vmem:[#allocation3 + $0xac0] sm:$0xff]
    %v446 = vld [vmem:[#allocation3 + $0xac8] sm:$0xff]
    %v447 = vld [vmem:[#allocation3 + $0xad0] sm:$0xff]
    %v448 = vld [vmem:[#allocation3 + $0xad8] sm:$0xff]
    %v449 = vld [vmem:[#allocation3 + $0xae0] sm:$0xff]
    %v450 = vld [vmem:[#allocation3 + $0xae8] sm:$0xff]
    %v451 = vld [vmem:[#allocation3 + $0xaf0] sm:$0xff]
    %v452 = vld [vmem:[#allocation3 + $0xaf8] sm:$0xff]
    %v453 = vld [vmem:[#allocation3 + $0xb00] sm:$0xff]
    %v454 = vld [vmem:[#allocation3 + $0xb08] sm:$0xff]
    %v455 = vld [vmem:[#allocation3 + $0xb10] sm:$0xff]
    %v456 = vld [vmem:[#allocation3 + $0xb18] sm:$0xff]
    %v457 = vld [vmem:[#allocation3 + $0xb20] sm:$0xff]
    %v458 = vld [vmem:[#allocation3 + $0xb28] sm:$0xff]
    %v459 = vld [vmem:[#allocation3 + $0xb30] sm:$0xff]
    %v460 = vld [vmem:[#allocation3 + $0xb38] sm:$0xff]
    %v461 = vld [vmem:[#allocation3 + $0xb40] sm:$0xff]
    %v462 = vld [vmem:[#allocation3 + $0xb48] sm:$0xff]
    %v463 = vld [vmem:[#allocation3 + $0xb50] sm:$0xff]
    %v464 = vld [vmem:[#allocation3 + $0xb58] sm:$0xff]
    %v465 = vld [vmem:[#allocation3 + $0xb60] sm:$0xff]
    %v466 = vld [vmem:[#allocation3 + $0xb68] sm:$0xff]
    %v467 = vld [vmem:[#allocation3 + $0xb70] sm:$0xff]
    %v468 = vld [vmem:[#allocation3 + $0xb78] sm:$0xff]
    %v469 = vld [vmem:[#allocation3 + $0xb80] sm:$0xff]
    %v470 = vld [vmem:[#allocation3 + $0xb88] sm:$0xff]
    %v471 = vld [vmem:[#allocation3 + $0xb90] sm:$0xff]
    %v472 = vld [vmem:[#allocation3 + $0xb98] sm:$0xff]
    %v473 = vld [vmem:[#allocation3 + $0xba0] sm:$0xff]
    %v474 = vld [vmem:[#allocation3 + $0xba8] sm:$0xff]
    %v475 = vld [vmem:[#allocation3 + $0xbb0] sm:$0xff]
    %v476 = vld [vmem:[#allocation3 + $0xbb8] sm:$0xff]
    %v477 = vld [vmem:[#allocation3 + $0xbc0] sm:$0xff]
    %v478 = vld [vmem:[#allocation3 + $0xbc8] sm:$0xff]
    %v479 = vld [vmem:[#allocation3 + $0xbd0] sm:$0xff]
    %v480 = vld [vmem:[#allocation3 + $0xbd8] sm:$0xff]
    %v481 = vld [vmem:[#allocation3 + $0xbe0] sm:$0xff]
    %v482 = vld [vmem:[#allocation3 + $0xbe8] sm:$0xff]
    %v483 = vld [vmem:[#allocation3 + $0xbf0] sm:$0xff]
    %v484 = vld [vmem:[#allocation3 + $0xbf8] sm:$0xff]
    %v485 = vld [vmem:[#allocation3 + $0xc00] sm:$0xff]
    %v486 = vld [vmem:[#allocation3 + $0xc08] sm:$0xff]
    %v487 = vld [vmem:[#allocation3 + $0xc10] sm:$0xff]
    %v488 = vld [vmem:[#allocation3 + $0xc18] sm:$0xff]
    %v489 = vld [vmem:[#allocation3 + $0xc20] sm:$0xff]
    %v490 = vld [vmem:[#allocation3 + $0xc28] sm:$0xff]
    %v491 = vld [vmem:[#allocation3 + $0xc30] sm:$0xff]
    %v492 = vld [vmem:[#allocation3 + $0xc38] sm:$0xff]
    %v493 = vld [vmem:[#allocation3 + $0xc40] sm:$0xff]
    %v494 = vld [vmem:[#allocation3 + $0xc48] sm:$0xff]
    %v495 = vld [vmem:[#allocation3 + $0xc50] sm:$0xff]
    %v496 = vld [vmem:[#allocation3 + $0xc58] sm:$0xff]
    %v497 = vld [vmem:[#allocation3 + $0xc60] sm:$0xff]
    %v498 = vld [vmem:[#allocation3 + $0xc68] sm:$0xff]
    %v499 = vld [vmem:[#allocation3 + $0xc70] sm:$0xff]
    %v500 = vld [vmem:[#allocation3 + $0xc78] sm:$0xff]
    %v501 = vld [vmem:[#allocation3 + $0xc80] sm:$0xff]
    %v502 = vld [vmem:[#allocation3 + $0xc88] sm:$0xff]
    %v503 = vld [vmem:[#allocation3 + $0xc90] sm:$0xff]
    %v504 = vld [vmem:[#allocation3 + $0xc98] sm:$0xff]
    %v505 = vld [vmem:[#allocation3 + $0xca0] sm:$0xff]
    %v506 = vld [vmem:[#allocation3 + $0xca8] sm:$0xff]
    %v507 = vld [vmem:[#allocation3 + $0xcb0] sm:$0xff]
    %v508 = vld [vmem:[#allocation3 + $0xcb8] sm:$0xff]
    %v509 = vld [vmem:[#allocation3 + $0xcc0] sm:$0xff]
    %v510 = vld [vmem:[#allocation3 + $0xcc8] sm:$0xff]
    %v511 = vld [vmem:[#allocation3 + $0xcd0] sm:$0xff]
    %v512 = vld [vmem:[#allocation3 + $0xcd8] sm:$0xff]
    %v513 = vld [vmem:[#allocation3 + $0xce0] sm:$0xff]
    %v514 = vld [vmem:[#allocation3 + $0xce8] sm:$0xff]
    %v515 = vld [vmem:[#allocation3 + $0xcf0] sm:$0xff]
    %v516 = vld [vmem:[#allocation3 + $0xcf8] sm:$0xff]
    %v517 = vld [vmem:[#allocation3 + $0xd00] sm:$0xff]
    %v518 = vld [vmem:[#allocation3 + $0xd08] sm:$0xff]
    %v519 = vld [vmem:[#allocation3 + $0xd10] sm:$0xff]
    %v520 = vld [vmem:[#allocation3 + $0xd18] sm:$0xff]
    %v521 = vld [vmem:[#allocation3 + $0xd20] sm:$0xff]
    %v522 = vld [vmem:[#allocation3 + $0xd28] sm:$0xff]
    %v523 = vld [vmem:[#allocation3 + $0xd30] sm:$0xff]
    %v524 = vld [vmem:[#allocation3 + $0xd38] sm:$0xff]
    %v525 = vld [vmem:[#allocation3 + $0xd40] sm:$0xff]
    %v526 = vld [vmem:[#allocation3 + $0xd48] sm:$0xff]
    %v527 = vld [vmem:[#allocation3 + $0xd50] sm:$0xff]
    %v528 = vld [vmem:[#allocation3 + $0xd58] sm:$0xff]
    %v529 = vld [vmem:[#allocation3 + $0xd60] sm:$0xff]
    %v530 = vld [vmem:[#allocation3 + $0xd68] sm:$0xff]
    %v531 = vld [vmem:[#allocation3 + $0xd70] sm:$0xff]
    %v532 = vld [vmem:[#allocation3 + $0xd78] sm:$0xff]
    %v533 = vld [vmem:[#allocation3 + $0xd80] sm:$0xff]
    %v534 = vld [vmem:[#allocation3 + $0xd88] sm:$0xff]
    %v535 = vld [vmem:[#allocation3 + $0xd90] sm:$0xff]
    %v536 = vld [vmem:[#allocation3 + $0xd98] sm:$0xff]
    %v537 = vld [vmem:[#allocation3 + $0xda0] sm:$0xff]
    %v538 = vld [vmem:[#allocation3 + $0xda8] sm:$0xff]
    %v539 = vld [vmem:[#allocation3 + $0xdb0] sm:$0xff]
    %v540 = vld [vmem:[#allocation3 + $0xdb8] sm:$0xff]
    %v541 = vld [vmem:[#allocation3 + $0xdc0] sm:$0xff]
    %v542 = vld [vmem:[#allocation3 + $0xdc8] sm:$0xff]
    %v543 = vld [vmem:[#allocation3 + $0xdd0] sm:$0xff]
    %v544 = vld [vmem:[#allocation3 + $0xdd8] sm:$0xff]
    %v545 = vld [vmem:[#allocation3 + $0xde0] sm:$0xff]
    %v546 = vld [vmem:[#allocation3 + $0xde8] sm:$0xff]
    %v547 = vld [vmem:[#allocation3 + $0xdf0] sm:$0xff]
    %v548 = vld [vmem:[#allocation3 + $0xdf8] sm:$0xff]
    %v549 = vld [vmem:[#allocation3 + $0xe00] sm:$0xff]
    %v550 = vld [vmem:[#allocation3 + $0xe08] sm:$0xff]
    %v551 = vld [vmem:[#allocation3 + $0xe10] sm:$0xff]
    %v552 = vld [vmem:[#allocation3 + $0xe18] sm:$0xff]
    %v553 = vld [vmem:[#allocation3 + $0xe20] sm:$0xff]
    %v554 = vld [vmem:[#allocation3 + $0xe28] sm:$0xff]
    %v555 = vld [vmem:[#allocation3 + $0xe30] sm:$0xff]
    %v556 = vld [vmem:[#allocation3 + $0xe38] sm:$0xff]
    %v557 = vld [vmem:[#allocation3 + $0xe40] sm:$0xff]
    %v558 = vld [vmem:[#allocation3 + $0xe48] sm:$0xff]
    %v559 = vld [vmem:[#allocation3 + $0xe50] sm:$0xff]
    %v560 = vld [vmem:[#allocation3 + $0xe58] sm:$0xff]
    %v561 = vld [vmem:[#allocation3 + $0xe60] sm:$0xff]
    %v562 = vld [vmem:[#allocation3 + $0xe68] sm:$0xff]
    %v563 = vld [vmem:[#allocation3 + $0xe70] sm:$0xff]
    %v564 = vld [vmem:[#allocation3 + $0xe78] sm:$0xff]
    %v565 = vld [vmem:[#allocation3 + $0xe80] sm:$0xff]
    %v566 = vld [vmem:[#allocation3 + $0xe88] sm:$0xff]
    %v567 = vld [vmem:[#allocation3 + $0xe90] sm:$0xff]
    %v568 = vld [vmem:[#allocation3 + $0xe98] sm:$0xff]
    %v569 = vld [vmem:[#allocation3 + $0xea0] sm:$0xff]
    %v570 = vld [vmem:[#allocation3 + $0xea8] sm:$0xff]
    %v571 = vld [vmem:[#allocation3 + $0xeb0] sm:$0xff]
    %v572 = vld [vmem:[#allocation3 + $0xeb8] sm:$0xff]
    %v573 = vld [vmem:[#allocation3 + $0xec0] sm:$0xff]
    %v574 = vld [vmem:[#allocation3 + $0xec8] sm:$0xff]
    %v575 = vld [vmem:[#allocation3 + $0xed0] sm:$0xff]
    %v576 = vld [vmem:[#allocation3 + $0xed8] sm:$0xff]
    %v577 = vld [vmem:[#allocation3 + $0xee0] sm:$0xff]
    %v578 = vld [vmem:[#allocation3 + $0xee8] sm:$0xff]
    %v579 = vld [vmem:[#allocation3 + $0xef0] sm:$0xff]
    %v580 = vld [vmem:[#allocation3 + $0xef8] sm:$0xff]
    %v581 = vld [vmem:[#allocation3 + $0xf00] sm:$0xff]
    %v582 = vld [vmem:[#allocation3 + $0xf08] sm:$0xff]
    %v583 = vld [vmem:[#allocation3 + $0xf10] sm:$0xff]
    %v584 = vld [vmem:[#allocation3 + $0xf18] sm:$0xff]
    %v585 = vld [vmem:[#allocation3 + $0xf20] sm:$0xff]
    %v586 = vld [vmem:[#allocation3 + $0xf28] sm:$0xff]
    %v587 = vld [vmem:[#allocation3 + $0xf30] sm:$0xff]
    %v588 = vld [vmem:[#allocation3 + $0xf38] sm:$0xff]
    %v589 = vld [vmem:[#allocation3 + $0xf40] sm:$0xff]
    %v590 = vld [vmem:[#allocation3 + $0xf48] sm:$0xff]
    %v591 = vld [vmem:[#allocation3 + $0xf50] sm:$0xff]
    %v592 = vld [vmem:[#allocation3 + $0xf58] sm:$0xff]
    %v593 = vld [vmem:[#allocation3 + $0xf60] sm:$0xff]
    %v594 = vld [vmem:[#allocation3 + $0xf68] sm:$0xff]
    %v595 = vld [vmem:[#allocation3 + $0xf70] sm:$0xff]
    %v596 = vld [vmem:[#allocation3 + $0xf78] sm:$0xff]
    %v597 = vld [vmem:[#allocation3 + $0xf80] sm:$0xff]
    %v598 = vld [vmem:[#allocation3 + $0xf88] sm:$0xff]
    %v599 = vld [vmem:[#allocation3 + $0xf90] sm:$0xff]
    %v600 = vld [vmem:[#allocation3 + $0xf98] sm:$0xff]
    %v601 = vld [vmem:[#allocation3 + $0xfa0] sm:$0xff]
    %v602 = vld [vmem:[#allocation3 + $0xfa8] sm:$0xff]
    %v603 = vld [vmem:[#allocation3 + $0xfb0] sm:$0xff]
    %v604 = vld [vmem:[#allocation3 + $0xfb8] sm:$0xff]
    %v605 = vld [vmem:[#allocation3 + $0xfc0] sm:$0xff]
    %v606 = vld [vmem:[#allocation3 + $0xfc8] sm:$0xff]
    %v607 = vld [vmem:[#allocation3 + $0xfd0] sm:$0xff]
    %v608 = vld [vmem:[#allocation3 + $0xfd8] sm:$0xff]
    %v609 = vld [vmem:[#allocation3 + $0xfe0] sm:$0xff]
    %v610 = vld [vmem:[#allocation3 + $0xfe8] sm:$0xff]
    %v611 = vld [vmem:[#allocation3 + $0xff0] sm:$0xff]
    %v612 = vld [vmem:[#allocation3 + $0xff8] sm:$0xff]
    %v1125 = vunpack.c.l.b16 %v101
    %v1126 = vunpack.c.h.b16 %v101
    %v1127 = vunpack.c.l.b16 %v102
    %v1128 = vunpack.c.h.b16 %v102
    %v1129 = vunpack.c.l.b16 %v103
    %v1130 = vunpack.c.h.b16 %v103
    %v1131 = vunpack.c.l.b16 %v104
    %v1132 = vunpack.c.h.b16 %v104
    %v1133 = vunpack.c.l.b16 %v105
    %v1134 = vunpack.c.h.b16 %v105
    %v1135 = vunpack.c.l.b16 %v106
    %v1136 = vunpack.c.h.b16 %v106
    %v1137 = vunpack.c.l.b16 %v107
    %v1138 = vunpack.c.h.b16 %v107
    %v1139 = vunpack.c.l.b16 %v108
    %v1140 = vunpack.c.h.b16 %v108
    %v1141 = vunpack.c.l.b16 %v109
    %v1142 = vunpack.c.h.b16 %v109
    %v1143 = vunpack.c.l.b16 %v110
    %v1144 = vunpack.c.h.b16 %v110
    %v1145 = vunpack.c.l.b16 %v111
    %v1146 = vunpack.c.h.b16 %v111
    %v1147 = vunpack.c.l.b16 %v112
    %v1148 = vunpack.c.h.b16 %v112
    %v1149 = vunpack.c.l.b16 %v113
    %v1150 = vunpack.c.h.b16 %v113
    %v1151 = vunpack.c.l.b16 %v114
    %v1152 = vunpack.c.h.b16 %v114
    %v1153 = vunpack.c.l.b16 %v115
    %v1154 = vunpack.c.h.b16 %v115
    %v1155 = vunpack.c.l.b16 %v116
    %v1156 = vunpack.c.h.b16 %v116
    %v1157 = vunpack.c.l.b16 %v117
    %v1158 = vunpack.c.h.b16 %v117
    %v1159 = vunpack.c.l.b16 %v118
    %v1160 = vunpack.c.h.b16 %v118
    %v1161 = vunpack.c.l.b16 %v119
    %v1162 = vunpack.c.h.b16 %v119
    %v1163 = vunpack.c.l.b16 %v120
    %v1164 = vunpack.c.h.b16 %v120
    %v1165 = vunpack.c.l.b16 %v121
    %v1166 = vunpack.c.h.b16 %v121
    %v1167 = vunpack.c.l.b16 %v122
    %v1168 = vunpack.c.h.b16 %v122
    %v1169 = vunpack.c.l.b16 %v123
    %v1170 = vunpack.c.h.b16 %v123
    %v1171 = vunpack.c.l.b16 %v124
    %v1172 = vunpack.c.h.b16 %v124
    %v1173 = vunpack.c.l.b16 %v125
    %v1174 = vunpack.c.h.b16 %v125
    %v1175 = vunpack.c.l.b16 %v126
    %v1176 = vunpack.c.h.b16 %v126
    %v1177 = vunpack.c.l.b16 %v127
    %v1178 = vunpack.c.h.b16 %v127
    %v1179 = vunpack.c.l.b16 %v128
    %v1180 = vunpack.c.h.b16 %v128
    %v1181 = vunpack.c.l.b16 %v129
    %v1182 = vunpack.c.h.b16 %v129
    %v1183 = vunpack.c.l.b16 %v130
    %v1184 = vunpack.c.h.b16 %v130
    %v1185 = vunpack.c.l.b16 %v131
    %v1186 = vunpack.c.h.b16 %v131
    %v1187 = vunpack.c.l.b16 %v132
    %v1188 = vunpack.c.h.b16 %v132
    %v1189 = vunpack.c.l.b16 %v133
    %v1190 = vunpack.c.h.b16 %v133
    %v1191 = vunpack.c.l.b16 %v134
    %v1192 = vunpack.c.h.b16 %v134
    %v1193 = vunpack.c.l.b16 %v135
    %v1194 = vunpack.c.h.b16 %v135
    %v1195 = vunpack.c.l.b16 %v136
    %v1196 = vunpack.c.h.b16 %v136
    %v1197 = vunpack.c.l.b16 %v137
    %v1198 = vunpack.c.h.b16 %v137
    %v1199 = vunpack.c.l.b16 %v138
    %v1200 = vunpack.c.h.b16 %v138
    %v1201 = vunpack.c.l.b16 %v139
    %v1202 = vunpack.c.h.b16 %v139
    %v1203 = vunpack.c.l.b16 %v140
    %v1204 = vunpack.c.h.b16 %v140
    %v1205 = vunpack.c.l.b16 %v141
    %v1206 = vunpack.c.h.b16 %v141
    %v1207 = vunpack.c.l.b16 %v142
    %v1208 = vunpack.c.h.b16 %v142
    %v1209 = vunpack.c.l.b16 %v143
    %v1210 = vunpack.c.h.b16 %v143
    %v1211 = vunpack.c.l.b16 %v144
    %v1212 = vunpack.c.h.b16 %v144
    %v1213 = vunpack.c.l.b16 %v145
    %v1214 = vunpack.c.h.b16 %v145
    %v1215 = vunpack.c.l.b16 %v146
    %v1216 = vunpack.c.h.b16 %v146
    %v1217 = vunpack.c.l.b16 %v147
    %v1218 = vunpack.c.h.b16 %v147
    %v1219 = vunpack.c.l.b16 %v148
    %v1220 = vunpack.c.h.b16 %v148
    %v1221 = vunpack.c.l.b16 %v149
    %v1222 = vunpack.c.h.b16 %v149
    %v1223 = vunpack.c.l.b16 %v150
    %v1224 = vunpack.c.h.b16 %v150
    %v1225 = vunpack.c.l.b16 %v151
    %v1226 = vunpack.c.h.b16 %v151
    %v1227 = vunpack.c.l.b16 %v152
    %v1228 = vunpack.c.h.b16 %v152
    %v1229 = vunpack.c.l.b16 %v153
    %v1230 = vunpack.c.h.b16 %v153
    %v1231 = vunpack.c.l.b16 %v154
    %v1232 = vunpack.c.h.b16 %v154
    %v1233 = vunpack.c.l.b16 %v155
    %v1234 = vunpack.c.h.b16 %v155
    %v1235 = vunpack.c.l.b16 %v156
    %v1236 = vunpack.c.h.b16 %v156
    %v1237 = vunpack.c.l.b16 %v157
    %v1238 = vunpack.c.h.b16 %v157
    %v1239 = vunpack.c.l.b16 %v158
    %v1240 = vunpack.c.h.b16 %v158
    %v1241 = vunpack.c.l.b16 %v159
    %v1242 = vunpack.c.h.b16 %v159
    %v1243 = vunpack.c.l.b16 %v160
    %v1244 = vunpack.c.h.b16 %v160
    %v1245 = vunpack.c.l.b16 %v161
    %v1246 = vunpack.c.h.b16 %v161
    %v1247 = vunpack.c.l.b16 %v162
    %v1248 = vunpack.c.h.b16 %v162
    %v1249 = vunpack.c.l.b16 %v163
    %v1250 = vunpack.c.h.b16 %v163
    %v1251 = vunpack.c.l.b16 %v164
    %v1252 = vunpack.c.h.b16 %v164
    %v1253 = vunpack.c.l.b16 %v165
    %v1254 = vunpack.c.h.b16 %v165
    %v1255 = vunpack.c.l.b16 %v166
    %v1256 = vunpack.c.h.b16 %v166
    %v1257 = vunpack.c.l.b16 %v167
    %v1258 = vunpack.c.h.b16 %v167
    %v1259 = vunpack.c.l.b16 %v168
    %v1260 = vunpack.c.h.b16 %v168
    %v1261 = vunpack.c.l.b16 %v169
    %v1262 = vunpack.c.h.b16 %v169
    %v1263 = vunpack.c.l.b16 %v170
    %v1264 = vunpack.c.h.b16 %v170
    %v1265 = vunpack.c.l.b16 %v171
    %v1266 = vunpack.c.h.b16 %v171
    %v1267 = vunpack.c.l.b16 %v172
    %v1268 = vunpack.c.h.b16 %v172
    %v1269 = vunpack.c.l.b16 %v173
    %v1270 = vunpack.c.h.b16 %v173
    %v1271 = vunpack.c.l.b16 %v174
    %v1272 = vunpack.c.h.b16 %v174
    %v1273 = vunpack.c.l.b16 %v175
    %v1274 = vunpack.c.h.b16 %v175
    %v1275 = vunpack.c.l.b16 %v176
    %v1276 = vunpack.c.h.b16 %v176
    %v1277 = vunpack.c.l.b16 %v177
    %v1278 = vunpack.c.h.b16 %v177
    %v1279 = vunpack.c.l.b16 %v178
    %v1280 = vunpack.c.h.b16 %v178
    %v1281 = vunpack.c.l.b16 %v179
    %v1282 = vunpack.c.h.b16 %v179
    %v1283 = vunpack.c.l.b16 %v180
    %v1284 = vunpack.c.h.b16 %v180
    %v1285 = vunpack.c.l.b16 %v181
    %v1286 = vunpack.c.h.b16 %v181
    %v1287 = vunpack.c.l.b16 %v182
    %v1288 = vunpack.c.h.b16 %v182
    %v1289 = vunpack.c.l.b16 %v183
    %v1290 = vunpack.c.h.b16 %v183
    %v1291 = vunpack.c.l.b16 %v184
    %v1292 = vunpack.c.h.b16 %v184
    %v1293 = vunpack.c.l.b16 %v185
    %v1294 = vunpack.c.h.b16 %v185
    %v1295 = vunpack.c.l.b16 %v186
    %v1296 = vunpack.c.h.b16 %v186
    %v1297 = vunpack.c.l.b16 %v187
    %v1298 = vunpack.c.h.b16 %v187
    %v1299 = vunpack.c.l.b16 %v188
    %v1300 = vunpack.c.h.b16 %v188
    %v1301 = vunpack.c.l.b16 %v189
    %v1302 = vunpack.c.h.b16 %v189
    %v1303 = vunpack.c.l.b16 %v190
    %v1304 = vunpack.c.h.b16 %v190
    %v1305 = vunpack.c.l.b16 %v191
    %v1306 = vunpack.c.h.b16 %v191
    %v1307 = vunpack.c.l.b16 %v192
    %v1308 = vunpack.c.h.b16 %v192
    %v1309 = vunpack.c.l.b16 %v193
    %v1310 = vunpack.c.h.b16 %v193
    %v1311 = vunpack.c.l.b16 %v194
    %v1312 = vunpack.c.h.b16 %v194
    %v1313 = vunpack.c.l.b16 %v195
    %v1314 = vunpack.c.h.b16 %v195
    %v1315 = vunpack.c.l.b16 %v196
    %v1316 = vunpack.c.h.b16 %v196
    %v1317 = vunpack.c.l.b16 %v197
    %v1318 = vunpack.c.h.b16 %v197
    %v1319 = vunpack.c.l.b16 %v198
    %v1320 = vunpack.c.h.b16 %v198
    %v1321 = vunpack.c.l.b16 %v199
    %v1322 = vunpack.c.h.b16 %v199
    %v1323 = vunpack.c.l.b16 %v200
    %v1324 = vunpack.c.h.b16 %v200
    %v1325 = vunpack.c.l.b16 %v201
    %v1326 = vunpack.c.h.b16 %v201
    %v1327 = vunpack.c.l.b16 %v202
    %v1328 = vunpack.c.h.b16 %v202
    %v1329 = vunpack.c.l.b16 %v203
    %v1330 = vunpack.c.h.b16 %v203
    %v1331 = vunpack.c.l.b16 %v204
    %v1332 = vunpack.c.h.b16 %v204
    %v1333 = vunpack.c.l.b16 %v205
    %v1334 = vunpack.c.h.b16 %v205
    %v1335 = vunpack.c.l.b16 %v206
    %v1336 = vunpack.c.h.b16 %v206
    %v1337 = vunpack.c.l.b16 %v207
    %v1338 = vunpack.c.h.b16 %v207
    %v1339 = vunpack.c.l.b16 %v208
    %v1340 = vunpack.c.h.b16 %v208
    %v1341 = vunpack.c.l.b16 %v209
    %v1342 = vunpack.c.h.b16 %v209
    %v1343 = vunpack.c.l.b16 %v210
    %v1344 = vunpack.c.h.b16 %v210
    %v1345 = vunpack.c.l.b16 %v211
    %v1346 = vunpack.c.h.b16 %v211
    %v1347 = vunpack.c.l.b16 %v212
    %v1348 = vunpack.c.h.b16 %v212
    %v1349 = vunpack.c.l.b16 %v213
    %v1350 = vunpack.c.h.b16 %v213
    %v1351 = vunpack.c.l.b16 %v214
    %v1352 = vunpack.c.h.b16 %v214
    %v1353 = vunpack.c.l.b16 %v215
    %v1354 = vunpack.c.h.b16 %v215
    %v1355 = vunpack.c.l.b16 %v216
    %v1356 = vunpack.c.h.b16 %v216
    %v1357 = vunpack.c.l.b16 %v217
    %v1358 = vunpack.c.h.b16 %v217
    %v1359 = vunpack.c.l.b16 %v218
    %v1360 = vunpack.c.h.b16 %v218
    %v1361 = vunpack.c.l.b16 %v219
    %v1362 = vunpack.c.h.b16 %v219
    %v1363 = vunpack.c.l.b16 %v220
    %v1364 = vunpack.c.h.b16 %v220
    %v1365 = vunpack.c.l.b16 %v221
    %v1366 = vunpack.c.h.b16 %v221
    %v1367 = vunpack.c.l.b16 %v222
    %v1368 = vunpack.c.h.b16 %v222
    %v1369 = vunpack.c.l.b16 %v223
    %v1370 = vunpack.c.h.b16 %v223
    %v1371 = vunpack.c.l.b16 %v224
    %v1372 = vunpack.c.h.b16 %v224
    %v1373 = vunpack.c.l.b16 %v225
    %v1374 = vunpack.c.h.b16 %v225
    %v1375 = vunpack.c.l.b16 %v226
    %v1376 = vunpack.c.h.b16 %v226
    %v1377 = vunpack.c.l.b16 %v227
    %v1378 = vunpack.c.h.b16 %v227
    %v1379 = vunpack.c.l.b16 %v228
    %v1380 = vunpack.c.h.b16 %v228
    %v1381 = vunpack.c.l.b16 %v229
    %v1382 = vunpack.c.h.b16 %v229
    %v1383 = vunpack.c.l.b16 %v230
    %v1384 = vunpack.c.h.b16 %v230
    %v1385 = vunpack.c.l.b16 %v231
    %v1386 = vunpack.c.h.b16 %v231
    %v1387 = vunpack.c.l.b16 %v232
    %v1388 = vunpack.c.h.b16 %v232
    %v1389 = vunpack.c.l.b16 %v233
    %v1390 = vunpack.c.h.b16 %v233
    %v1391 = vunpack.c.l.b16 %v234
    %v1392 = vunpack.c.h.b16 %v234
    %v1393 = vunpack.c.l.b16 %v235
    %v1394 = vunpack.c.h.b16 %v235
    %v1395 = vunpack.c.l.b16 %v236
    %v1396 = vunpack.c.h.b16 %v236
    %v1397 = vunpack.c.l.b16 %v237
    %v1398 = vunpack.c.h.b16 %v237
    %v1399 = vunpack.c.l.b16 %v238
    %v1400 = vunpack.c.h.b16 %v238
    %v1401 = vunpack.c.l.b16 %v239
    %v1402 = vunpack.c.h.b16 %v239
    %v1403 = vunpack.c.l.b16 %v240
    %v1404 = vunpack.c.h.b16 %v240
    %v1405 = vunpack.c.l.b16 %v241
    %v1406 = vunpack.c.h.b16 %v241
    %v1407 = vunpack.c.l.b16 %v242
    %v1408 = vunpack.c.h.b16 %v242
    %v1409 = vunpack.c.l.b16 %v243
    %v1410 = vunpack.c.h.b16 %v243
    %v1411 = vunpack.c.l.b16 %v244
    %v1412 = vunpack.c.h.b16 %v244
    %v1413 = vunpack.c.l.b16 %v245
    %v1414 = vunpack.c.h.b16 %v245
    %v1415 = vunpack.c.l.b16 %v246
    %v1416 = vunpack.c.h.b16 %v246
    %v1417 = vunpack.c.l.b16 %v247
    %v1418 = vunpack.c.h.b16 %v247
    %v1419 = vunpack.c.l.b16 %v248
    %v1420 = vunpack.c.h.b16 %v248
    %v1421 = vunpack.c.l.b16 %v249
    %v1422 = vunpack.c.h.b16 %v249
    %v1423 = vunpack.c.l.b16 %v250
    %v1424 = vunpack.c.h.b16 %v250
    %v1425 = vunpack.c.l.b16 %v251
    %v1426 = vunpack.c.h.b16 %v251
    %v1427 = vunpack.c.l.b16 %v252
    %v1428 = vunpack.c.h.b16 %v252
    %v1429 = vunpack.c.l.b16 %v253
    %v1430 = vunpack.c.h.b16 %v253
    %v1431 = vunpack.c.l.b16 %v254
    %v1432 = vunpack.c.h.b16 %v254
    %v1433 = vunpack.c.l.b16 %v255
    %v1434 = vunpack.c.h.b16 %v255
    %v1435 = vunpack.c.l.b16 %v256
    %v1436 = vunpack.c.h.b16 %v256
    %v1437 = vunpack.c.l.b16 %v257
    %v1438 = vunpack.c.h.b16 %v257
    %v1439 = vunpack.c.l.b16 %v258
    %v1440 = vunpack.c.h.b16 %v258
    %v1441 = vunpack.c.l.b16 %v259
    %v1442 = vunpack.c.h.b16 %v259
    %v1443 = vunpack.c.l.b16 %v260
    %v1444 = vunpack.c.h.b16 %v260
    %v1445 = vunpack.c.l.b16 %v261
    %v1446 = vunpack.c.h.b16 %v261
    %v1447 = vunpack.c.l.b16 %v262
    %v1448 = vunpack.c.h.b16 %v262
    %v1449 = vunpack.c.l.b16 %v263
    %v1450 = vunpack.c.h.b16 %v263
    %v1451 = vunpack.c.l.b16 %v264
    %v1452 = vunpack.c.h.b16 %v264
    %v1453 = vunpack.c.l.b16 %v265
    %v1454 = vunpack.c.h.b16 %v265
    %v1455 = vunpack.c.l.b16 %v266
    %v1456 = vunpack.c.h.b16 %v266
    %v1457 = vunpack.c.l.b16 %v267
    %v1458 = vunpack.c.h.b16 %v267
    %v1459 = vunpack.c.l.b16 %v268
    %v1460 = vunpack.c.h.b16 %v268
    %v1461 = vunpack.c.l.b16 %v269
    %v1462 = vunpack.c.h.b16 %v269
    %v1463 = vunpack.c.l.b16 %v270
    %v1464 = vunpack.c.h.b16 %v270
    %v1465 = vunpack.c.l.b16 %v271
    %v1466 = vunpack.c.h.b16 %v271
    %v1467 = vunpack.c.l.b16 %v272
    %v1468 = vunpack.c.h.b16 %v272
    %v1469 = vunpack.c.l.b16 %v273
    %v1470 = vunpack.c.h.b16 %v273
    %v1471 = vunpack.c.l.b16 %v274
    %v1472 = vunpack.c.h.b16 %v274
    %v1473 = vunpack.c.l.b16 %v275
    %v1474 = vunpack.c.h.b16 %v275
    %v1475 = vunpack.c.l.b16 %v276
    %v1476 = vunpack.c.h.b16 %v276
    %v1477 = vunpack.c.l.b16 %v277
    %v1478 = vunpack.c.h.b16 %v277
    %v1479 = vunpack.c.l.b16 %v278
    %v1480 = vunpack.c.h.b16 %v278
    %v1481 = vunpack.c.l.b16 %v279
    %v1482 = vunpack.c.h.b16 %v279
    %v1483 = vunpack.c.l.b16 %v280
    %v1484 = vunpack.c.h.b16 %v280
    %v1485 = vunpack.c.l.b16 %v281
    %v1486 = vunpack.c.h.b16 %v281
    %v1487 = vunpack.c.l.b16 %v282
    %v1488 = vunpack.c.h.b16 %v282
    %v1489 = vunpack.c.l.b16 %v283
    %v1490 = vunpack.c.h.b16 %v283
    %v1491 = vunpack.c.l.b16 %v284
    %v1492 = vunpack.c.h.b16 %v284
    %v1493 = vunpack.c.l.b16 %v285
    %v1494 = vunpack.c.h.b16 %v285
    %v1495 = vunpack.c.l.b16 %v286
    %v1496 = vunpack.c.h.b16 %v286
    %v1497 = vunpack.c.l.b16 %v287
    %v1498 = vunpack.c.h.b16 %v287
    %v1499 = vunpack.c.l.b16 %v288
    %v1500 = vunpack.c.h.b16 %v288
    %v1501 = vunpack.c.l.b16 %v289
    %v1502 = vunpack.c.h.b16 %v289
    %v1503 = vunpack.c.l.b16 %v290
    %v1504 = vunpack.c.h.b16 %v290
    %v1505 = vunpack.c.l.b16 %v291
    %v1506 = vunpack.c.h.b16 %v291
    %v1507 = vunpack.c.l.b16 %v292
    %v1508 = vunpack.c.h.b16 %v292
    %v1509 = vunpack.c.l.b16 %v293
    %v1510 = vunpack.c.h.b16 %v293
    %v1511 = vunpack.c.l.b16 %v294
    %v1512 = vunpack.c.h.b16 %v294
    %v1513 = vunpack.c.l.b16 %v295
    %v1514 = vunpack.c.h.b16 %v295
    %v1515 = vunpack.c.l.b16 %v296
    %v1516 = vunpack.c.h.b16 %v296
    %v1517 = vunpack.c.l.b16 %v297
    %v1518 = vunpack.c.h.b16 %v297
    %v1519 = vunpack.c.l.b16 %v298
    %v1520 = vunpack.c.h.b16 %v298
    %v1521 = vunpack.c.l.b16 %v299
    %v1522 = vunpack.c.h.b16 %v299
    %v1523 = vunpack.c.l.b16 %v300
    %v1524 = vunpack.c.h.b16 %v300
    %v1525 = vunpack.c.l.b16 %v301
    %v1526 = vunpack.c.h.b16 %v301
    %v1527 = vunpack.c.l.b16 %v302
    %v1528 = vunpack.c.h.b16 %v302
    %v1529 = vunpack.c.l.b16 %v303
    %v1530 = vunpack.c.h.b16 %v303
    %v1531 = vunpack.c.l.b16 %v304
    %v1532 = vunpack.c.h.b16 %v304
    %v1533 = vunpack.c.l.b16 %v305
    %v1534 = vunpack.c.h.b16 %v305
    %v1535 = vunpack.c.l.b16 %v306
    %v1536 = vunpack.c.h.b16 %v306
    %v1537 = vunpack.c.l.b16 %v307
    %v1538 = vunpack.c.h.b16 %v307
    %v1539 = vunpack.c.l.b16 %v308
    %v1540 = vunpack.c.h.b16 %v308
    %v1541 = vunpack.c.l.b16 %v309
    %v1542 = vunpack.c.h.b16 %v309
    %v1543 = vunpack.c.l.b16 %v310
    %v1544 = vunpack.c.h.b16 %v310
    %v1545 = vunpack.c.l.b16 %v311
    %v1546 = vunpack.c.h.b16 %v311
    %v1547 = vunpack.c.l.b16 %v312
    %v1548 = vunpack.c.h.b16 %v312
    %v1549 = vunpack.c.l.b16 %v313
    %v1550 = vunpack.c.h.b16 %v313
    %v1551 = vunpack.c.l.b16 %v314
    %v1552 = vunpack.c.h.b16 %v314
    %v1553 = vunpack.c.l.b16 %v315
    %v1554 = vunpack.c.h.b16 %v315
    %v1555 = vunpack.c.l.b16 %v316
    %v1556 = vunpack.c.h.b16 %v316
    %v1557 = vunpack.c.l.b16 %v317
    %v1558 = vunpack.c.h.b16 %v317
    %v1559 = vunpack.c.l.b16 %v318
    %v1560 = vunpack.c.h.b16 %v318
    %v1561 = vunpack.c.l.b16 %v319
    %v1562 = vunpack.c.h.b16 %v319
    %v1563 = vunpack.c.l.b16 %v320
    %v1564 = vunpack.c.h.b16 %v320
    %v1565 = vunpack.c.l.b16 %v321
    %v1566 = vunpack.c.h.b16 %v321
    %v1567 = vunpack.c.l.b16 %v322
    %v1568 = vunpack.c.h.b16 %v322
    %v1569 = vunpack.c.l.b16 %v323
    %v1570 = vunpack.c.h.b16 %v323
    %v1571 = vunpack.c.l.b16 %v324
    %v1572 = vunpack.c.h.b16 %v324
    %v1573 = vunpack.c.l.b16 %v325
    %v1574 = vunpack.c.h.b16 %v325
    %v1575 = vunpack.c.l.b16 %v326
    %v1576 = vunpack.c.h.b16 %v326
    %v1577 = vunpack.c.l.b16 %v327
    %v1578 = vunpack.c.h.b16 %v327
    %v1579 = vunpack.c.l.b16 %v328
    %v1580 = vunpack.c.h.b16 %v328
    %v1581 = vunpack.c.l.b16 %v329
    %v1582 = vunpack.c.h.b16 %v329
    %v1583 = vunpack.c.l.b16 %v330
    %v1584 = vunpack.c.h.b16 %v330
    %v1585 = vunpack.c.l.b16 %v331
    %v1586 = vunpack.c.h.b16 %v331
    %v1587 = vunpack.c.l.b16 %v332
    %v1588 = vunpack.c.h.b16 %v332
    %v1589 = vunpack.c.l.b16 %v333
    %v1590 = vunpack.c.h.b16 %v333
    %v1591 = vunpack.c.l.b16 %v334
    %v1592 = vunpack.c.h.b16 %v334
    %v1593 = vunpack.c.l.b16 %v335
    %v1594 = vunpack.c.h.b16 %v335
    %v1595 = vunpack.c.l.b16 %v336
    %v1596 = vunpack.c.h.b16 %v336
    %v1597 = vunpack.c.l.b16 %v337
    %v1598 = vunpack.c.h.b16 %v337
    %v1599 = vunpack.c.l.b16 %v338
    %v1600 = vunpack.c.h.b16 %v338
    %v1601 = vunpack.c.l.b16 %v339
    %v1602 = vunpack.c.h.b16 %v339
    %v1603 = vunpack.c.l.b16 %v340
    %v1604 = vunpack.c.h.b16 %v340
    %v1605 = vunpack.c.l.b16 %v341
    %v1606 = vunpack.c.h.b16 %v341
    %v1607 = vunpack.c.l.b16 %v342
    %v1608 = vunpack.c.h.b16 %v342
    %v1609 = vunpack.c.l.b16 %v343
    %v1610 = vunpack.c.h.b16 %v343
    %v1611 = vunpack.c.l.b16 %v344
    %v1612 = vunpack.c.h.b16 %v344
    %v1613 = vunpack.c.l.b16 %v345
    %v1614 = vunpack.c.h.b16 %v345
    %v1615 = vunpack.c.l.b16 %v346
    %v1616 = vunpack.c.h.b16 %v346
    %v1617 = vunpack.c.l.b16 %v347
    %v1618 = vunpack.c.h.b16 %v347
    %v1619 = vunpack.c.l.b16 %v348
    %v1620 = vunpack.c.h.b16 %v348
    %v1621 = vunpack.c.l.b16 %v349
    %v1622 = vunpack.c.h.b16 %v349
    %v1623 = vunpack.c.l.b16 %v350
    %v1624 = vunpack.c.h.b16 %v350
    %v1625 = vunpack.c.l.b16 %v351
    %v1626 = vunpack.c.h.b16 %v351
    %v1627 = vunpack.c.l.b16 %v352
    %v1628 = vunpack.c.h.b16 %v352
    %v1629 = vunpack.c.l.b16 %v353
    %v1630 = vunpack.c.h.b16 %v353
    %v1631 = vunpack.c.l.b16 %v354
    %v1632 = vunpack.c.h.b16 %v354
    %v1633 = vunpack.c.l.b16 %v355
    %v1634 = vunpack.c.h.b16 %v355
    %v1635 = vunpack.c.l.b16 %v356
    %v1636 = vunpack.c.h.b16 %v356
    %v1637 = vunpack.c.l.b16 %v357
    %v1638 = vunpack.c.h.b16 %v357
    %v1639 = vunpack.c.l.b16 %v358
    %v1640 = vunpack.c.h.b16 %v358
    %v1641 = vunpack.c.l.b16 %v359
    %v1642 = vunpack.c.h.b16 %v359
    %v1643 = vunpack.c.l.b16 %v360
    %v1644 = vunpack.c.h.b16 %v360
    %v1645 = vunpack.c.l.b16 %v361
    %v1646 = vunpack.c.h.b16 %v361
    %v1647 = vunpack.c.l.b16 %v362
    %v1648 = vunpack.c.h.b16 %v362
    %v1649 = vunpack.c.l.b16 %v363
    %v1650 = vunpack.c.h.b16 %v363
    %v1651 = vunpack.c.l.b16 %v364
    %v1652 = vunpack.c.h.b16 %v364
    %v1653 = vunpack.c.l.b16 %v365
    %v1654 = vunpack.c.h.b16 %v365
    %v1655 = vunpack.c.l.b16 %v366
    %v1656 = vunpack.c.h.b16 %v366
    %v1657 = vunpack.c.l.b16 %v367
    %v1658 = vunpack.c.h.b16 %v367
    %v1659 = vunpack.c.l.b16 %v368
    %v1660 = vunpack.c.h.b16 %v368
    %v1661 = vunpack.c.l.b16 %v369
    %v1662 = vunpack.c.h.b16 %v369
    %v1663 = vunpack.c.l.b16 %v370
    %v1664 = vunpack.c.h.b16 %v370
    %v1665 = vunpack.c.l.b16 %v371
    %v1666 = vunpack.c.h.b16 %v371
    %v1667 = vunpack.c.l.b16 %v372
    %v1668 = vunpack.c.h.b16 %v372
    %v1669 = vunpack.c.l.b16 %v373
    %v1670 = vunpack.c.h.b16 %v373
    %v1671 = vunpack.c.l.b16 %v374
    %v1672 = vunpack.c.h.b16 %v374
    %v1673 = vunpack.c.l.b16 %v375
    %v1674 = vunpack.c.h.b16 %v375
    %v1675 = vunpack.c.l.b16 %v376
    %v1676 = vunpack.c.h.b16 %v376
    %v1677 = vunpack.c.l.b16 %v377
    %v1678 = vunpack.c.h.b16 %v377
    %v1679 = vunpack.c.l.b16 %v378
    %v1680 = vunpack.c.h.b16 %v378
    %v1681 = vunpack.c.l.b16 %v379
    %v1682 = vunpack.c.h.b16 %v379
    %v1683 = vunpack.c.l.b16 %v380
    %v1684 = vunpack.c.h.b16 %v380
    %v1685 = vunpack.c.l.b16 %v381
    %v1686 = vunpack.c.h.b16 %v381
    %v1687 = vunpack.c.l.b16 %v382
    %v1688 = vunpack.c.h.b16 %v382
    %v1689 = vunpack.c.l.b16 %v383
    %v1690 = vunpack.c.h.b16 %v383
    %v1691 = vunpack.c.l.b16 %v384
    %v1692 = vunpack.c.h.b16 %v384
    %v1693 = vunpack.c.l.b16 %v385
    %v1694 = vunpack.c.h.b16 %v385
    %v1695 = vunpack.c.l.b16 %v386
    %v1696 = vunpack.c.h.b16 %v386
    %v1697 = vunpack.c.l.b16 %v387
    %v1698 = vunpack.c.h.b16 %v387
    %v1699 = vunpack.c.l.b16 %v388
    %v1700 = vunpack.c.h.b16 %v388
    %v1701 = vunpack.c.l.b16 %v389
    %v1702 = vunpack.c.h.b16 %v389
    %v1703 = vunpack.c.l.b16 %v390
    %v1704 = vunpack.c.h.b16 %v390
    %v1705 = vunpack.c.l.b16 %v391
    %v1706 = vunpack.c.h.b16 %v391
    %v1707 = vunpack.c.l.b16 %v392
    %v1708 = vunpack.c.h.b16 %v392
    %v1709 = vunpack.c.l.b16 %v393
    %v1710 = vunpack.c.h.b16 %v393
    %v1711 = vunpack.c.l.b16 %v394
    %v1712 = vunpack.c.h.b16 %v394
    %v1713 = vunpack.c.l.b16 %v395
    %v1714 = vunpack.c.h.b16 %v395
    %v1715 = vunpack.c.l.b16 %v396
    %v1716 = vunpack.c.h.b16 %v396
    %v1717 = vunpack.c.l.b16 %v397
    %v1718 = vunpack.c.h.b16 %v397
    %v1719 = vunpack.c.l.b16 %v398
    %v1720 = vunpack.c.h.b16 %v398
    %v1721 = vunpack.c.l.b16 %v399
    %v1722 = vunpack.c.h.b16 %v399
    %v1723 = vunpack.c.l.b16 %v400
    %v1724 = vunpack.c.h.b16 %v400
    %v1725 = vunpack.c.l.b16 %v401
    %v1726 = vunpack.c.h.b16 %v401
    %v1727 = vunpack.c.l.b16 %v402
    %v1728 = vunpack.c.h.b16 %v402
    %v1729 = vunpack.c.l.b16 %v403
    %v1730 = vunpack.c.h.b16 %v403
    %v1731 = vunpack.c.l.b16 %v404
    %v1732 = vunpack.c.h.b16 %v404
    %v1733 = vunpack.c.l.b16 %v405
    %v1734 = vunpack.c.h.b16 %v405
    %v1735 = vunpack.c.l.b16 %v406
    %v1736 = vunpack.c.h.b16 %v406
    %v1737 = vunpack.c.l.b16 %v407
    %v1738 = vunpack.c.h.b16 %v407
    %v1739 = vunpack.c.l.b16 %v408
    %v1740 = vunpack.c.h.b16 %v408
    %v1741 = vunpack.c.l.b16 %v409
    %v1742 = vunpack.c.h.b16 %v409
    %v1743 = vunpack.c.l.b16 %v410
    %v1744 = vunpack.c.h.b16 %v410
    %v1745 = vunpack.c.l.b16 %v411
    %v1746 = vunpack.c.h.b16 %v411
    %v1747 = vunpack.c.l.b16 %v412
    %v1748 = vunpack.c.h.b16 %v412
    %v1749 = vunpack.c.l.b16 %v413
    %v1750 = vunpack.c.h.b16 %v413
    %v1751 = vunpack.c.l.b16 %v414
    %v1752 = vunpack.c.h.b16 %v414
    %v1753 = vunpack.c.l.b16 %v415
    %v1754 = vunpack.c.h.b16 %v415
    %v1755 = vunpack.c.l.b16 %v416
    %v1756 = vunpack.c.h.b16 %v416
    %v1757 = vunpack.c.l.b16 %v417
    %v1758 = vunpack.c.h.b16 %v417
    %v1759 = vunpack.c.l.b16 %v418
    %v1760 = vunpack.c.h.b16 %v418
    %v1761 = vunpack.c.l.b16 %v419
    %v1762 = vunpack.c.h.b16 %v419
    %v1763 = vunpack.c.l.b16 %v420
    %v1764 = vunpack.c.h.b16 %v420
    %v1765 = vunpack.c.l.b16 %v421
    %v1766 = vunpack.c.h.b16 %v421
    %v1767 = vunpack.c.l.b16 %v422
    %v1768 = vunpack.c.h.b16 %v422
    %v1769 = vunpack.c.l.b16 %v423
    %v1770 = vunpack.c.h.b16 %v423
    %v1771 = vunpack.c.l.b16 %v424
    %v1772 = vunpack.c.h.b16 %v424
    %v1773 = vunpack.c.l.b16 %v425
    %v1774 = vunpack.c.h.b16 %v425
    %v1775 = vunpack.c.l.b16 %v426
    %v1776 = vunpack.c.h.b16 %v426
    %v1777 = vunpack.c.l.b16 %v427
    %v1778 = vunpack.c.h.b16 %v427
    %v1779 = vunpack.c.l.b16 %v428
    %v1780 = vunpack.c.h.b16 %v428
    %v1781 = vunpack.c.l.b16 %v429
    %v1782 = vunpack.c.h.b16 %v429
    %v1783 = vunpack.c.l.b16 %v430
    %v1784 = vunpack.c.h.b16 %v430
    %v1785 = vunpack.c.l.b16 %v431
    %v1786 = vunpack.c.h.b16 %v431
    %v1787 = vunpack.c.l.b16 %v432
    %v1788 = vunpack.c.h.b16 %v432
    %v1789 = vunpack.c.l.b16 %v433
    %v1790 = vunpack.c.h.b16 %v433
    %v1791 = vunpack.c.l.b16 %v434
    %v1792 = vunpack.c.h.b16 %v434
    %v1793 = vunpack.c.l.b16 %v435
    %v1794 = vunpack.c.h.b16 %v435
    %v1795 = vunpack.c.l.b16 %v436
    %v1796 = vunpack.c.h.b16 %v436
    %v1797 = vunpack.c.l.b16 %v437
    %v1798 = vunpack.c.h.b16 %v437
    %v1799 = vunpack.c.l.b16 %v438
    %v1800 = vunpack.c.h.b16 %v438
    %v1801 = vunpack.c.l.b16 %v439
    %v1802 = vunpack.c.h.b16 %v439
    %v1803 = vunpack.c.l.b16 %v440
    %v1804 = vunpack.c.h.b16 %v440
    %v1805 = vunpack.c.l.b16 %v441
    %v1806 = vunpack.c.h.b16 %v441
    %v1807 = vunpack.c.l.b16 %v442
    %v1808 = vunpack.c.h.b16 %v442
    %v1809 = vunpack.c.l.b16 %v443
    %v1810 = vunpack.c.h.b16 %v443
    %v1811 = vunpack.c.l.b16 %v444
    %v1812 = vunpack.c.h.b16 %v444
    %v1813 = vunpack.c.l.b16 %v445
    %v1814 = vunpack.c.h.b16 %v445
    %v1815 = vunpack.c.l.b16 %v446
    %v1816 = vunpack.c.h.b16 %v446
    %v1817 = vunpack.c.l.b16 %v447
    %v1818 = vunpack.c.h.b16 %v447
    %v1819 = vunpack.c.l.b16 %v448
    %v1820 = vunpack.c.h.b16 %v448
    %v1821 = vunpack.c.l.b16 %v449
    %v1822 = vunpack.c.h.b16 %v449
    %v1823 = vunpack.c.l.b16 %v450
    %v1824 = vunpack.c.h.b16 %v450
    %v1825 = vunpack.c.l.b16 %v451
    %v1826 = vunpack.c.h.b16 %v451
    %v1827 = vunpack.c.l.b16 %v452
    %v1828 = vunpack.c.h.b16 %v452
    %v1829 = vunpack.c.l.b16 %v453
    %v1830 = vunpack.c.h.b16 %v453
    %v1831 = vunpack.c.l.b16 %v454
    %v1832 = vunpack.c.h.b16 %v454
    %v1833 = vunpack.c.l.b16 %v455
    %v1834 = vunpack.c.h.b16 %v455
    %v1835 = vunpack.c.l.b16 %v456
    %v1836 = vunpack.c.h.b16 %v456
    %v1837 = vunpack.c.l.b16 %v457
    %v1838 = vunpack.c.h.b16 %v457
    %v1839 = vunpack.c.l.b16 %v458
    %v1840 = vunpack.c.h.b16 %v458
    %v1841 = vunpack.c.l.b16 %v459
    %v1842 = vunpack.c.h.b16 %v459
    %v1843 = vunpack.c.l.b16 %v460
    %v1844 = vunpack.c.h.b16 %v460
    %v1845 = vunpack.c.l.b16 %v461
    %v1846 = vunpack.c.h.b16 %v461
    %v1847 = vunpack.c.l.b16 %v462
    %v1848 = vunpack.c.h.b16 %v462
    %v1849 = vunpack.c.l.b16 %v463
    %v1850 = vunpack.c.h.b16 %v463
    %v1851 = vunpack.c.l.b16 %v464
    %v1852 = vunpack.c.h.b16 %v464
    %v1853 = vunpack.c.l.b16 %v465
    %v1854 = vunpack.c.h.b16 %v465
    %v1855 = vunpack.c.l.b16 %v466
    %v1856 = vunpack.c.h.b16 %v466
    %v1857 = vunpack.c.l.b16 %v467
    %v1858 = vunpack.c.h.b16 %v467
    %v1859 = vunpack.c.l.b16 %v468
    %v1860 = vunpack.c.h.b16 %v468
    %v1861 = vunpack.c.l.b16 %v469
    %v1862 = vunpack.c.h.b16 %v469
    %v1863 = vunpack.c.l.b16 %v470
    %v1864 = vunpack.c.h.b16 %v470
    %v1865 = vunpack.c.l.b16 %v471
    %v1866 = vunpack.c.h.b16 %v471
    %v1867 = vunpack.c.l.b16 %v472
    %v1868 = vunpack.c.h.b16 %v472
    %v1869 = vunpack.c.l.b16 %v473
    %v1870 = vunpack.c.h.b16 %v473
    %v1871 = vunpack.c.l.b16 %v474
    %v1872 = vunpack.c.h.b16 %v474
    %v1873 = vunpack.c.l.b16 %v475
    %v1874 = vunpack.c.h.b16 %v475
    %v1875 = vunpack.c.l.b16 %v476
    %v1876 = vunpack.c.h.b16 %v476
    %v1877 = vunpack.c.l.b16 %v477
    %v1878 = vunpack.c.h.b16 %v477
    %v1879 = vunpack.c.l.b16 %v478
    %v1880 = vunpack.c.h.b16 %v478
    %v1881 = vunpack.c.l.b16 %v479
    %v1882 = vunpack.c.h.b16 %v479
    %v1883 = vunpack.c.l.b16 %v480
    %v1884 = vunpack.c.h.b16 %v480
    %v1885 = vunpack.c.l.b16 %v481
    %v1886 = vunpack.c.h.b16 %v481
    %v1887 = vunpack.c.l.b16 %v482
    %v1888 = vunpack.c.h.b16 %v482
    %v1889 = vunpack.c.l.b16 %v483
    %v1890 = vunpack.c.h.b16 %v483
    %v1891 = vunpack.c.l.b16 %v484
    %v1892 = vunpack.c.h.b16 %v484
    %v1893 = vunpack.c.l.b16 %v485
    %v1894 = vunpack.c.h.b16 %v485
    %v1895 = vunpack.c.l.b16 %v486
    %v1896 = vunpack.c.h.b16 %v486
    %v1897 = vunpack.c.l.b16 %v487
    %v1898 = vunpack.c.h.b16 %v487
    %v1899 = vunpack.c.l.b16 %v488
    %v1900 = vunpack.c.h.b16 %v488
    %v1901 = vunpack.c.l.b16 %v489
    %v1902 = vunpack.c.h.b16 %v489
    %v1903 = vunpack.c.l.b16 %v490
    %v1904 = vunpack.c.h.b16 %v490
    %v1905 = vunpack.c.l.b16 %v491
    %v1906 = vunpack.c.h.b16 %v491
    %v1907 = vunpack.c.l.b16 %v492
    %v1908 = vunpack.c.h.b16 %v492
    %v1909 = vunpack.c.l.b16 %v493
    %v1910 = vunpack.c.h.b16 %v493
    %v1911 = vunpack.c.l.b16 %v494
    %v1912 = vunpack.c.h.b16 %v494
    %v1913 = vunpack.c.l.b16 %v495
    %v1914 = vunpack.c.h.b16 %v495
    %v1915 = vunpack.c.l.b16 %v496
    %v1916 = vunpack.c.h.b16 %v496
    %v1917 = vunpack.c.l.b16 %v497
    %v1918 = vunpack.c.h.b16 %v497
    %v1919 = vunpack.c.l.b16 %v498
    %v1920 = vunpack.c.h.b16 %v498
    %v1921 = vunpack.c.l.b16 %v499
    %v1922 = vunpack.c.h.b16 %v499
    %v1923 = vunpack.c.l.b16 %v500
    %v1924 = vunpack.c.h.b16 %v500
    %v1925 = vunpack.c.l.b16 %v501
    %v1926 = vunpack.c.h.b16 %v501
    %v1927 = vunpack.c.l.b16 %v502
    %v1928 = vunpack.c.h.b16 %v502
    %v1929 = vunpack.c.l.b16 %v503
    %v1930 = vunpack.c.h.b16 %v503
    %v1931 = vunpack.c.l.b16 %v504
    %v1932 = vunpack.c.h.b16 %v504
    %v1933 = vunpack.c.l.b16 %v505
    %v1934 = vunpack.c.h.b16 %v505
    %v1935 = vunpack.c.l.b16 %v506
    %v1936 = vunpack.c.h.b16 %v506
    %v1937 = vunpack.c.l.b16 %v507
    %v1938 = vunpack.c.h.b16 %v507
    %v1939 = vunpack.c.l.b16 %v508
    %v1940 = vunpack.c.h.b16 %v508
    %v1941 = vunpack.c.l.b16 %v509
    %v1942 = vunpack.c.h.b16 %v509
    %v1943 = vunpack.c.l.b16 %v510
    %v1944 = vunpack.c.h.b16 %v510
    %v1945 = vunpack.c.l.b16 %v511
    %v1946 = vunpack.c.h.b16 %v511
    %v1947 = vunpack.c.l.b16 %v512
    %v1948 = vunpack.c.h.b16 %v512
    %v1949 = vunpack.c.l.b16 %v513
    %v1950 = vunpack.c.h.b16 %v513
    %v1951 = vunpack.c.l.b16 %v514
    %v1952 = vunpack.c.h.b16 %v514
    %v1953 = vunpack.c.l.b16 %v515
    %v1954 = vunpack.c.h.b16 %v515
    %v1955 = vunpack.c.l.b16 %v516
    %v1956 = vunpack.c.h.b16 %v516
    %v1957 = vunpack.c.l.b16 %v517
    %v1958 = vunpack.c.h.b16 %v517
    %v1959 = vunpack.c.l.b16 %v518
    %v1960 = vunpack.c.h.b16 %v518
    %v1961 = vunpack.c.l.b16 %v519
    %v1962 = vunpack.c.h.b16 %v519
    %v1963 = vunpack.c.l.b16 %v520
    %v1964 = vunpack.c.h.b16 %v520
    %v1965 = vunpack.c.l.b16 %v521
    %v1966 = vunpack.c.h.b16 %v521
    %v1967 = vunpack.c.l.b16 %v522
    %v1968 = vunpack.c.h.b16 %v522
    %v1969 = vunpack.c.l.b16 %v523
    %v1970 = vunpack.c.h.b16 %v523
    %v1971 = vunpack.c.l.b16 %v524
    %v1972 = vunpack.c.h.b16 %v524
    %v1973 = vunpack.c.l.b16 %v525
    %v1974 = vunpack.c.h.b16 %v525
    %v1975 = vunpack.c.l.b16 %v526
    %v1976 = vunpack.c.h.b16 %v526
    %v1977 = vunpack.c.l.b16 %v527
    %v1978 = vunpack.c.h.b16 %v527
    %v1979 = vunpack.c.l.b16 %v528
    %v1980 = vunpack.c.h.b16 %v528
    %v1981 = vunpack.c.l.b16 %v529
    %v1982 = vunpack.c.h.b16 %v529
    %v1983 = vunpack.c.l.b16 %v530
    %v1984 = vunpack.c.h.b16 %v530
    %v1985 = vunpack.c.l.b16 %v531
    %v1986 = vunpack.c.h.b16 %v531
    %v1987 = vunpack.c.l.b16 %v532
    %v1988 = vunpack.c.h.b16 %v532
    %v1989 = vunpack.c.l.b16 %v533
    %v1990 = vunpack.c.h.b16 %v533
    %v1991 = vunpack.c.l.b16 %v534
    %v1992 = vunpack.c.h.b16 %v534
    %v1993 = vunpack.c.l.b16 %v535
    %v1994 = vunpack.c.h.b16 %v535
    %v1995 = vunpack.c.l.b16 %v536
    %v1996 = vunpack.c.h.b16 %v536
    %v1997 = vunpack.c.l.b16 %v537
    %v1998 = vunpack.c.h.b16 %v537
    %v1999 = vunpack.c.l.b16 %v538
    %v2000 = vunpack.c.h.b16 %v538
    %v2001 = vunpack.c.l.b16 %v539
    %v2002 = vunpack.c.h.b16 %v539
    %v2003 = vunpack.c.l.b16 %v540
    %v2004 = vunpack.c.h.b16 %v540
    %v2005 = vunpack.c.l.b16 %v541
    %v2006 = vunpack.c.h.b16 %v541
    %v2007 = vunpack.c.l.b16 %v542
    %v2008 = vunpack.c.h.b16 %v542
    %v2009 = vunpack.c.l.b16 %v543
    %v2010 = vunpack.c.h.b16 %v543
    %v2011 = vunpack.c.l.b16 %v544
    %v2012 = vunpack.c.h.b16 %v544
    %v2013 = vunpack.c.l.b16 %v545
    %v2014 = vunpack.c.h.b16 %v545
    %v2015 = vunpack.c.l.b16 %v546
    %v2016 = vunpack.c.h.b16 %v546
    %v2017 = vunpack.c.l.b16 %v547
    %v2018 = vunpack.c.h.b16 %v547
    %v2019 = vunpack.c.l.b16 %v548
    %v2020 = vunpack.c.h.b16 %v548
    %v2021 = vunpack.c.l.b16 %v549
    %v2022 = vunpack.c.h.b16 %v549
    %v2023 = vunpack.c.l.b16 %v550
    %v2024 = vunpack.c.h.b16 %v550
    %v2025 = vunpack.c.l.b16 %v551
    %v2026 = vunpack.c.h.b16 %v551
    %v2027 = vunpack.c.l.b16 %v552
    %v2028 = vunpack.c.h.b16 %v552
    %v2029 = vunpack.c.l.b16 %v553
    %v2030 = vunpack.c.h.b16 %v553
    %v2031 = vunpack.c.l.b16 %v554
    %v2032 = vunpack.c.h.b16 %v554
    %v2033 = vunpack.c.l.b16 %v555
    %v2034 = vunpack.c.h.b16 %v555
    %v2035 = vunpack.c.l.b16 %v556
    %v2036 = vunpack.c.h.b16 %v556
    %v2037 = vunpack.c.l.b16 %v557
    %v2038 = vunpack.c.h.b16 %v557
    %v2039 = vunpack.c.l.b16 %v558
    %v2040 = vunpack.c.h.b16 %v558
    %v2041 = vunpack.c.l.b16 %v559
    %v2042 = vunpack.c.h.b16 %v559
    %v2043 = vunpack.c.l.b16 %v560
    %v2044 = vunpack.c.h.b16 %v560
    %v2045 = vunpack.c.l.b16 %v561
    %v2046 = vunpack.c.h.b16 %v561
    %v2047 = vunpack.c.l.b16 %v562
    %v2048 = vunpack.c.h.b16 %v562
    %v2049 = vunpack.c.l.b16 %v563
    %v2050 = vunpack.c.h.b16 %v563
    %v2051 = vunpack.c.l.b16 %v564
    %v2052 = vunpack.c.h.b16 %v564
    %v2053 = vunpack.c.l.b16 %v565
    %v2054 = vunpack.c.h.b16 %v565
    %v2055 = vunpack.c.l.b16 %v566
    %v2056 = vunpack.c.h.b16 %v566
    %v2057 = vunpack.c.l.b16 %v567
    %v2058 = vunpack.c.h.b16 %v567
    %v2059 = vunpack.c.l.b16 %v568
    %v2060 = vunpack.c.h.b16 %v568
    %v2061 = vunpack.c.l.b16 %v569
    %v2062 = vunpack.c.h.b16 %v569
    %v2063 = vunpack.c.l.b16 %v570
    %v2064 = vunpack.c.h.b16 %v570
    %v2065 = vunpack.c.l.b16 %v571
    %v2066 = vunpack.c.h.b16 %v571
    %v2067 = vunpack.c.l.b16 %v572
    %v2068 = vunpack.c.h.b16 %v572
    %v2069 = vunpack.c.l.b16 %v573
    %v2070 = vunpack.c.h.b16 %v573
    %v2071 = vunpack.c.l.b16 %v574
    %v2072 = vunpack.c.h.b16 %v574
    %v2073 = vunpack.c.l.b16 %v575
    %v2074 = vunpack.c.h.b16 %v575
    %v2075 = vunpack.c.l.b16 %v576
    %v2076 = vunpack.c.h.b16 %v576
    %v2077 = vunpack.c.l.b16 %v577
    %v2078 = vunpack.c.h.b16 %v577
    %v2079 = vunpack.c.l.b16 %v578
    %v2080 = vunpack.c.h.b16 %v578
    %v2081 = vunpack.c.l.b16 %v579
    %v2082 = vunpack.c.h.b16 %v579
    %v2083 = vunpack.c.l.b16 %v580
    %v2084 = vunpack.c.h.b16 %v580
    %v2085 = vunpack.c.l.b16 %v581
    %v2086 = vunpack.c.h.b16 %v581
    %v2087 = vunpack.c.l.b16 %v582
    %v2088 = vunpack.c.h.b16 %v582
    %v2089 = vunpack.c.l.b16 %v583
    %v2090 = vunpack.c.h.b16 %v583
    %v2091 = vunpack.c.l.b16 %v584
    %v2092 = vunpack.c.h.b16 %v584
    %v2093 = vunpack.c.l.b16 %v585
    %v2094 = vunpack.c.h.b16 %v585
    %v2095 = vunpack.c.l.b16 %v586
    %v2096 = vunpack.c.h.b16 %v586
    %v2097 = vunpack.c.l.b16 %v587
    %v2098 = vunpack.c.h.b16 %v587
    %v2099 = vunpack.c.l.b16 %v588
    %v2100 = vunpack.c.h.b16 %v588
    %v2101 = vunpack.c.l.b16 %v589
    %v2102 = vunpack.c.h.b16 %v589
    %v2103 = vunpack.c.l.b16 %v590
    %v2104 = vunpack.c.h.b16 %v590
    %v2105 = vunpack.c.l.b16 %v591
    %v2106 = vunpack.c.h.b16 %v591
    %v2107 = vunpack.c.l.b16 %v592
    %v2108 = vunpack.c.h.b16 %v592
    %v2109 = vunpack.c.l.b16 %v593
    %v2110 = vunpack.c.h.b16 %v593
    %v2111 = vunpack.c.l.b16 %v594
    %v2112 = vunpack.c.h.b16 %v594
    %v2113 = vunpack.c.l.b16 %v595
    %v2114 = vunpack.c.h.b16 %v595
    %v2115 = vunpack.c.l.b16 %v596
    %v2116 = vunpack.c.h.b16 %v596
    %v2117 = vunpack.c.l.b16 %v597
    %v2118 = vunpack.c.h.b16 %v597
    %v2119 = vunpack.c.l.b16 %v598
    %v2120 = vunpack.c.h.b16 %v598
    %v2121 = vunpack.c.l.b16 %v599
    %v2122 = vunpack.c.h.b16 %v599
    %v2123 = vunpack.c.l.b16 %v600
    %v2124 = vunpack.c.h.b16 %v600
    %v2125 = vunpack.c.l.b16 %v601
    %v2126 = vunpack.c.h.b16 %v601
    %v2127 = vunpack.c.l.b16 %v602
    %v2128 = vunpack.c.h.b16 %v602
    %v2129 = vunpack.c.l.b16 %v603
    %v2130 = vunpack.c.h.b16 %v603
    %v2131 = vunpack.c.l.b16 %v604
    %v2132 = vunpack.c.h.b16 %v604
    %v2133 = vunpack.c.l.b16 %v605
    %v2134 = vunpack.c.h.b16 %v605
    %v2135 = vunpack.c.l.b16 %v606
    %v2136 = vunpack.c.h.b16 %v606
    %v2137 = vunpack.c.l.b16 %v607
    %v2138 = vunpack.c.h.b16 %v607
    %v2139 = vunpack.c.l.b16 %v608
    %v2140 = vunpack.c.h.b16 %v608
    %v2141 = vunpack.c.l.b16 %v609
    %v2142 = vunpack.c.h.b16 %v609
    %v2143 = vunpack.c.l.b16 %v610
    %v2144 = vunpack.c.h.b16 %v610
    %v2145 = vunpack.c.l.b16 %v611
    %v2146 = vunpack.c.h.b16 %v611
    %v2147 = vunpack.c.l.b16 %v612
    %v2148 = vunpack.c.h.b16 %v612
    %v2149 = vpack.c.b16 %v1129, %v1125
    %v2150 = vpack.c.b16 %v1130, %v1126
    %v2151 = vpack.c.b16 %v1131, %v1127
    %v2152 = vpack.c.b16 %v1132, %v1128
    %v2153 = vpack.c.b16 %v1137, %v1133
    %v2154 = vpack.c.b16 %v1138, %v1134
    %v2155 = vpack.c.b16 %v1139, %v1135
    %v2156 = vpack.c.b16 %v1140, %v1136
    %v2157 = vpack.c.b16 %v1145, %v1141
    %v2158 = vpack.c.b16 %v1146, %v1142
    %v2159 = vpack.c.b16 %v1147, %v1143
    %v2160 = vpack.c.b16 %v1148, %v1144
    %v2161 = vpack.c.b16 %v1153, %v1149
    %v2162 = vpack.c.b16 %v1154, %v1150
    %v2163 = vpack.c.b16 %v1155, %v1151
    %v2164 = vpack.c.b16 %v1156, %v1152
    %v2165 = vpack.c.b16 %v1161, %v1157
    %v2166 = vpack.c.b16 %v1162, %v1158
    %v2167 = vpack.c.b16 %v1163, %v1159
    %v2168 = vpack.c.b16 %v1164, %v1160
    %v2169 = vpack.c.b16 %v1169, %v1165
    %v2170 = vpack.c.b16 %v1170, %v1166
    %v2171 = vpack.c.b16 %v1171, %v1167
    %v2172 = vpack.c.b16 %v1172, %v1168
    %v2173 = vpack.c.b16 %v1177, %v1173
    %v2174 = vpack.c.b16 %v1178, %v1174
    %v2175 = vpack.c.b16 %v1179, %v1175
    %v2176 = vpack.c.b16 %v1180, %v1176
    %v2177 = vpack.c.b16 %v1185, %v1181
    %v2178 = vpack.c.b16 %v1186, %v1182
    %v2179 = vpack.c.b16 %v1187, %v1183
    %v2180 = vpack.c.b16 %v1188, %v1184
    %v2181 = vpack.c.b16 %v1193, %v1189
    %v2182 = vpack.c.b16 %v1194, %v1190
    %v2183 = vpack.c.b16 %v1195, %v1191
    %v2184 = vpack.c.b16 %v1196, %v1192
    %v2185 = vpack.c.b16 %v1201, %v1197
    %v2186 = vpack.c.b16 %v1202, %v1198
    %v2187 = vpack.c.b16 %v1203, %v1199
    %v2188 = vpack.c.b16 %v1204, %v1200
    %v2189 = vpack.c.b16 %v1209, %v1205
    %v2190 = vpack.c.b16 %v1210, %v1206
    %v2191 = vpack.c.b16 %v1211, %v1207
    %v2192 = vpack.c.b16 %v1212, %v1208
    %v2193 = vpack.c.b16 %v1217, %v1213
    %v2194 = vpack.c.b16 %v1218, %v1214
    %v2195 = vpack.c.b16 %v1219, %v1215
    %v2196 = vpack.c.b16 %v1220, %v1216
    %v2197 = vpack.c.b16 %v1225, %v1221
    %v2198 = vpack.c.b16 %v1226, %v1222
    %v2199 = vpack.c.b16 %v1227, %v1223
    %v2200 = vpack.c.b16 %v1228, %v1224
    %v2201 = vpack.c.b16 %v1233, %v1229
    %v2202 = vpack.c.b16 %v1234, %v1230
    %v2203 = vpack.c.b16 %v1235, %v1231
    %v2204 = vpack.c.b16 %v1236, %v1232
    %v2205 = vpack.c.b16 %v1241, %v1237
    %v2206 = vpack.c.b16 %v1242, %v1238
    %v2207 = vpack.c.b16 %v1243, %v1239
    %v2208 = vpack.c.b16 %v1244, %v1240
    %v2209 = vpack.c.b16 %v1249, %v1245
    %v2210 = vpack.c.b16 %v1250, %v1246
    %v2211 = vpack.c.b16 %v1251, %v1247
    %v2212 = vpack.c.b16 %v1252, %v1248
    %v2213 = vpack.c.b16 %v1257, %v1253
    %v2214 = vpack.c.b16 %v1258, %v1254
    %v2215 = vpack.c.b16 %v1259, %v1255
    %v2216 = vpack.c.b16 %v1260, %v1256
    %v2217 = vpack.c.b16 %v1265, %v1261
    %v2218 = vpack.c.b16 %v1266, %v1262
    %v2219 = vpack.c.b16 %v1267, %v1263
    %v2220 = vpack.c.b16 %v1268, %v1264
    %v2221 = vpack.c.b16 %v1273, %v1269
    %v2222 = vpack.c.b16 %v1274, %v1270
    %v2223 = vpack.c.b16 %v1275, %v1271
    %v2224 = vpack.c.b16 %v1276, %v1272
    %v2225 = vpack.c.b16 %v1281, %v1277
    %v2226 = vpack.c.b16 %v1282, %v1278
    %v2227 = vpack.c.b16 %v1283, %v1279
    %v2228 = vpack.c.b16 %v1284, %v1280
    %v2229 = vpack.c.b16 %v1289, %v1285
    %v2230 = vpack.c.b16 %v1290, %v1286
    %v2231 = vpack.c.b16 %v1291, %v1287
    %v2232 = vpack.c.b16 %v1292, %v1288
    %v2233 = vpack.c.b16 %v1297, %v1293
    %v2234 = vpack.c.b16 %v1298, %v1294
    %v2235 = vpack.c.b16 %v1299, %v1295
    %v2236 = vpack.c.b16 %v1300, %v1296
    %v2237 = vpack.c.b16 %v1305, %v1301
    %v2238 = vpack.c.b16 %v1306, %v1302
    %v2239 = vpack.c.b16 %v1307, %v1303
    %v2240 = vpack.c.b16 %v1308, %v1304
    %v2241 = vpack.c.b16 %v1313, %v1309
    %v2242 = vpack.c.b16 %v1314, %v1310
    %v2243 = vpack.c.b16 %v1315, %v1311
    %v2244 = vpack.c.b16 %v1316, %v1312
    %v2245 = vpack.c.b16 %v1321, %v1317
    %v2246 = vpack.c.b16 %v1322, %v1318
    %v2247 = vpack.c.b16 %v1323, %v1319
    %v2248 = vpack.c.b16 %v1324, %v1320
    %v2249 = vpack.c.b16 %v1329, %v1325
    %v2250 = vpack.c.b16 %v1330, %v1326
    %v2251 = vpack.c.b16 %v1331, %v1327
    %v2252 = vpack.c.b16 %v1332, %v1328
    %v2253 = vpack.c.b16 %v1337, %v1333
    %v2254 = vpack.c.b16 %v1338, %v1334
    %v2255 = vpack.c.b16 %v1339, %v1335
    %v2256 = vpack.c.b16 %v1340, %v1336
    %v2257 = vpack.c.b16 %v1345, %v1341
    %v2258 = vpack.c.b16 %v1346, %v1342
    %v2259 = vpack.c.b16 %v1347, %v1343
    %v2260 = vpack.c.b16 %v1348, %v1344
    %v2261 = vpack.c.b16 %v1353, %v1349
    %v2262 = vpack.c.b16 %v1354, %v1350
    %v2263 = vpack.c.b16 %v1355, %v1351
    %v2264 = vpack.c.b16 %v1356, %v1352
    %v2265 = vpack.c.b16 %v1361, %v1357
    %v2266 = vpack.c.b16 %v1362, %v1358
    %v2267 = vpack.c.b16 %v1363, %v1359
    %v2268 = vpack.c.b16 %v1364, %v1360
    %v2269 = vpack.c.b16 %v1369, %v1365
    %v2270 = vpack.c.b16 %v1370, %v1366
    %v2271 = vpack.c.b16 %v1371, %v1367
    %v2272 = vpack.c.b16 %v1372, %v1368
    %v2273 = vpack.c.b16 %v1377, %v1373
    %v2274 = vpack.c.b16 %v1378, %v1374
    %v2275 = vpack.c.b16 %v1379, %v1375
    %v2276 = vpack.c.b16 %v1380, %v1376
    %v2277 = vpack.c.b16 %v1385, %v1381
    %v2278 = vpack.c.b16 %v1386, %v1382
    %v2279 = vpack.c.b16 %v1387, %v1383
    %v2280 = vpack.c.b16 %v1388, %v1384
    %v2281 = vpack.c.b16 %v1393, %v1389
    %v2282 = vpack.c.b16 %v1394, %v1390
    %v2283 = vpack.c.b16 %v1395, %v1391
    %v2284 = vpack.c.b16 %v1396, %v1392
    %v2285 = vpack.c.b16 %v1401, %v1397
    %v2286 = vpack.c.b16 %v1402, %v1398
    %v2287 = vpack.c.b16 %v1403, %v1399
    %v2288 = vpack.c.b16 %v1404, %v1400
    %v2289 = vpack.c.b16 %v1409, %v1405
    %v2290 = vpack.c.b16 %v1410, %v1406
    %v2291 = vpack.c.b16 %v1411, %v1407
    %v2292 = vpack.c.b16 %v1412, %v1408
    %v2293 = vpack.c.b16 %v1417, %v1413
    %v2294 = vpack.c.b16 %v1418, %v1414
    %v2295 = vpack.c.b16 %v1419, %v1415
    %v2296 = vpack.c.b16 %v1420, %v1416
    %v2297 = vpack.c.b16 %v1425, %v1421
    %v2298 = vpack.c.b16 %v1426, %v1422
    %v2299 = vpack.c.b16 %v1427, %v1423
    %v2300 = vpack.c.b16 %v1428, %v1424
    %v2301 = vpack.c.b16 %v1433, %v1429
    %v2302 = vpack.c.b16 %v1434, %v1430
    %v2303 = vpack.c.b16 %v1435, %v1431
    %v2304 = vpack.c.b16 %v1436, %v1432
    %v2305 = vpack.c.b16 %v1441, %v1437
    %v2306 = vpack.c.b16 %v1442, %v1438
    %v2307 = vpack.c.b16 %v1443, %v1439
    %v2308 = vpack.c.b16 %v1444, %v1440
    %v2309 = vpack.c.b16 %v1449, %v1445
    %v2310 = vpack.c.b16 %v1450, %v1446
    %v2311 = vpack.c.b16 %v1451, %v1447
    %v2312 = vpack.c.b16 %v1452, %v1448
    %v2313 = vpack.c.b16 %v1457, %v1453
    %v2314 = vpack.c.b16 %v1458, %v1454
    %v2315 = vpack.c.b16 %v1459, %v1455
    %v2316 = vpack.c.b16 %v1460, %v1456
    %v2317 = vpack.c.b16 %v1465, %v1461
    %v2318 = vpack.c.b16 %v1466, %v1462
    %v2319 = vpack.c.b16 %v1467, %v1463
    %v2320 = vpack.c.b16 %v1468, %v1464
    %v2321 = vpack.c.b16 %v1473, %v1469
    %v2322 = vpack.c.b16 %v1474, %v1470
    %v2323 = vpack.c.b16 %v1475, %v1471
    %v2324 = vpack.c.b16 %v1476, %v1472
    %v2325 = vpack.c.b16 %v1481, %v1477
    %v2326 = vpack.c.b16 %v1482, %v1478
    %v2327 = vpack.c.b16 %v1483, %v1479
    %v2328 = vpack.c.b16 %v1484, %v1480
    %v2329 = vpack.c.b16 %v1489, %v1485
    %v2330 = vpack.c.b16 %v1490, %v1486
    %v2331 = vpack.c.b16 %v1491, %v1487
    %v2332 = vpack.c.b16 %v1492, %v1488
    %v2333 = vpack.c.b16 %v1497, %v1493
    %v2334 = vpack.c.b16 %v1498, %v1494
    %v2335 = vpack.c.b16 %v1499, %v1495
    %v2336 = vpack.c.b16 %v1500, %v1496
    %v2337 = vpack.c.b16 %v1505, %v1501
    %v2338 = vpack.c.b16 %v1506, %v1502
    %v2339 = vpack.c.b16 %v1507, %v1503
    %v2340 = vpack.c.b16 %v1508, %v1504
    %v2341 = vpack.c.b16 %v1513, %v1509
    %v2342 = vpack.c.b16 %v1514, %v1510
    %v2343 = vpack.c.b16 %v1515, %v1511
    %v2344 = vpack.c.b16 %v1516, %v1512
    %v2345 = vpack.c.b16 %v1521, %v1517
    %v2346 = vpack.c.b16 %v1522, %v1518
    %v2347 = vpack.c.b16 %v1523, %v1519
    %v2348 = vpack.c.b16 %v1524, %v1520
    %v2349 = vpack.c.b16 %v1529, %v1525
    %v2350 = vpack.c.b16 %v1530, %v1526
    %v2351 = vpack.c.b16 %v1531, %v1527
    %v2352 = vpack.c.b16 %v1532, %v1528
    %v2353 = vpack.c.b16 %v1537, %v1533
    %v2354 = vpack.c.b16 %v1538, %v1534
    %v2355 = vpack.c.b16 %v1539, %v1535
    %v2356 = vpack.c.b16 %v1540, %v1536
    %v2357 = vpack.c.b16 %v1545, %v1541
    %v2358 = vpack.c.b16 %v1546, %v1542
    %v2359 = vpack.c.b16 %v1547, %v1543
    %v2360 = vpack.c.b16 %v1548, %v1544
    %v2361 = vpack.c.b16 %v1553, %v1549
    %v2362 = vpack.c.b16 %v1554, %v1550
    %v2363 = vpack.c.b16 %v1555, %v1551
    %v2364 = vpack.c.b16 %v1556, %v1552
    %v2365 = vpack.c.b16 %v1561, %v1557
    %v2366 = vpack.c.b16 %v1562, %v1558
    %v2367 = vpack.c.b16 %v1563, %v1559
    %v2368 = vpack.c.b16 %v1564, %v1560
    %v2369 = vpack.c.b16 %v1569, %v1565
    %v2370 = vpack.c.b16 %v1570, %v1566
    %v2371 = vpack.c.b16 %v1571, %v1567
    %v2372 = vpack.c.b16 %v1572, %v1568
    %v2373 = vpack.c.b16 %v1577, %v1573
    %v2374 = vpack.c.b16 %v1578, %v1574
    %v2375 = vpack.c.b16 %v1579, %v1575
    %v2376 = vpack.c.b16 %v1580, %v1576
    %v2377 = vpack.c.b16 %v1585, %v1581
    %v2378 = vpack.c.b16 %v1586, %v1582
    %v2379 = vpack.c.b16 %v1587, %v1583
    %v2380 = vpack.c.b16 %v1588, %v1584
    %v2381 = vpack.c.b16 %v1593, %v1589
    %v2382 = vpack.c.b16 %v1594, %v1590
    %v2383 = vpack.c.b16 %v1595, %v1591
    %v2384 = vpack.c.b16 %v1596, %v1592
    %v2385 = vpack.c.b16 %v1601, %v1597
    %v2386 = vpack.c.b16 %v1602, %v1598
    %v2387 = vpack.c.b16 %v1603, %v1599
    %v2388 = vpack.c.b16 %v1604, %v1600
    %v2389 = vpack.c.b16 %v1609, %v1605
    %v2390 = vpack.c.b16 %v1610, %v1606
    %v2391 = vpack.c.b16 %v1611, %v1607
    %v2392 = vpack.c.b16 %v1612, %v1608
    %v2393 = vpack.c.b16 %v1617, %v1613
    %v2394 = vpack.c.b16 %v1618, %v1614
    %v2395 = vpack.c.b16 %v1619, %v1615
    %v2396 = vpack.c.b16 %v1620, %v1616
    %v2397 = vpack.c.b16 %v1625, %v1621
    %v2398 = vpack.c.b16 %v1626, %v1622
    %v2399 = vpack.c.b16 %v1627, %v1623
    %v2400 = vpack.c.b16 %v1628, %v1624
    %v2401 = vpack.c.b16 %v1633, %v1629
    %v2402 = vpack.c.b16 %v1634, %v1630
    %v2403 = vpack.c.b16 %v1635, %v1631
    %v2404 = vpack.c.b16 %v1636, %v1632
    %v2405 = vpack.c.b16 %v1641, %v1637
    %v2406 = vpack.c.b16 %v1642, %v1638
    %v2407 = vpack.c.b16 %v1643, %v1639
    %v2408 = vpack.c.b16 %v1644, %v1640
    %v2409 = vpack.c.b16 %v1649, %v1645
    %v2410 = vpack.c.b16 %v1650, %v1646
    %v2411 = vpack.c.b16 %v1651, %v1647
    %v2412 = vpack.c.b16 %v1652, %v1648
    %v2413 = vpack.c.b16 %v1657, %v1653
    %v2414 = vpack.c.b16 %v1658, %v1654
    %v2415 = vpack.c.b16 %v1659, %v1655
    %v2416 = vpack.c.b16 %v1660, %v1656
    %v2417 = vpack.c.b16 %v1665, %v1661
    %v2418 = vpack.c.b16 %v1666, %v1662
    %v2419 = vpack.c.b16 %v1667, %v1663
    %v2420 = vpack.c.b16 %v1668, %v1664
    %v2421 = vpack.c.b16 %v1673, %v1669
    %v2422 = vpack.c.b16 %v1674, %v1670
    %v2423 = vpack.c.b16 %v1675, %v1671
    %v2424 = vpack.c.b16 %v1676, %v1672
    %v2425 = vpack.c.b16 %v1681, %v1677
    %v2426 = vpack.c.b16 %v1682, %v1678
    %v2427 = vpack.c.b16 %v1683, %v1679
    %v2428 = vpack.c.b16 %v1684, %v1680
    %v2429 = vpack.c.b16 %v1689, %v1685
    %v2430 = vpack.c.b16 %v1690, %v1686
    %v2431 = vpack.c.b16 %v1691, %v1687
    %v2432 = vpack.c.b16 %v1692, %v1688
    %v2433 = vpack.c.b16 %v1697, %v1693
    %v2434 = vpack.c.b16 %v1698, %v1694
    %v2435 = vpack.c.b16 %v1699, %v1695
    %v2436 = vpack.c.b16 %v1700, %v1696
    %v2437 = vpack.c.b16 %v1705, %v1701
    %v2438 = vpack.c.b16 %v1706, %v1702
    %v2439 = vpack.c.b16 %v1707, %v1703
    %v2440 = vpack.c.b16 %v1708, %v1704
    %v2441 = vpack.c.b16 %v1713, %v1709
    %v2442 = vpack.c.b16 %v1714, %v1710
    %v2443 = vpack.c.b16 %v1715, %v1711
    %v2444 = vpack.c.b16 %v1716, %v1712
    %v2445 = vpack.c.b16 %v1721, %v1717
    %v2446 = vpack.c.b16 %v1722, %v1718
    %v2447 = vpack.c.b16 %v1723, %v1719
    %v2448 = vpack.c.b16 %v1724, %v1720
    %v2449 = vpack.c.b16 %v1729, %v1725
    %v2450 = vpack.c.b16 %v1730, %v1726
    %v2451 = vpack.c.b16 %v1731, %v1727
    %v2452 = vpack.c.b16 %v1732, %v1728
    %v2453 = vpack.c.b16 %v1737, %v1733
    %v2454 = vpack.c.b16 %v1738, %v1734
    %v2455 = vpack.c.b16 %v1739, %v1735
    %v2456 = vpack.c.b16 %v1740, %v1736
    %v2457 = vpack.c.b16 %v1745, %v1741
    %v2458 = vpack.c.b16 %v1746, %v1742
    %v2459 = vpack.c.b16 %v1747, %v1743
    %v2460 = vpack.c.b16 %v1748, %v1744
    %v2461 = vpack.c.b16 %v1753, %v1749
    %v2462 = vpack.c.b16 %v1754, %v1750
    %v2463 = vpack.c.b16 %v1755, %v1751
    %v2464 = vpack.c.b16 %v1756, %v1752
    %v2465 = vpack.c.b16 %v1761, %v1757
    %v2466 = vpack.c.b16 %v1762, %v1758
    %v2467 = vpack.c.b16 %v1763, %v1759
    %v2468 = vpack.c.b16 %v1764, %v1760
    %v2469 = vpack.c.b16 %v1769, %v1765
    %v2470 = vpack.c.b16 %v1770, %v1766
    %v2471 = vpack.c.b16 %v1771, %v1767
    %v2472 = vpack.c.b16 %v1772, %v1768
    %v2473 = vpack.c.b16 %v1777, %v1773
    %v2474 = vpack.c.b16 %v1778, %v1774
    %v2475 = vpack.c.b16 %v1779, %v1775
    %v2476 = vpack.c.b16 %v1780, %v1776
    %v2477 = vpack.c.b16 %v1785, %v1781
    %v2478 = vpack.c.b16 %v1786, %v1782
    %v2479 = vpack.c.b16 %v1787, %v1783
    %v2480 = vpack.c.b16 %v1788, %v1784
    %v2481 = vpack.c.b16 %v1793, %v1789
    %v2482 = vpack.c.b16 %v1794, %v1790
    %v2483 = vpack.c.b16 %v1795, %v1791
    %v2484 = vpack.c.b16 %v1796, %v1792
    %v2485 = vpack.c.b16 %v1801, %v1797
    %v2486 = vpack.c.b16 %v1802, %v1798
    %v2487 = vpack.c.b16 %v1803, %v1799
    %v2488 = vpack.c.b16 %v1804, %v1800
    %v2489 = vpack.c.b16 %v1809, %v1805
    %v2490 = vpack.c.b16 %v1810, %v1806
    %v2491 = vpack.c.b16 %v1811, %v1807
    %v2492 = vpack.c.b16 %v1812, %v1808
    %v2493 = vpack.c.b16 %v1817, %v1813
    %v2494 = vpack.c.b16 %v1818, %v1814
    %v2495 = vpack.c.b16 %v1819, %v1815
    %v2496 = vpack.c.b16 %v1820, %v1816
    %v2497 = vpack.c.b16 %v1825, %v1821
    %v2498 = vpack.c.b16 %v1826, %v1822
    %v2499 = vpack.c.b16 %v1827, %v1823
    %v2500 = vpack.c.b16 %v1828, %v1824
    %v2501 = vpack.c.b16 %v1833, %v1829
    %v2502 = vpack.c.b16 %v1834, %v1830
    %v2503 = vpack.c.b16 %v1835, %v1831
    %v2504 = vpack.c.b16 %v1836, %v1832
    %v2505 = vpack.c.b16 %v1841, %v1837
    %v2506 = vpack.c.b16 %v1842, %v1838
    %v2507 = vpack.c.b16 %v1843, %v1839
    %v2508 = vpack.c.b16 %v1844, %v1840
    %v2509 = vpack.c.b16 %v1849, %v1845
    %v2510 = vpack.c.b16 %v1850, %v1846
    %v2511 = vpack.c.b16 %v1851, %v1847
    %v2512 = vpack.c.b16 %v1852, %v1848
    %v2513 = vpack.c.b16 %v1857, %v1853
    %v2514 = vpack.c.b16 %v1858, %v1854
    %v2515 = vpack.c.b16 %v1859, %v1855
    %v2516 = vpack.c.b16 %v1860, %v1856
    %v2517 = vpack.c.b16 %v1865, %v1861
    %v2518 = vpack.c.b16 %v1866, %v1862
    %v2519 = vpack.c.b16 %v1867, %v1863
    %v2520 = vpack.c.b16 %v1868, %v1864
    %v2521 = vpack.c.b16 %v1873, %v1869
    %v2522 = vpack.c.b16 %v1874, %v1870
    %v2523 = vpack.c.b16 %v1875, %v1871
    %v2524 = vpack.c.b16 %v1876, %v1872
    %v2525 = vpack.c.b16 %v1881, %v1877
    %v2526 = vpack.c.b16 %v1882, %v1878
    %v2527 = vpack.c.b16 %v1883, %v1879
    %v2528 = vpack.c.b16 %v1884, %v1880
    %v2529 = vpack.c.b16 %v1889, %v1885
    %v2530 = vpack.c.b16 %v1890, %v1886
    %v2531 = vpack.c.b16 %v1891, %v1887
    %v2532 = vpack.c.b16 %v1892, %v1888
    %v2533 = vpack.c.b16 %v1897, %v1893
    %v2534 = vpack.c.b16 %v1898, %v1894
    %v2535 = vpack.c.b16 %v1899, %v1895
    %v2536 = vpack.c.b16 %v1900, %v1896
    %v2537 = vpack.c.b16 %v1905, %v1901
    %v2538 = vpack.c.b16 %v1906, %v1902
    %v2539 = vpack.c.b16 %v1907, %v1903
    %v2540 = vpack.c.b16 %v1908, %v1904
    %v2541 = vpack.c.b16 %v1913, %v1909
    %v2542 = vpack.c.b16 %v1914, %v1910
    %v2543 = vpack.c.b16 %v1915, %v1911
    %v2544 = vpack.c.b16 %v1916, %v1912
    %v2545 = vpack.c.b16 %v1921, %v1917
    %v2546 = vpack.c.b16 %v1922, %v1918
    %v2547 = vpack.c.b16 %v1923, %v1919
    %v2548 = vpack.c.b16 %v1924, %v1920
    %v2549 = vpack.c.b16 %v1929, %v1925
    %v2550 = vpack.c.b16 %v1930, %v1926
    %v2551 = vpack.c.b16 %v1931, %v1927
    %v2552 = vpack.c.b16 %v1932, %v1928
    %v2553 = vpack.c.b16 %v1937, %v1933
    %v2554 = vpack.c.b16 %v1938, %v1934
    %v2555 = vpack.c.b16 %v1939, %v1935
    %v2556 = vpack.c.b16 %v1940, %v1936
    %v2557 = vpack.c.b16 %v1945, %v1941
    %v2558 = vpack.c.b16 %v1946, %v1942
    %v2559 = vpack.c.b16 %v1947, %v1943
    %v2560 = vpack.c.b16 %v1948, %v1944
    %v2561 = vpack.c.b16 %v1953, %v1949
    %v2562 = vpack.c.b16 %v1954, %v1950
    %v2563 = vpack.c.b16 %v1955, %v1951
    %v2564 = vpack.c.b16 %v1956, %v1952
    %v2565 = vpack.c.b16 %v1961, %v1957
    %v2566 = vpack.c.b16 %v1962, %v1958
    %v2567 = vpack.c.b16 %v1963, %v1959
    %v2568 = vpack.c.b16 %v1964, %v1960
    %v2569 = vpack.c.b16 %v1969, %v1965
    %v2570 = vpack.c.b16 %v1970, %v1966
    %v2571 = vpack.c.b16 %v1971, %v1967
    %v2572 = vpack.c.b16 %v1972, %v1968
    %v2573 = vpack.c.b16 %v1977, %v1973
    %v2574 = vpack.c.b16 %v1978, %v1974
    %v2575 = vpack.c.b16 %v1979, %v1975
    %v2576 = vpack.c.b16 %v1980, %v1976
    %v2577 = vpack.c.b16 %v1985, %v1981
    %v2578 = vpack.c.b16 %v1986, %v1982
    %v2579 = vpack.c.b16 %v1987, %v1983
    %v2580 = vpack.c.b16 %v1988, %v1984
    %v2581 = vpack.c.b16 %v1993, %v1989
    %v2582 = vpack.c.b16 %v1994, %v1990
    %v2583 = vpack.c.b16 %v1995, %v1991
    %v2584 = vpack.c.b16 %v1996, %v1992
    %v2585 = vpack.c.b16 %v2001, %v1997
    %v2586 = vpack.c.b16 %v2002, %v1998
    %v2587 = vpack.c.b16 %v2003, %v1999
    %v2588 = vpack.c.b16 %v2004, %v2000
    %v2589 = vpack.c.b16 %v2009, %v2005
    %v2590 = vpack.c.b16 %v2010, %v2006
    %v2591 = vpack.c.b16 %v2011, %v2007
    %v2592 = vpack.c.b16 %v2012, %v2008
    %v2593 = vpack.c.b16 %v2017, %v2013
    %v2594 = vpack.c.b16 %v2018, %v2014
    %v2595 = vpack.c.b16 %v2019, %v2015
    %v2596 = vpack.c.b16 %v2020, %v2016
    %v2597 = vpack.c.b16 %v2025, %v2021
    %v2598 = vpack.c.b16 %v2026, %v2022
    %v2599 = vpack.c.b16 %v2027, %v2023
    %v2600 = vpack.c.b16 %v2028, %v2024
    %v2601 = vpack.c.b16 %v2033, %v2029
    %v2602 = vpack.c.b16 %v2034, %v2030
    %v2603 = vpack.c.b16 %v2035, %v2031
    %v2604 = vpack.c.b16 %v2036, %v2032
    %v2605 = vpack.c.b16 %v2041, %v2037
    %v2606 = vpack.c.b16 %v2042, %v2038
    %v2607 = vpack.c.b16 %v2043, %v2039
    %v2608 = vpack.c.b16 %v2044, %v2040
    %v2609 = vpack.c.b16 %v2049, %v2045
    %v2610 = vpack.c.b16 %v2050, %v2046
    %v2611 = vpack.c.b16 %v2051, %v2047
    %v2612 = vpack.c.b16 %v2052, %v2048
    %v2613 = vpack.c.b16 %v2057, %v2053
    %v2614 = vpack.c.b16 %v2058, %v2054
    %v2615 = vpack.c.b16 %v2059, %v2055
    %v2616 = vpack.c.b16 %v2060, %v2056
    %v2617 = vpack.c.b16 %v2065, %v2061
    %v2618 = vpack.c.b16 %v2066, %v2062
    %v2619 = vpack.c.b16 %v2067, %v2063
    %v2620 = vpack.c.b16 %v2068, %v2064
    %v2621 = vpack.c.b16 %v2073, %v2069
    %v2622 = vpack.c.b16 %v2074, %v2070
    %v2623 = vpack.c.b16 %v2075, %v2071
    %v2624 = vpack.c.b16 %v2076, %v2072
    %v2625 = vpack.c.b16 %v2081, %v2077
    %v2626 = vpack.c.b16 %v2082, %v2078
    %v2627 = vpack.c.b16 %v2083, %v2079
    %v2628 = vpack.c.b16 %v2084, %v2080
    %v2629 = vpack.c.b16 %v2089, %v2085
    %v2630 = vpack.c.b16 %v2090, %v2086
    %v2631 = vpack.c.b16 %v2091, %v2087
    %v2632 = vpack.c.b16 %v2092, %v2088
    %v2633 = vpack.c.b16 %v2097, %v2093
    %v2634 = vpack.c.b16 %v2098, %v2094
    %v2635 = vpack.c.b16 %v2099, %v2095
    %v2636 = vpack.c.b16 %v2100, %v2096
    %v2637 = vpack.c.b16 %v2105, %v2101
    %v2638 = vpack.c.b16 %v2106, %v2102
    %v2639 = vpack.c.b16 %v2107, %v2103
    %v2640 = vpack.c.b16 %v2108, %v2104
    %v2641 = vpack.c.b16 %v2113, %v2109
    %v2642 = vpack.c.b16 %v2114, %v2110
    %v2643 = vpack.c.b16 %v2115, %v2111
    %v2644 = vpack.c.b16 %v2116, %v2112
    %v2645 = vpack.c.b16 %v2121, %v2117
    %v2646 = vpack.c.b16 %v2122, %v2118
    %v2647 = vpack.c.b16 %v2123, %v2119
    %v2648 = vpack.c.b16 %v2124, %v2120
    %v2649 = vpack.c.b16 %v2129, %v2125
    %v2650 = vpack.c.b16 %v2130, %v2126
    %v2651 = vpack.c.b16 %v2131, %v2127
    %v2652 = vpack.c.b16 %v2132, %v2128
    %v2653 = vpack.c.b16 %v2137, %v2133
    %v2654 = vpack.c.b16 %v2138, %v2134
    %v2655 = vpack.c.b16 %v2139, %v2135
    %v2656 = vpack.c.b16 %v2140, %v2136
    %v2657 = vpack.c.b16 %v2145, %v2141
    %v2658 = vpack.c.b16 %v2146, %v2142
    %v2659 = vpack.c.b16 %v2147, %v2143
    %v2660 = vpack.c.b16 %v2148, %v2144
    %3173 = vmatprep.subr.bf16.mxu0 %v2150
    %3174 = vmatpush1.bf16.msra.mxu0 %v2149
    %3175 = vmatprep.subr.bf16.mxu0 %v2154
    %3176 = vmatpush1.bf16.msra.mxu0 %v2153
    %3177 = vmatprep.subr.bf16.mxu0 %v2158
    %3178 = vmatpush1.bf16.msra.mxu0 %v2157
    %3179 = vmatprep.subr.bf16.mxu0 %v2162
    %3180 = vmatpush1.bf16.msra.mxu0 %v2161
    %3181 = vmatprep.subr.bf16.mxu0 %v2166
    %3182 = vmatpush1.bf16.msra.mxu0 %v2165
    %3183 = vmatprep.subr.bf16.mxu0 %v2170
    %3184 = vmatpush1.bf16.msra.mxu0 %v2169
    %3185 = vmatprep.subr.bf16.mxu0 %v2174
    %3186 = vmatpush1.bf16.msra.mxu0 %v2173
    %3187 = vmatprep.subr.bf16.mxu0 %v2178
    %3188 = vmatpush1.bf16.msra.mxu0 %v2177
    %3189 = vmatprep.subr.bf16.mxu0 %v2182
    %3190 = vmatpush1.bf16.msra.mxu0 %v2181
    %3191 = vmatprep.subr.bf16.mxu0 %v2186
    %3192 = vmatpush1.bf16.msra.mxu0 %v2185
    %3193 = vmatprep.subr.bf16.mxu0 %v2190
    %3194 = vmatpush1.bf16.msra.mxu0 %v2189
    %3195 = vmatprep.subr.bf16.mxu0 %v2194
    %3196 = vmatpush1.bf16.msra.mxu0 %v2193
    %3197 = vmatprep.subr.bf16.mxu0 %v2198
    %3198 = vmatpush1.bf16.msra.mxu0 %v2197
    %3199 = vmatprep.subr.bf16.mxu0 %v2202
    %3200 = vmatpush1.bf16.msra.mxu0 %v2201
    %3201 = vmatprep.subr.bf16.mxu0 %v2206
    %3202 = vmatpush1.bf16.msra.mxu0 %v2205
    %3203 = vmatprep.subr.bf16.mxu0 %v2210
    %3204 = vmatpush1.bf16.msra.mxu0 %v2209
    %3205 = vmatprep.mubr.bf16.mxu0 %v86
    %3206 = vmatmul.mubr.bf16.gmra.mrb[0].mxu0 %v85
    %v3207 = vpop.f32.mrb[0].mxu0
    %v3208 = vadd.f32 0.0, %v3207
    %v3209 = vpop.f32.mrb[0].mxu0
    %v3210 = vadd.f32 0.0, %v3209
    %v3211 = vpop.f32.mrb[0].mxu0
    %v3212 = vpop.f32.mrb[0].mxu0
    %3213 = vdwg.mxu0
    %3214 = vmatprep.subr.bf16.mxu0 %v2214
    %3215 = vmatpush1.bf16.msra.mxu0 %v2213
    %3216 = vmatprep.subr.bf16.mxu0 %v2218
    %3217 = vmatpush1.bf16.msra.mxu0 %v2217
    %3218 = vmatprep.subr.bf16.mxu0 %v2222
    %3219 = vmatpush1.bf16.msra.mxu0 %v2221
    %3220 = vmatprep.subr.bf16.mxu0 %v2226
    %3221 = vmatpush1.bf16.msra.mxu0 %v2225
    %3222 = vmatprep.subr.bf16.mxu0 %v2230
    %3223 = vmatpush1.bf16.msra.mxu0 %v2229
    %3224 = vmatprep.subr.bf16.mxu0 %v2234
    %3225 = vmatpush1.bf16.msra.mxu0 %v2233
    %3226 = vmatprep.subr.bf16.mxu0 %v2238
    %3227 = vmatpush1.bf16.msra.mxu0 %v2237
    %3228 = vmatprep.subr.bf16.mxu0 %v2242
    %3229 = vmatpush1.bf16.msra.mxu0 %v2241
    %3230 = vmatprep.subr.bf16.mxu0 %v2246
    %3231 = vmatpush1.bf16.msra.mxu0 %v2245
    %3232 = vmatprep.subr.bf16.mxu0 %v2250
    %3233 = vmatpush1.bf16.msra.mxu0 %v2249
    %3234 = vmatprep.subr.bf16.mxu0 %v2254
    %3235 = vmatpush1.bf16.msra.mxu0 %v2253
    %3236 = vmatprep.subr.bf16.mxu0 %v2258
    %3237 = vmatpush1.bf16.msra.mxu0 %v2257
    %3238 = vmatprep.subr.bf16.mxu0 %v2262
    %3239 = vmatpush1.bf16.msra.mxu0 %v2261
    %3240 = vmatprep.subr.bf16.mxu0 %v2266
    %3241 = vmatpush1.bf16.msra.mxu0 %v2265
    %3242 = vmatprep.subr.bf16.mxu0 %v2270
    %3243 = vmatpush1.bf16.msra.mxu0 %v2269
    %3244 = vmatprep.subr.bf16.mxu0 %v2274
    %3245 = vmatpush1.bf16.msra.mxu0 %v2273
    %3246 = vmatprep.mubr.bf16.mxu0 %v88
    %3247 = vmatmul.mubr.bf16.gmra.mrb[0].mxu0 %v87
    %v3248 = vpop.f32.mrb[0].mxu0
    %v3249 = vadd.f32 %v3208, %v3248
    %v3250 = vpop.f32.mrb[0].mxu0
    %v3251 = vadd.f32 %v3210, %v3250
    %v3252 = vpop.f32.mrb[0].mxu0
    %v3253 = vpop.f32.mrb[0].mxu0
    %3254 = vdwg.mxu0
    %3255 = vmatprep.subr.bf16.mxu0 %v2278
    %3256 = vmatpush1.bf16.msra.mxu0 %v2277
    %3257 = vmatprep.subr.bf16.mxu0 %v2282
    %3258 = vmatpush1.bf16.msra.mxu0 %v2281
    %3259 = vmatprep.subr.bf16.mxu0 %v2286
    %3260 = vmatpush1.bf16.msra.mxu0 %v2285
    %3261 = vmatprep.subr.bf16.mxu0 %v2290
    %3262 = vmatpush1.bf16.msra.mxu0 %v2289
    %3263 = vmatprep.subr.bf16.mxu0 %v2294
    %3264 = vmatpush1.bf16.msra.mxu0 %v2293
    %3265 = vmatprep.subr.bf16.mxu0 %v2298
    %3266 = vmatpush1.bf16.msra.mxu0 %v2297
    %3267 = vmatprep.subr.bf16.mxu0 %v2302
    %3268 = vmatpush1.bf16.msra.mxu0 %v2301
    %3269 = vmatprep.subr.bf16.mxu0 %v2306
    %3270 = vmatpush1.bf16.msra.mxu0 %v2305
    %3271 = vmatprep.subr.bf16.mxu0 %v2310
    %3272 = vmatpush1.bf16.msra.mxu0 %v2309
    %3273 = vmatprep.subr.bf16.mxu0 %v2314
    %3274 = vmatpush1.bf16.msra.mxu0 %v2313
    %3275 = vmatprep.subr.bf16.mxu0 %v2318
    %3276 = vmatpush1.bf16.msra.mxu0 %v2317
    %3277 = vmatprep.subr.bf16.mxu0 %v2322
    %3278 = vmatpush1.bf16.msra.mxu0 %v2321
    %3279 = vmatprep.subr.bf16.mxu0 %v2326
    %3280 = vmatpush1.bf16.msra.mxu0 %v2325
    %3281 = vmatprep.subr.bf16.mxu0 %v2330
    %3282 = vmatpush1.bf16.msra.mxu0 %v2329
    %3283 = vmatprep.subr.bf16.mxu0 %v2334
    %3284 = vmatpush1.bf16.msra.mxu0 %v2333
    %3285 = vmatprep.subr.bf16.mxu0 %v2338
    %3286 = vmatpush1.bf16.msra.mxu0 %v2337
    %3287 = vmatprep.mubr.bf16.mxu0 %v90
    %3288 = vmatmul.mubr.bf16.gmra.mrb[0].mxu0 %v89
    %v3289 = vpop.f32.mrb[0].mxu0
    %v3290 = vadd.f32 %v3249, %v3289
    %v3291 = vpop.f32.mrb[0].mxu0
    %v3292 = vadd.f32 %v3251, %v3291
    %v3293 = vpop.f32.mrb[0].mxu0
    %v3294 = vpop.f32.mrb[0].mxu0
    %3295 = vdwg.mxu0
    %3296 = vmatprep.subr.bf16.mxu0 %v2342
    %3297 = vmatpush1.bf16.msra.mxu0 %v2341
    %3298 = vmatprep.subr.bf16.mxu0 %v2346
    %3299 = vmatpush1.bf16.msra.mxu0 %v2345
    %3300 = vmatprep.subr.bf16.mxu0 %v2350
    %3301 = vmatpush1.bf16.msra.mxu0 %v2349
    %3302 = vmatprep.subr.bf16.mxu0 %v2354
    %3303 = vmatpush1.bf16.msra.mxu0 %v2353
    %3304 = vmatprep.subr.bf16.mxu0 %v2358
    %3305 = vmatpush1.bf16.msra.mxu0 %v2357
    %3306 = vmatprep.subr.bf16.mxu0 %v2362
    %3307 = vmatpush1.bf16.msra.mxu0 %v2361
    %3308 = vmatprep.subr.bf16.mxu0 %v2366
    %3309 = vmatpush1.bf16.msra.mxu0 %v2365
    %3310 = vmatprep.subr.bf16.mxu0 %v2370
    %3311 = vmatpush1.bf16.msra.mxu0 %v2369
    %3312 = vmatprep.subr.bf16.mxu0 %v2374
    %3313 = vmatpush1.bf16.msra.mxu0 %v2373
    %3314 = vmatprep.subr.bf16.mxu0 %v2378
    %3315 = vmatpush1.bf16.msra.mxu0 %v2377
    %3316 = vmatprep.subr.bf16.mxu0 %v2382
    %3317 = vmatpush1.bf16.msra.mxu0 %v2381
    %3318 = vmatprep.subr.bf16.mxu0 %v2386
    %3319 = vmatpush1.bf16.msra.mxu0 %v2385
    %3320 = vmatprep.subr.bf16.mxu0 %v2390
    %3321 = vmatpush1.bf16.msra.mxu0 %v2389
    %3322 = vmatprep.subr.bf16.mxu0 %v2394
    %3323 = vmatpush1.bf16.msra.mxu0 %v2393
    %3324 = vmatprep.subr.bf16.mxu0 %v2398
    %3325 = vmatpush1.bf16.msra.mxu0 %v2397
    %3326 = vmatprep.subr.bf16.mxu0 %v2402
    %3327 = vmatpush1.bf16.msra.mxu0 %v2401
    %3328 = vmatprep.mubr.bf16.mxu0 %v92
    %3329 = vmatmul.mubr.bf16.gmra.mrb[0].mxu0 %v91
    %v3330 = vpop.f32.mrb[0].mxu0
    %v3331 = vadd.f32 %v3290, %v3330
    %v3332 = vpop.f32.mrb[0].mxu0
    %v3333 = vadd.f32 %v3292, %v3332
    %v3334 = vpop.f32.mrb[0].mxu0
    %v3335 = vpop.f32.mrb[0].mxu0
    %3336 = vdwg.mxu0
    %3337 = vmatprep.subr.bf16.mxu0 %v2406
    %3338 = vmatpush1.bf16.msra.mxu0 %v2405
    %3339 = vmatprep.subr.bf16.mxu0 %v2410
    %3340 = vmatpush1.bf16.msra.mxu0 %v2409
    %3341 = vmatprep.subr.bf16.mxu0 %v2414
    %3342 = vmatpush1.bf16.msra.mxu0 %v2413
    %3343 = vmatprep.subr.bf16.mxu0 %v2418
    %3344 = vmatpush1.bf16.msra.mxu0 %v2417
    %3345 = vmatprep.subr.bf16.mxu0 %v2422
    %3346 = vmatpush1.bf16.msra.mxu0 %v2421
    %3347 = vmatprep.subr.bf16.mxu0 %v2426
    %3348 = vmatpush1.bf16.msra.mxu0 %v2425
    %3349 = vmatprep.subr.bf16.mxu0 %v2430
    %3350 = vmatpush1.bf16.msra.mxu0 %v2429
    %3351 = vmatprep.subr.bf16.mxu0 %v2434
    %3352 = vmatpush1.bf16.msra.mxu0 %v2433
    %3353 = vmatprep.subr.bf16.mxu0 %v2438
    %3354 = vmatpush1.bf16.msra.mxu0 %v2437
    %3355 = vmatprep.subr.bf16.mxu0 %v2442
    %3356 = vmatpush1.bf16.msra.mxu0 %v2441
    %3357 = vmatprep.subr.bf16.mxu0 %v2446
    %3358 = vmatpush1.bf16.msra.mxu0 %v2445
    %3359 = vmatprep.subr.bf16.mxu0 %v2450
    %3360 = vmatpush1.bf16.msra.mxu0 %v2449
    %3361 = vmatprep.subr.bf16.mxu0 %v2454
    %3362 = vmatpush1.bf16.msra.mxu0 %v2453
    %3363 = vmatprep.subr.bf16.mxu0 %v2458
    %3364 = vmatpush1.bf16.msra.mxu0 %v2457
    %3365 = vmatprep.subr.bf16.mxu0 %v2462
    %3366 = vmatpush1.bf16.msra.mxu0 %v2461
    %3367 = vmatprep.subr.bf16.mxu0 %v2466
    %3368 = vmatpush1.bf16.msra.mxu0 %v2465
    %3369 = vmatprep.mubr.bf16.mxu0 %v94
    %3370 = vmatmul.mubr.bf16.gmra.mrb[0].mxu0 %v93
    %v3371 = vpop.f32.mrb[0].mxu0
    %v3372 = vadd.f32 %v3331, %v3371
    %v3373 = vpop.f32.mrb[0].mxu0
    %v3374 = vadd.f32 %v3333, %v3373
    %v3375 = vpop.f32.mrb[0].mxu0
    %v3376 = vpop.f32.mrb[0].mxu0
    %3377 = vdwg.mxu0
    %3378 = vmatprep.subr.bf16.mxu0 %v2470
    %3379 = vmatpush1.bf16.msra.mxu0 %v2469
    %3380 = vmatprep.subr.bf16.mxu0 %v2474
    %3381 = vmatpush1.bf16.msra.mxu0 %v2473
    %3382 = vmatprep.subr.bf16.mxu0 %v2478
    %3383 = vmatpush1.bf16.msra.mxu0 %v2477
    %3384 = vmatprep.subr.bf16.mxu0 %v2482
    %3385 = vmatpush1.bf16.msra.mxu0 %v2481
    %3386 = vmatprep.subr.bf16.mxu0 %v2486
    %3387 = vmatpush1.bf16.msra.mxu0 %v2485
    %3388 = vmatprep.subr.bf16.mxu0 %v2490
    %3389 = vmatpush1.bf16.msra.mxu0 %v2489
    %3390 = vmatprep.subr.bf16.mxu0 %v2494
    %3391 = vmatpush1.bf16.msra.mxu0 %v2493
    %3392 = vmatprep.subr.bf16.mxu0 %v2498
    %3393 = vmatpush1.bf16.msra.mxu0 %v2497
    %3394 = vmatprep.subr.bf16.mxu0 %v2502
    %3395 = vmatpush1.bf16.msra.mxu0 %v2501
    %3396 = vmatprep.subr.bf16.mxu0 %v2506
    %3397 = vmatpush1.bf16.msra.mxu0 %v2505
    %3398 = vmatprep.subr.bf16.mxu0 %v2510
    %3399 = vmatpush1.bf16.msra.mxu0 %v2509
    %3400 = vmatprep.subr.bf16.mxu0 %v2514
    %3401 = vmatpush1.bf16.msra.mxu0 %v2513
    %3402 = vmatprep.subr.bf16.mxu0 %v2518
    %3403 = vmatpush1.bf16.msra.mxu0 %v2517
    %3404 = vmatprep.subr.bf16.mxu0 %v2522
    %3405 = vmatpush1.bf16.msra.mxu0 %v2521
    %3406 = vmatprep.subr.bf16.mxu0 %v2526
    %3407 = vmatpush1.bf16.msra.mxu0 %v2525
    %3408 = vmatprep.subr.bf16.mxu0 %v2530
    %3409 = vmatpush1.bf16.msra.mxu0 %v2529
    %3410 = vmatprep.mubr.bf16.mxu0 %v96
    %3411 = vmatmul.mubr.bf16.gmra.mrb[0].mxu0 %v95
    %v3412 = vpop.f32.mrb[0].mxu0
    %v3413 = vadd.f32 %v3372, %v3412
    %v3414 = vpop.f32.mrb[0].mxu0
    %v3415 = vadd.f32 %v3374, %v3414
    %v3416 = vpop.f32.mrb[0].mxu0
    %v3417 = vpop.f32.mrb[0].mxu0
    %3418 = vdwg.mxu0
    %3419 = vmatprep.subr.bf16.mxu0 %v2534
    %3420 = vmatpush1.bf16.msra.mxu0 %v2533
    %3421 = vmatprep.subr.bf16.mxu0 %v2538
    %3422 = vmatpush1.bf16.msra.mxu0 %v2537
    %3423 = vmatprep.subr.bf16.mxu0 %v2542
    %3424 = vmatpush1.bf16.msra.mxu0 %v2541
    %3425 = vmatprep.subr.bf16.mxu0 %v2546
    %3426 = vmatpush1.bf16.msra.mxu0 %v2545
    %3427 = vmatprep.subr.bf16.mxu0 %v2550
    %3428 = vmatpush1.bf16.msra.mxu0 %v2549
    %3429 = vmatprep.subr.bf16.mxu0 %v2554
    %3430 = vmatpush1.bf16.msra.mxu0 %v2553
    %3431 = vmatprep.subr.bf16.mxu0 %v2558
    %3432 = vmatpush1.bf16.msra.mxu0 %v2557
    %3433 = vmatprep.subr.bf16.mxu0 %v2562
    %3434 = vmatpush1.bf16.msra.mxu0 %v2561
    %3435 = vmatprep.subr.bf16.mxu0 %v2566
    %3436 = vmatpush1.bf16.msra.mxu0 %v2565
    %3437 = vmatprep.subr.bf16.mxu0 %v2570
    %3438 = vmatpush1.bf16.msra.mxu0 %v2569
    %3439 = vmatprep.subr.bf16.mxu0 %v2574
    %3440 = vmatpush1.bf16.msra.mxu0 %v2573
    %3441 = vmatprep.subr.bf16.mxu0 %v2578
    %3442 = vmatpush1.bf16.msra.mxu0 %v2577
    %3443 = vmatprep.subr.bf16.mxu0 %v2582
    %3444 = vmatpush1.bf16.msra.mxu0 %v2581
    %3445 = vmatprep.subr.bf16.mxu0 %v2586
    %3446 = vmatpush1.bf16.msra.mxu0 %v2585
    %3447 = vmatprep.subr.bf16.mxu0 %v2590
    %3448 = vmatpush1.bf16.msra.mxu0 %v2589
    %3449 = vmatprep.subr.bf16.mxu0 %v2594
    %3450 = vmatpush1.bf16.msra.mxu0 %v2593
    %3451 = vmatprep.mubr.bf16.mxu0 %v98
    %3452 = vmatmul.mubr.bf16.gmra.mrb[0].mxu0 %v97
    %v3453 = vpop.f32.mrb[0].mxu0
    %v3454 = vadd.f32 %v3413, %v3453
    %v3455 = vpop.f32.mrb[0].mxu0
    %v3456 = vadd.f32 %v3415, %v3455
    %v3457 = vpop.f32.mrb[0].mxu0
    %v3458 = vpop.f32.mrb[0].mxu0
    %3459 = vdwg.mxu0
    %3460 = vmatprep.subr.bf16.mxu0 %v2598
    %3461 = vmatpush1.bf16.msra.mxu0 %v2597
    %3462 = vmatprep.subr.bf16.mxu0 %v2602
    %3463 = vmatpush1.bf16.msra.mxu0 %v2601
    %3464 = vmatprep.subr.bf16.mxu0 %v2606
    %3465 = vmatpush1.bf16.msra.mxu0 %v2605
    %3466 = vmatprep.subr.bf16.mxu0 %v2610
    %3467 = vmatpush1.bf16.msra.mxu0 %v2609
    %3468 = vmatprep.subr.bf16.mxu0 %v2614
    %3469 = vmatpush1.bf16.msra.mxu0 %v2613
    %3470 = vmatprep.subr.bf16.mxu0 %v2618
    %3471 = vmatpush1.bf16.msra.mxu0 %v2617
    %3472 = vmatprep.subr.bf16.mxu0 %v2622
    %3473 = vmatpush1.bf16.msra.mxu0 %v2621
    %3474 = vmatprep.subr.bf16.mxu0 %v2626
    %3475 = vmatpush1.bf16.msra.mxu0 %v2625
    %3476 = vmatprep.subr.bf16.mxu0 %v2630
    %3477 = vmatpush1.bf16.msra.mxu0 %v2629
    %3478 = vmatprep.subr.bf16.mxu0 %v2634
    %3479 = vmatpush1.bf16.msra.mxu0 %v2633
    %3480 = vmatprep.subr.bf16.mxu0 %v2638
    %3481 = vmatpush1.bf16.msra.mxu0 %v2637
    %3482 = vmatprep.subr.bf16.mxu0 %v2642
    %3483 = vmatpush1.bf16.msra.mxu0 %v2641
    %3484 = vmatprep.subr.bf16.mxu0 %v2646
    %3485 = vmatpush1.bf16.msra.mxu0 %v2645
    %3486 = vmatprep.subr.bf16.mxu0 %v2650
    %3487 = vmatpush1.bf16.msra.mxu0 %v2649
    %3488 = vmatprep.subr.bf16.mxu0 %v2654
    %3489 = vmatpush1.bf16.msra.mxu0 %v2653
    %3490 = vmatprep.subr.bf16.mxu0 %v2658
    %3491 = vmatpush1.bf16.msra.mxu0 %v2657
    %3492 = vmatprep.mubr.bf16.mxu0 %v100
    %3493 = vmatmul.mubr.bf16.gmra.mrb[0].mxu0 %v99
    %v3494 = vpop.f32.mrb[0].mxu0
    %v3495 = vadd.f32 %v3454, %v3494
    %v3496 = vpop.f32.mrb[0].mxu0
    %v3497 = vadd.f32 %v3456, %v3496
    %v3498 = vpop.f32.mrb[0].mxu0
    %v3499 = vpop.f32.mrb[0].mxu0
    %3500 = vdwg.mxu0
    %3501 = vmatprep.subr.bf16.mxu0 %v2152
    %3502 = vmatpush1.bf16.msra.mxu0 %v2151
    %3503 = vmatprep.subr.bf16.mxu0 %v2156
    %3504 = vmatpush1.bf16.msra.mxu0 %v2155
    %3505 = vmatprep.subr.bf16.mxu0 %v2160
    %3506 = vmatpush1.bf16.msra.mxu0 %v2159
    %3507 = vmatprep.subr.bf16.mxu0 %v2164
    %3508 = vmatpush1.bf16.msra.mxu0 %v2163
    %3509 = vmatprep.subr.bf16.mxu0 %v2168
    %3510 = vmatpush1.bf16.msra.mxu0 %v2167
    %3511 = vmatprep.subr.bf16.mxu0 %v2172
    %3512 = vmatpush1.bf16.msra.mxu0 %v2171
    %3513 = vmatprep.subr.bf16.mxu0 %v2176
    %3514 = vmatpush1.bf16.msra.mxu0 %v2175
    %3515 = vmatprep.subr.bf16.mxu0 %v2180
    %3516 = vmatpush1.bf16.msra.mxu0 %v2179
    %3517 = vmatprep.subr.bf16.mxu0 %v2184
    %3518 = vmatpush1.bf16.msra.mxu0 %v2183
    %3519 = vmatprep.subr.bf16.mxu0 %v2188
    %3520 = vmatpush1.bf16.msra.mxu0 %v2187
    %3521 = vmatprep.subr.bf16.mxu0 %v2192
    %3522 = vmatpush1.bf16.msra.mxu0 %v2191
    %3523 = vmatprep.subr.bf16.mxu0 %v2196
    %3524 = vmatpush1.bf16.msra.mxu0 %v2195
    %3525 = vmatprep.subr.bf16.mxu0 %v2200
    %3526 = vmatpush1.bf16.msra.mxu0 %v2199
    %3527 = vmatprep.subr.bf16.mxu0 %v2204
    %3528 = vmatpush1.bf16.msra.mxu0 %v2203
    %3529 = vmatprep.subr.bf16.mxu0 %v2208
    %3530 = vmatpush1.bf16.msra.mxu0 %v2207
    %3531 = vmatprep.subr.bf16.mxu0 %v2212
    %3532 = vmatpush1.bf16.msra.mxu0 %v2211
    %3533 = vmatprep.mubr.bf16.mxu0 %v86
    %3534 = vmatmul.mubr.bf16.gmra.mrb[0].mxu0 %v85
    %v3535 = vpop.f32.mrb[0].mxu0
    %v3536 = vadd.f32 0.0, %v3535
    %v3537 = vpop.f32.mrb[0].mxu0
    %v3538 = vadd.f32 0.0, %v3537
    %v3539 = vpop.f32.mrb[0].mxu0
    %v3540 = vpop.f32.mrb[0].mxu0
    %3541 = vdwg.mxu0
    %3542 = vmatprep.subr.bf16.mxu0 %v2216
    %3543 = vmatpush1.bf16.msra.mxu0 %v2215
    %3544 = vmatprep.subr.bf16.mxu0 %v2220
    %3545 = vmatpush1.bf16.msra.mxu0 %v2219
    %3546 = vmatprep.subr.bf16.mxu0 %v2224
    %3547 = vmatpush1.bf16.msra.mxu0 %v2223
    %3548 = vmatprep.subr.bf16.mxu0 %v2228
    %3549 = vmatpush1.bf16.msra.mxu0 %v2227
    %3550 = vmatprep.subr.bf16.mxu0 %v2232
    %3551 = vmatpush1.bf16.msra.mxu0 %v2231
    %3552 = vmatprep.subr.bf16.mxu0 %v2236
    %3553 = vmatpush1.bf16.msra.mxu0 %v2235
    %3554 = vmatprep.subr.bf16.mxu0 %v2240
    %3555 = vmatpush1.bf16.msra.mxu0 %v2239
    %3556 = vmatprep.subr.bf16.mxu0 %v2244
    %3557 = vmatpush1.bf16.msra.mxu0 %v2243
    %3558 = vmatprep.subr.bf16.mxu0 %v2248
    %3559 = vmatpush1.bf16.msra.mxu0 %v2247
    %3560 = vmatprep.subr.bf16.mxu0 %v2252
    %3561 = vmatpush1.bf16.msra.mxu0 %v2251
    %3562 = vmatprep.subr.bf16.mxu0 %v2256
    %3563 = vmatpush1.bf16.msra.mxu0 %v2255
    %3564 = vmatprep.subr.bf16.mxu0 %v2260
    %3565 = vmatpush1.bf16.msra.mxu0 %v2259
    %3566 = vmatprep.subr.bf16.mxu0 %v2264
    %3567 = vmatpush1.bf16.msra.mxu0 %v2263
    %3568 = vmatprep.subr.bf16.mxu0 %v2268
    %3569 = vmatpush1.bf16.msra.mxu0 %v2267
    %3570 = vmatprep.subr.bf16.mxu0 %v2272
    %3571 = vmatpush1.bf16.msra.mxu0 %v2271
    %3572 = vmatprep.subr.bf16.mxu0 %v2276
    %3573 = vmatpush1.bf16.msra.mxu0 %v2275
    %3574 = vmatprep.mubr.bf16.mxu0 %v88
    %3575 = vmatmul.mubr.bf16.gmra.mrb[0].mxu0 %v87
    %v3576 = vpop.f32.mrb[0].mxu0
    %v3577 = vadd.f32 %v3536, %v3576
    %v3578 = vpop.f32.mrb[0].mxu0
    %v3579 = vadd.f32 %v3538, %v3578
    %v3580 = vpop.f32.mrb[0].mxu0
    %v3581 = vpop.f32.mrb[0].mxu0
    %3582 = vdwg.mxu0
    %3583 = vmatprep.subr.bf16.mxu0 %v2280
    %3584 = vmatpush1.bf16.msra.mxu0 %v2279
    %3585 = vmatprep.subr.bf16.mxu0 %v2284
    %3586 = vmatpush1.bf16.msra.mxu0 %v2283
    %3587 = vmatprep.subr.bf16.mxu0 %v2288
    %3588 = vmatpush1.bf16.msra.mxu0 %v2287
    %3589 = vmatprep.subr.bf16.mxu0 %v2292
    %3590 = vmatpush1.bf16.msra.mxu0 %v2291
    %3591 = vmatprep.subr.bf16.mxu0 %v2296
    %3592 = vmatpush1.bf16.msra.mxu0 %v2295
    %3593 = vmatprep.subr.bf16.mxu0 %v2300
    %3594 = vmatpush1.bf16.msra.mxu0 %v2299
    %3595 = vmatprep.subr.bf16.mxu0 %v2304
    %3596 = vmatpush1.bf16.msra.mxu0 %v2303
    %3597 = vmatprep.subr.bf16.mxu0 %v2308
    %3598 = vmatpush1.bf16.msra.mxu0 %v2307
    %3599 = vmatprep.subr.bf16.mxu0 %v2312
    %3600 = vmatpush1.bf16.msra.mxu0 %v2311
    %3601 = vmatprep.subr.bf16.mxu0 %v2316
    %3602 = vmatpush1.bf16.msra.mxu0 %v2315
    %3603 = vmatprep.subr.bf16.mxu0 %v2320
    %3604 = vmatpush1.bf16.msra.mxu0 %v2319
    %3605 = vmatprep.subr.bf16.mxu0 %v2324
    %3606 = vmatpush1.bf16.msra.mxu0 %v2323
    %3607 = vmatprep.subr.bf16.mxu0 %v2328
    %3608 = vmatpush1.bf16.msra.mxu0 %v2327
    %3609 = vmatprep.subr.bf16.mxu0 %v2332
    %3610 = vmatpush1.bf16.msra.mxu0 %v2331
    %3611 = vmatprep.subr.bf16.mxu0 %v2336
    %3612 = vmatpush1.bf16.msra.mxu0 %v2335
    %3613 = vmatprep.subr.bf16.mxu0 %v2340
    %3614 = vmatpush1.bf16.msra.mxu0 %v2339
    %3615 = vmatprep.mubr.bf16.mxu0 %v90
    %3616 = vmatmul.mubr.bf16.gmra.mrb[0].mxu0 %v89
    %v3617 = vpop.f32.mrb[0].mxu0
    %v3618 = vadd.f32 %v3577, %v3617
    %v3619 = vpop.f32.mrb[0].mxu0
    %v3620 = vadd.f32 %v3579, %v3619
    %v3621 = vpop.f32.mrb[0].mxu0
    %v3622 = vpop.f32.mrb[0].mxu0
    %3623 = vdwg.mxu0
    %3624 = vmatprep.subr.bf16.mxu0 %v2344
    %3625 = vmatpush1.bf16.msra.mxu0 %v2343
    %3626 = vmatprep.subr.bf16.mxu0 %v2348
    %3627 = vmatpush1.bf16.msra.mxu0 %v2347
    %3628 = vmatprep.subr.bf16.mxu0 %v2352
    %3629 = vmatpush1.bf16.msra.mxu0 %v2351
    %3630 = vmatprep.subr.bf16.mxu0 %v2356
    %3631 = vmatpush1.bf16.msra.mxu0 %v2355
    %3632 = vmatprep.subr.bf16.mxu0 %v2360
    %3633 = vmatpush1.bf16.msra.mxu0 %v2359
    %3634 = vmatprep.subr.bf16.mxu0 %v2364
    %3635 = vmatpush1.bf16.msra.mxu0 %v2363
    %3636 = vmatprep.subr.bf16.mxu0 %v2368
    %3637 = vmatpush1.bf16.msra.mxu0 %v2367
    %3638 = vmatprep.subr.bf16.mxu0 %v2372
    %3639 = vmatpush1.bf16.msra.mxu0 %v2371
    %3640 = vmatprep.subr.bf16.mxu0 %v2376
    %3641 = vmatpush1.bf16.msra.mxu0 %v2375
    %3642 = vmatprep.subr.bf16.mxu0 %v2380
    %3643 = vmatpush1.bf16.msra.mxu0 %v2379
    %3644 = vmatprep.subr.bf16.mxu0 %v2384
    %3645 = vmatpush1.bf16.msra.mxu0 %v2383
    %3646 = vmatprep.subr.bf16.mxu0 %v2388
    %3647 = vmatpush1.bf16.msra.mxu0 %v2387
    %3648 = vmatprep.subr.bf16.mxu0 %v2392
    %3649 = vmatpush1.bf16.msra.mxu0 %v2391
    %3650 = vmatprep.subr.bf16.mxu0 %v2396
    %3651 = vmatpush1.bf16.msra.mxu0 %v2395
    %3652 = vmatprep.subr.bf16.mxu0 %v2400
    %3653 = vmatpush1.bf16.msra.mxu0 %v2399
    %3654 = vmatprep.subr.bf16.mxu0 %v2404
    %3655 = vmatpush1.bf16.msra.mxu0 %v2403
    %3656 = vmatprep.mubr.bf16.mxu0 %v92
    %3657 = vmatmul.mubr.bf16.gmra.mrb[0].mxu0 %v91
    %v3658 = vpop.f32.mrb[0].mxu0
    %v3659 = vadd.f32 %v3618, %v3658
    %v3660 = vpop.f32.mrb[0].mxu0
    %v3661 = vadd.f32 %v3620, %v3660
    %v3662 = vpop.f32.mrb[0].mxu0
    %v3663 = vpop.f32.mrb[0].mxu0
    %3664 = vdwg.mxu0
    %3665 = vmatprep.subr.bf16.mxu0 %v2408
    %3666 = vmatpush1.bf16.msra.mxu0 %v2407
    %3667 = vmatprep.subr.bf16.mxu0 %v2412
    %3668 = vmatpush1.bf16.msra.mxu0 %v2411
    %3669 = vmatprep.subr.bf16.mxu0 %v2416
    %3670 = vmatpush1.bf16.msra.mxu0 %v2415
    %3671 = vmatprep.subr.bf16.mxu0 %v2420
    %3672 = vmatpush1.bf16.msra.mxu0 %v2419
    %3673 = vmatprep.subr.bf16.mxu0 %v2424
    %3674 = vmatpush1.bf16.msra.mxu0 %v2423
    %3675 = vmatprep.subr.bf16.mxu0 %v2428
    %3676 = vmatpush1.bf16.msra.mxu0 %v2427
    %3677 = vmatprep.subr.bf16.mxu0 %v2432
    %3678 = vmatpush1.bf16.msra.mxu0 %v2431
    %3679 = vmatprep.subr.bf16.mxu0 %v2436
    %3680 = vmatpush1.bf16.msra.mxu0 %v2435
    %3681 = vmatprep.subr.bf16.mxu0 %v2440
    %3682 = vmatpush1.bf16.msra.mxu0 %v2439
    %3683 = vmatprep.subr.bf16.mxu0 %v2444
    %3684 = vmatpush1.bf16.msra.mxu0 %v2443
    %3685 = vmatprep.subr.bf16.mxu0 %v2448
    %3686 = vmatpush1.bf16.msra.mxu0 %v2447
    %3687 = vmatprep.subr.bf16.mxu0 %v2452
    %3688 = vmatpush1.bf16.msra.mxu0 %v2451
    %3689 = vmatprep.subr.bf16.mxu0 %v2456
    %3690 = vmatpush1.bf16.msra.mxu0 %v2455
    %3691 = vmatprep.subr.bf16.mxu0 %v2460
    %3692 = vmatpush1.bf16.msra.mxu0 %v2459
    %3693 = vmatprep.subr.bf16.mxu0 %v2464
    %3694 = vmatpush1.bf16.msra.mxu0 %v2463
    %3695 = vmatprep.subr.bf16.mxu0 %v2468
    %3696 = vmatpush1.bf16.msra.mxu0 %v2467
    %3697 = vmatprep.mubr.bf16.mxu0 %v94
    %3698 = vmatmul.mubr.bf16.gmra.mrb[0].mxu0 %v93
    %v3699 = vpop.f32.mrb[0].mxu0
    %v3700 = vadd.f32 %v3659, %v3699
    %v3701 = vpop.f32.mrb[0].mxu0
    %v3702 = vadd.f32 %v3661, %v3701
    %v3703 = vpop.f32.mrb[0].mxu0
    %v3704 = vpop.f32.mrb[0].mxu0
    %3705 = vdwg.mxu0
    %3706 = vmatprep.subr.bf16.mxu0 %v2472
    %3707 = vmatpush1.bf16.msra.mxu0 %v2471
    %3708 = vmatprep.subr.bf16.mxu0 %v2476
    %3709 = vmatpush1.bf16.msra.mxu0 %v2475
    %3710 = vmatprep.subr.bf16.mxu0 %v2480
    %3711 = vmatpush1.bf16.msra.mxu0 %v2479
    %3712 = vmatprep.subr.bf16.mxu0 %v2484
    %3713 = vmatpush1.bf16.msra.mxu0 %v2483
    %3714 = vmatprep.subr.bf16.mxu0 %v2488
    %3715 = vmatpush1.bf16.msra.mxu0 %v2487
    %3716 = vmatprep.subr.bf16.mxu0 %v2492
    %3717 = vmatpush1.bf16.msra.mxu0 %v2491
    %3718 = vmatprep.subr.bf16.mxu0 %v2496
    %3719 = vmatpush1.bf16.msra.mxu0 %v2495
    %3720 = vmatprep.subr.bf16.mxu0 %v2500
    %3721 = vmatpush1.bf16.msra.mxu0 %v2499
    %3722 = vmatprep.subr.bf16.mxu0 %v2504
    %3723 = vmatpush1.bf16.msra.mxu0 %v2503
    %3724 = vmatprep.subr.bf16.mxu0 %v2508
    %3725 = vmatpush1.bf16.msra.mxu0 %v2507
    %3726 = vmatprep.subr.bf16.mxu0 %v2512
    %3727 = vmatpush1.bf16.msra.mxu0 %v2511
    %3728 = vmatprep.subr.bf16.mxu0 %v2516
    %3729 = vmatpush1.bf16.msra.mxu0 %v2515
    %3730 = vmatprep.subr.bf16.mxu0 %v2520
    %3731 = vmatpush1.bf16.msra.mxu0 %v2519
    %3732 = vmatprep.subr.bf16.mxu0 %v2524
    %3733 = vmatpush1.bf16.msra.mxu0 %v2523
    %3734 = vmatprep.subr.bf16.mxu0 %v2528
    %3735 = vmatpush1.bf16.msra.mxu0 %v2527
    %3736 = vmatprep.subr.bf16.mxu0 %v2532
    %3737 = vmatpush1.bf16.msra.mxu0 %v2531
    %3738 = vmatprep.mubr.bf16.mxu0 %v96
    %3739 = vmatmul.mubr.bf16.gmra.mrb[0].mxu0 %v95
    %v3740 = vpop.f32.mrb[0].mxu0
    %v3741 = vadd.f32 %v3700, %v3740
    %v3742 = vpop.f32.mrb[0].mxu0
    %v3743 = vadd.f32 %v3702, %v3742
    %v3744 = vpop.f32.mrb[0].mxu0
    %v3745 = vpop.f32.mrb[0].mxu0
    %3746 = vdwg.mxu0
    %3747 = vmatprep.subr.bf16.mxu0 %v2536
    %3748 = vmatpush1.bf16.msra.mxu0 %v2535
    %3749 = vmatprep.subr.bf16.mxu0 %v2540
    %3750 = vmatpush1.bf16.msra.mxu0 %v2539
    %3751 = vmatprep.subr.bf16.mxu0 %v2544
    %3752 = vmatpush1.bf16.msra.mxu0 %v2543
    %3753 = vmatprep.subr.bf16.mxu0 %v2548
    %3754 = vmatpush1.bf16.msra.mxu0 %v2547
    %3755 = vmatprep.subr.bf16.mxu0 %v2552
    %3756 = vmatpush1.bf16.msra.mxu0 %v2551
    %3757 = vmatprep.subr.bf16.mxu0 %v2556
    %3758 = vmatpush1.bf16.msra.mxu0 %v2555
    %3759 = vmatprep.subr.bf16.mxu0 %v2560
    %3760 = vmatpush1.bf16.msra.mxu0 %v2559
    %3761 = vmatprep.subr.bf16.mxu0 %v2564
    %3762 = vmatpush1.bf16.msra.mxu0 %v2563
    %3763 = vmatprep.subr.bf16.mxu0 %v2568
    %3764 = vmatpush1.bf16.msra.mxu0 %v2567
    %3765 = vmatprep.subr.bf16.mxu0 %v2572
    %3766 = vmatpush1.bf16.msra.mxu0 %v2571
    %3767 = vmatprep.subr.bf16.mxu0 %v2576
    %3768 = vmatpush1.bf16.msra.mxu0 %v2575
    %3769 = vmatprep.subr.bf16.mxu0 %v2580
    %3770 = vmatpush1.bf16.msra.mxu0 %v2579
    %3771 = vmatprep.subr.bf16.mxu0 %v2584
    %3772 = vmatpush1.bf16.msra.mxu0 %v2583
    %3773 = vmatprep.subr.bf16.mxu0 %v2588
    %3774 = vmatpush1.bf16.msra.mxu0 %v2587
    %3775 = vmatprep.subr.bf16.mxu0 %v2592
    %3776 = vmatpush1.bf16.msra.mxu0 %v2591
    %3777 = vmatprep.subr.bf16.mxu0 %v2596
    %3778 = vmatpush1.bf16.msra.mxu0 %v2595
    %3779 = vmatprep.mubr.bf16.mxu0 %v98
    %3780 = vmatmul.mubr.bf16.gmra.mrb[0].mxu0 %v97
    %v3781 = vpop.f32.mrb[0].mxu0
    %v3782 = vadd.f32 %v3741, %v3781
    %v3783 = vpop.f32.mrb[0].mxu0
    %v3784 = vadd.f32 %v3743, %v3783
    %v3785 = vpop.f32.mrb[0].mxu0
    %v3786 = vpop.f32.mrb[0].mxu0
    %3787 = vdwg.mxu0
    %3788 = vmatprep.subr.bf16.mxu0 %v2600
    %3789 = vmatpush1.bf16.msra.mxu0 %v2599
    %3790 = vmatprep.subr.bf16.mxu0 %v2604
    %3791 = vmatpush1.bf16.msra.mxu0 %v2603
    %3792 = vmatprep.subr.bf16.mxu0 %v2608
    %3793 = vmatpush1.bf16.msra.mxu0 %v2607
    %3794 = vmatprep.subr.bf16.mxu0 %v2612
    %3795 = vmatpush1.bf16.msra.mxu0 %v2611
    %3796 = vmatprep.subr.bf16.mxu0 %v2616
    %3797 = vmatpush1.bf16.msra.mxu0 %v2615
    %3798 = vmatprep.subr.bf16.mxu0 %v2620
    %3799 = vmatpush1.bf16.msra.mxu0 %v2619
    %3800 = vmatprep.subr.bf16.mxu0 %v2624
    %3801 = vmatpush1.bf16.msra.mxu0 %v2623
    %3802 = vmatprep.subr.bf16.mxu0 %v2628
    %3803 = vmatpush1.bf16.msra.mxu0 %v2627
    %3804 = vmatprep.subr.bf16.mxu0 %v2632
    %3805 = vmatpush1.bf16.msra.mxu0 %v2631
    %3806 = vmatprep.subr.bf16.mxu0 %v2636
    %3807 = vmatpush1.bf16.msra.mxu0 %v2635
    %3808 = vmatprep.subr.bf16.mxu0 %v2640
    %3809 = vmatpush1.bf16.msra.mxu0 %v2639
    %3810 = vmatprep.subr.bf16.mxu0 %v2644
    %3811 = vmatpush1.bf16.msra.mxu0 %v2643
    %3812 = vmatprep.subr.bf16.mxu0 %v2648
    %3813 = vmatpush1.bf16.msra.mxu0 %v2647
    %3814 = vmatprep.subr.bf16.mxu0 %v2652
    %3815 = vmatpush1.bf16.msra.mxu0 %v2651
    %3816 = vmatprep.subr.bf16.mxu0 %v2656
    %3817 = vmatpush1.bf16.msra.mxu0 %v2655
    %3818 = vmatprep.subr.bf16.mxu0 %v2660
    %3819 = vmatpush1.bf16.msra.mxu0 %v2659
    %3820 = vmatprep.mubr.bf16.mxu0 %v100
    %3821 = vmatmul.mubr.bf16.gmra.mrb[0].mxu0 %v99
    %v3822 = vpop.f32.mrb[0].mxu0
    %v3823 = vadd.f32 %v3782, %v3822
    %v3824 = vpop.f32.mrb[0].mxu0
    %v3825 = vadd.f32 %v3784, %v3824
    %v3826 = vpop.f32.mrb[0].mxu0
    %v3827 = vpop.f32.mrb[0].mxu0
    %3828 = vdwg.mxu0
    %v3829 = vadd.f32 %v65, %v3495
    %v3830 = vadd.f32 %v66, %v3497
    %v3831 = vadd.f32 %v67, %v3823
    %v3832 = vadd.f32 %v68, %v3825
    %3833 = vst [vmem:[#allocation2] sm:$0xff] %v3829
    %3834 = vst [vmem:[#allocation2 + $0x8] sm:$0xff] %v3830
    %3835 = vst [vmem:[#allocation2 + $0x10] sm:$0xff] %v3831
    %3836 = vst [vmem:[#allocation2 + $0x18] sm:$0xff] %v3832
    // Predicated region
    $region34: #{classifier_forward.1} parent=1 // pred_check
      %p3837 = pneg %p57
    $region35: #{classifier_forward.1} parent=1 // pred_check_branch
      %3839 = sbr.rel (%p3837) target = $region37
    $region36: #{classifier_forward.1} parent=1 // pred_region
      %v3840 = vld [vmem:[#allocation2] sm:$0xff]
      %v3841 = vld [vmem:[#allocation2 + $0x8] sm:$0xff]
      %v3842 = vld [vmem:[#allocation2 + $0x10] sm:$0xff]
      %v3843 = vld [vmem:[#allocation2 + $0x18] sm:$0xff]
      %v3844 = vmax.f32 %v3840, %v3841
      %v3845 = vmax.f32 %v3842, %v3843
      %v3846 = vmax.f32 %v3844, %v3845
      %v3847 = vpack.c.bf16 %v3846, %v3846
      %v3848 = vld [vmem:[#allocation5] sm:$0xf]
      %v3849 = vld [vmem:[#allocation5 + $0x4] sm:$0xf]
      %v3850 = vld [vmem:[#allocation5 + $0x8] sm:$0xf]
      %v3851 = vld [vmem:[#allocation5 + $0xc] sm:$0xf]
      %v3852 = vld [vmem:[#allocation5 + $0x10] sm:$0xf]
      %v3853 = vld [vmem:[#allocation5 + $0x14] sm:$0xf]
      %v3854 = vld [vmem:[#allocation5 + $0x18] sm:$0xf]
      %v3855 = vld [vmem:[#allocation5 + $0x1c] sm:$0xf]
      %v3856 = vld [vmem:[#allocation5 + $0x20] sm:$0xf]
      %v3857 = vld [vmem:[#allocation5 + $0x24] sm:$0xf]
      %v3858 = vld [vmem:[#allocation5 + $0x28] sm:$0xf]
      %v3859 = vld [vmem:[#allocation5 + $0x2c] sm:$0xf]
      %v3860 = vld [vmem:[#allocation5 + $0x30] sm:$0xf]
      %v3861 = vld [vmem:[#allocation5 + $0x34] sm:$0xf]
      %v3862 = vld [vmem:[#allocation5 + $0x38] sm:$0xf]
      %v3863 = vld [vmem:[#allocation5 + $0x3c] sm:$0xf]
      %v3864 = vld [vmem:[#allocation7] sm:$0x1]
      %v3866 = vlaneseq
      %v3867 = vshrl.u32 %v3866, 7
      %v3868 = vsub.s32 0, %v3867
      %v3869 = vrot.slane %v3864, %v3868
      %v3887 = vunpack.c.l.b16 %v3848
      %v3888 = vunpack.c.l.b16 %v3849
      %v3889 = vunpack.c.l.b16 %v3850
      %v3890 = vunpack.c.l.b16 %v3851
      %v3891 = vunpack.c.l.b16 %v3852
      %v3892 = vunpack.c.l.b16 %v3853
      %v3893 = vunpack.c.l.b16 %v3854
      %v3894 = vunpack.c.l.b16 %v3855
      %v3895 = vunpack.c.l.b16 %v3856
      %v3896 = vunpack.c.l.b16 %v3857
      %v3897 = vunpack.c.l.b16 %v3858
      %v3898 = vunpack.c.l.b16 %v3859
      %v3899 = vunpack.c.l.b16 %v3860
      %v3900 = vunpack.c.l.b16 %v3861
      %v3901 = vunpack.c.l.b16 %v3862
      %v3902 = vunpack.c.l.b16 %v3863
      %v3903 = vpack.c.b16 %v3888, %v3887
      %v3904 = vpack.c.b16 %v3890, %v3889
      %v3905 = vpack.c.b16 %v3892, %v3891
      %v3906 = vpack.c.b16 %v3894, %v3893
      %v3907 = vpack.c.b16 %v3896, %v3895
      %v3908 = vpack.c.b16 %v3898, %v3897
      %v3909 = vpack.c.b16 %v3900, %v3899
      %v3910 = vpack.c.b16 %v3902, %v3901
      %3919 = vmatprep.subr.bf16.mxu0 0
      %3920 = vmatpush1.bf16.msra.mxu0 %v3903
      %3921 = vmatprep.subr.bf16.mxu0 0
      %3922 = vmatpush1.bf16.msra.mxu0 %v3904
      %3923 = vmatprep.subr.bf16.mxu0 0
      %3924 = vmatpush1.bf16.msra.mxu0 %v3905
      %3925 = vmatprep.subr.bf16.mxu0 0
      %3926 = vmatpush1.bf16.msra.mxu0 %v3906
      %3927 = vmatprep.subr.bf16.mxu0 0
      %3928 = vmatpush1.bf16.msra.mxu0 %v3907
      %3929 = vmatprep.subr.bf16.mxu0 0
      %3930 = vmatpush1.bf16.msra.mxu0 %v3908
      %3931 = vmatprep.subr.bf16.mxu0 0
      %3932 = vmatpush1.bf16.msra.mxu0 %v3909
      %3933 = vmatprep.subr.bf16.mxu0 0
      %3934 = vmatpush1.bf16.msra.mxu0 %v3910
      %3935 = vmatprep.subr.bf16.mxu0 0
      %3936 = vmatpush1.bf16.msra.mxu0 0
      %3937 = vmatprep.subr.bf16.mxu0 0
      %3938 = vmatpush1.bf16.msra.mxu0 0
      %3939 = vmatprep.subr.bf16.mxu0 0
      %3940 = vmatpush1.bf16.msra.mxu0 0
      %3941 = vmatprep.subr.bf16.mxu0 0
      %3942 = vmatpush1.bf16.msra.mxu0 0
      %3943 = vmatprep.subr.bf16.mxu0 0
      %3944 = vmatpush1.bf16.msra.mxu0 0
      %3945 = vmatprep.subr.bf16.mxu0 0
      %3946 = vmatpush1.bf16.msra.mxu0 0
      %3947 = vmatprep.subr.bf16.mxu0 0
      %3948 = vmatpush1.bf16.msra.mxu0 0
      %3949 = vmatprep.subr.bf16.mxu0 0
      %3950 = vmatpush1.bf16.msra.mxu0 0
      %3951 = vmatprep.mubr.bf16.mxu0 0
      %3952 = vmatmul.mubr.bf16.gmra.mrb[0].mxu0 %v3847
      %v3953 = vpop.f32.mrb[0].mxu0
      %v3954 = vadd.f32 %v3869, %v3953
      %v3955 = vpop.f32.mrb[0].mxu0
      %v3956 = vpop.f32.mrb[0].mxu0
      %v3957 = vpop.f32.mrb[0].mxu0
      %3958 = vdwg.mxu0
      %3959 = vst [vmem:[%s4] sm:$0xff] %v3954
    $region37: #{classifier_forward.1} parent=1 // pred_fallthru
      _
    // Predicated region
    $region38: #{classifier_forward.1} parent=1 // pred_check
      _
    $region39: #{classifier_forward.1} parent=1 // pred_check_branch
      %3961 = sbr.rel (0) target = $region41
    $region40: #{classifier_forward.1} parent=1 // pred_region
      _
    $region41: #{classifier_forward.1} parent=1 // pred_fallthru
      _
    // Predicated region
    $region42: #{classifier_forward.1} parent=1 // pred_check
      _
    $region43: #{classifier_forward.1} parent=1 // pred_check_branch
      %3963 = sbr.rel (0) target = $region45
    $region44: #{classifier_forward.1} parent=1 // pred_region
      _
    $region45: #{classifier_forward.1} parent=1 // pred_fallthru
      _
    %3964 = vsyncpa [#allocation4], 1
    %3965 = vsyncpa [#allocation6], 1

</llo_original>
